<compile_context>
chip_gen: v7x
topology: tpu7x:2x2x1
jax: 0.10.0
libtpu: 0.0.40
codegen_flags: <defaults>
</compile_context>

<pallas_src>
import functools

import jax
import jax.numpy as jnp
from jax import lax
from jax.experimental import pallas as pl
from jax.experimental.pallas import tpu as pltpu


_VMEM_LIMIT = 32 * 1024 * 1024   # explicit scoped-VMEM budget (fits all gens)


# ---------------------------------------------------------------------------
# Kernel 1: ConvTranspose2d(Cin, Cout, 2, stride=2) as one lane-dense matmul.
# Layout: channels on sublanes (contraction), flattened pixels on lanes:
#   out[(kh,kw,co), p] = sum_ci Wu[ci, co, kh, kw] * x1[ci, p]  + bias[co]
# ---------------------------------------------------------------------------
def _upconv_kernel(x_ref, w_ref, b_ref, o_ref):
    acc = jnp.dot(w_ref[...], x_ref[...], preferred_element_type=jnp.float32)
    o_ref[...] = (acc + b_ref[...]).astype(o_ref.dtype)


def conv_transpose_2x2_s2(x1_nchw, w, b):
    """x1: (N,Cin,H,W), w: (Cin,Cout,2,2), b: (Cout,) -> (N,Cout,2H,2W) bf16."""
    n, cin, h, wd = x1_nchw.shape
    cout = w.shape[1]
    hw = h * wd
    x_flat = x1_nchw.astype(jnp.bfloat16).reshape(n, cin, hw)
    # rows ordered (kh, kw, co), co fastest
    wmat = jnp.transpose(w, (2, 3, 1, 0)).reshape(4 * cout, cin)
    wmat = wmat.astype(jnp.bfloat16)
    bvec = jnp.tile(b, 4).reshape(4 * cout, 1).astype(jnp.float32)

    y = pl.pallas_call(
        _upconv_kernel,
        out_shape=jax.ShapeDtypeStruct((n, 4 * cout, hw), jnp.bfloat16),
        grid_spec=pltpu.PrefetchScalarGridSpec(
            num_scalar_prefetch=0,
            grid=(n,),
            in_specs=[
                pl.BlockSpec((None, cin, hw), lambda i: (i, 0, 0)),
                pl.BlockSpec((4 * cout, cin), lambda i: (0, 0)),
                pl.BlockSpec((4 * cout, 1), lambda i: (0, 0)),
            ],
            out_specs=pl.BlockSpec((None, 4 * cout, hw), lambda i: (i, 0, 0)),
        ),
        compiler_params=pltpu.CompilerParams(
            dimension_semantics=("parallel",),
            vmem_limit_bytes=_VMEM_LIMIT),
    )(x_flat, wmat, bvec)

    # (n, kh, kw, co, h, w) -> (n, co, h, kh, w, kw) -> (n, co, 2h, 2w)
    y = y.reshape(n, 2, 2, cout, h, wd)
    y = jnp.transpose(y, (0, 3, 4, 1, 5, 2)).reshape(n, cout, 2 * h, 2 * wd)
    return y


# ---------------------------------------------------------------------------
# Kernel 2: fused [concat -> conv3x3+BN+ReLU -> conv3x3+BN -> ReLU], per image.
#
# Inputs are stored per image as (C, Lb) where Lb = Hp*Wp + 2*(Wp+1): the
# zero-padded spatial plane (Hp=Hout+2, Wp=Wout+2) flattened onto the lane
# axis, plus a (Wp+1) zero margin on each side so every 3x3 tap (kh, kw) is a
# contiguous static lane-slice starting at kh*Wp + kw.  Interior positions of
# the flat accumulator hold the exact conv result; the border ring is masked
# to zero so the h1 scratch buffer doubles as conv2's zero padding.
# ---------------------------------------------------------------------------
def _double_conv_kernel(x1u_ref, x2_ref, w1a_ref, w1b_ref, sh1_ref,
                        w2_ref, sh2_ref, mask_ref, out_ref, h1_ref,
                        *, wp, lsz):
    cout = out_ref.shape[0]
    margin = wp + 1

    # conv1 over the (virtually) concatenated input: 9 shifted-window taps per
    # channel block, accumulated in f32 (concat fused as split-K).
    acc = jnp.zeros((cout, lsz), jnp.float32)
    for kh in range(3):
        for kw in range(3):
            t = kh * 3 + kw
            s = kh * wp + kw
            acc += jnp.dot(w1a_ref[t], x1u_ref[:, s:s + lsz],
                           preferred_element_type=jnp.float32)
            acc += jnp.dot(w1b_ref[t], x2_ref[:, s:s + lsz],
                           preferred_element_type=jnp.float32)

    # BN1 (scale pre-folded into weights) + ReLU; zero the border ring.
    h1 = jnp.maximum(acc + sh1_ref[...], 0.0) * mask_ref[...]
    h1_ref[...] = jnp.zeros_like(h1_ref)
    h1_ref[:, margin:margin + lsz] = h1.astype(h1_ref.dtype)

    # conv2 + BN2 + final ReLU, reading the bf16 VMEM-resident h1 plane.
    acc2 = jnp.zeros((cout, lsz), jnp.float32)
    for kh in range(3):
        for kw in range(3):
            t = kh * 3 + kw
            s = kh * wp + kw
            acc2 += jnp.dot(w2_ref[t], h1_ref[:, s:s + lsz],
                            preferred_element_type=jnp.float32)
    out_ref[...] = jnp.maximum(acc2 + sh2_ref[...], 0.0).astype(out_ref.dtype)


def _fold_bn(w, b, gamma, beta, mean, var, eps=1e-5):
    s = gamma / jnp.sqrt(var + eps)
    return w * s[:, None, None, None], (b - mean) * s + beta


def _taps(w):
    """(Cout, Cin, 3, 3) -> (9, Cout, Cin) bf16, tap index t = kh*3 + kw."""
    co, ci = w.shape[0], w.shape[1]
    return jnp.transpose(w, (2, 3, 0, 1)).reshape(9, co, ci).astype(jnp.bfloat16)


def _margined_flat(x_nchw, wp):
    """Zero-pad spatially by 1, flatten the plane, add a (wp+1) lane margin."""
    n, c = x_nchw.shape[:2]
    xp = jnp.pad(x_nchw, ((0, 0), (0, 0), (1, 1), (1, 1)))
    flat = xp.reshape(n, c, -1)
    return jnp.pad(flat, ((0, 0), (0, 0), (wp + 1, wp + 1)))


def double_conv(x1u, x2p, params):
    """Fused concat + DoubleConv(use_resnet=False) + final ReLU (NCHW f32 out)."""
    n, cup, ho, wo = x1u.shape
    c2 = x2p.shape[1]
    cout = params["c1_w"].shape[0]
    hp, wp = ho + 2, wo + 2
    lsz = hp * wp
    lbuf = lsz + 2 * (wp + 1)

    x1u_flat = _margined_flat(x1u.astype(jnp.bfloat16), wp)
    x2_flat = _margined_flat(x2p.astype(jnp.bfloat16), wp)

    w1f, sh1 = _fold_bn(params["c1_w"], params["c1_b"], params["bn1_g"],
                        params["bn1_b"], params["bn1_m"], params["bn1_v"])
    w2f, sh2 = _fold_bn(params["c2_w"], params["c2_b"], params["bn2_g"],
                        params["bn2_b"], params["bn2_m"], params["bn2_v"])
    w1a = _taps(w1f[:, :cup])     # acts on the upsampled x1 channel block
    w1b = _taps(w1f[:, cup:])     # acts on the skip x2 channel block
    w2t = _taps(w2f)
    sh1 = sh1.reshape(cout, 1).astype(jnp.float32)
    sh2 = sh2.reshape(cout, 1).astype(jnp.float32)

    mask = jnp.zeros((hp, wp), jnp.float32).at[1:-1, 1:-1].set(1.0)
    mask = mask.reshape(1, lsz)

    out_flat = pl.pallas_call(
        functools.partial(_double_conv_kernel, wp=wp, lsz=lsz),
        out_shape=jax.ShapeDtypeStruct((n, cout, lsz), jnp.float32),
        grid_spec=pltpu.PrefetchScalarGridSpec(
            num_scalar_prefetch=0,
            grid=(n,),
            in_specs=[
                pl.BlockSpec((None, cup, lbuf), lambda i: (i, 0, 0)),
                pl.BlockSpec((None, c2, lbuf), lambda i: (i, 0, 0)),
                pl.BlockSpec((9, cout, cup), lambda i: (0, 0, 0)),
                pl.BlockSpec((9, cout, c2), lambda i: (0, 0, 0)),
                pl.BlockSpec((cout, 1), lambda i: (0, 0)),
                pl.BlockSpec((9, cout, cout), lambda i: (0, 0, 0)),
                pl.BlockSpec((cout, 1), lambda i: (0, 0)),
                pl.BlockSpec((1, lsz), lambda i: (0, 0)),
            ],
            out_specs=pl.BlockSpec((None, cout, lsz), lambda i: (i, 0, 0)),
            scratch_shapes=[pltpu.VMEM((cout, lbuf), jnp.bfloat16)],
        ),
        compiler_params=pltpu.CompilerParams(
            dimension_semantics=("parallel",),
            vmem_limit_bytes=_VMEM_LIMIT),
    )(x1u_flat, x2_flat, w1a, w1b, sh1, w2t, sh2, mask)

    return out_flat.reshape(n, cout, hp, wp)[:, :, 1:-1, 1:-1]


# ---------------------------------------------------------------------------
# Up.forward  (use_resnet=False path of DoubleConv), NCHW in / NCHW out.
# ---------------------------------------------------------------------------
def up_forward(params, x1_nchw, x2_nchw):
    x1u = conv_transpose_2x2_s2(x1_nchw, params["up_w"], params["up_b"])

    # PyTorch: diffX = x1.size(2)-x2.size(2), diffY = x1.size(3)-x2.size(3);
    # F.pad(x2, (diffX//2, diffX//2, diffY//2, diffY//2)) pads W by diffX//2
    # per side and H by diffY//2 per side.
    diffX = x1u.shape[2] - x2_nchw.shape[2]
    diffY = x1u.shape[3] - x2_nchw.shape[3]
    x2p = jnp.pad(x2_nchw.astype(jnp.bfloat16),
                  ((0, 0), (0, 0),
                   (diffY // 2, diffY // 2),
                   (diffX // 2, diffX // 2)))

    return double_conv(x1u, x2p, params)


# ---------------------------------------------------------------------------
# Pure-JAX reference (XLA convs, f32) for correctness check
# ---------------------------------------------------------------------------
def ref_forward(params, x1_nchw, x2_nchw):
    x1 = jnp.transpose(x1_nchw, (0, 2, 3, 1)).astype(jnp.float32)
    x2 = jnp.transpose(x2_nchw, (0, 2, 3, 1)).astype(jnp.float32)
    n, h, w, _ = x1.shape
    co = params["up_w"].shape[1]
    t = jnp.einsum("nhwi,iojk->nhjwko", x1, params["up_w"])
    x1u = t.reshape(n, 2 * h, 2 * w, co) + params["up_b"]

    diffX = x1u.shape[1] - x2.shape[1]
    diffY = x1u.shape[2] - x2.shape[2]
    x2 = jnp.pad(x2, ((0, 0), (diffY // 2, diffY // 2),
                      (diffX // 2, diffX // 2), (0, 0)))
    x = jnp.concatenate([x1u, x2], axis=-1)

    def cbr(x, wt, b, g, bt, m, v, eps=1e-5):
        y = lax.conv_general_dilated(
            x, jnp.transpose(wt, (2, 3, 1, 0)), (1, 1), "SAME",
            dimension_numbers=("NHWC", "HWIO", "NHWC")) + b
        y = (y - m) / jnp.sqrt(v + eps) * g + bt
        return jnp.maximum(y, 0.0)

    h1 = cbr(x, params["c1_w"], params["c1_b"], params["bn1_g"],
             params["bn1_b"], params["bn1_m"], params["bn1_v"])
    out = cbr(h1, params["c2_w"], params["c2_b"], params["bn2_g"],
              params["bn2_b"], params["bn2_m"], params["bn2_v"])
    return jnp.transpose(out, (0, 3, 1, 2))


# ---------------------------------------------------------------------------
def make_params(key, in_ch, out_ch):
    ks = jax.random.split(key, 14)
    f32 = jnp.float32
    return {
        # nn.ConvTranspose2d(in_ch, out_ch, 2, stride=2): weight (in_ch,out_ch,2,2)
        "up_w": 0.1 * jax.random.normal(ks[0], (in_ch, out_ch, 2, 2), f32),
        "up_b": 0.1 * jax.random.normal(ks[1], (out_ch,), f32),
        # DoubleConv conv1: Conv2d(in_ch, out_ch, 3, padding=1)
        "c1_w": 0.1 * jax.random.normal(ks[2], (out_ch, in_ch, 3, 3), f32),
        "c1_b": 0.1 * jax.random.normal(ks[3], (out_ch,), f32),
        "bn1_g": 1.0 + 0.1 * jax.random.normal(ks[4], (out_ch,), f32),
        "bn1_b": 0.1 * jax.random.normal(ks[5], (out_ch,), f32),
        "bn1_m": 0.1 * jax.random.normal(ks[6], (out_ch,), f32),
        "bn1_v": jax.random.uniform(ks[7], (out_ch,), f32, 0.5, 1.5),
        # DoubleConv conv2: Conv2d(out_ch, out_ch, 3, padding=1)
        "c2_w": 0.1 * jax.random.normal(ks[8], (out_ch, out_ch, 3, 3), f32),
        "c2_b": 0.1 * jax.random.normal(ks[9], (out_ch,), f32),
        "bn2_g": 1.0 + 0.1 * jax.random.normal(ks[10], (out_ch,), f32),
        "bn2_b": 0.1 * jax.random.normal(ks[11], (out_ch,), f32),
        "bn2_m": 0.1 * jax.random.normal(ks[12], (out_ch,), f32),
        "bn2_v": jax.random.uniform(ks[13], (out_ch,), f32, 0.5, 1.5),
    }


if __name__ == "__main__":
    key = jax.random.PRNGKey(0)
    kp, kx1, kx2 = jax.random.split(key, 3)

    in_ch, out_ch = 8, 4          # Up(in_ch=8, out_ch=4, use_resnet=False)
    N, H, W = 2, 8, 8             # x1 spatial; skip x2 is 2H x 2W

    params = make_params(kp, in_ch, out_ch)
    x1 = jax.random.normal(kx1, (N, in_ch, H, W), jnp.float32)
    x2 = jax.random.normal(kx2, (N, in_ch - out_ch, 2 * H, 2 * W), jnp.float32)

    up_jit = jax.jit(up_forward)
    out = up_jit(params, x1, x2)
    jax.block_until_ready(out)

    assert out.shape == (N, out_ch, 2 * H, 2 * W), out.shape

    ref = ref_forward(params, x1, x2)
    err = float(jnp.max(jnp.abs(out - ref)))
    scale = float(jnp.max(jnp.abs(ref))) + 1e-6
    assert err / scale < 5e-2, f"mismatch vs reference: abs={err} rel={err/scale}"

    print("KERNEL_OK")
</pallas_src>

<mosaic_0001>
module attributes {stable_mosaic.version = 11 : i64} {
  func.func @_upconv_kernel(%arg0: i32, %arg1: memref<1x8x64xbf16, #tpu.memory_space<vmem>>, %arg2: memref<16x8xbf16, #tpu.memory_space<vmem>>, %arg3: memref<16x1xf32, #tpu.memory_space<vmem>>, %arg4: memref<1x16x64xbf16, #tpu.memory_space<vmem>>) attributes {dimension_semantics = [#tpu.dimension_semantics<parallel>], iteration_bounds = array<i64: 2>, scalar_prefetch = 0 : i64, scratch_operands = 0 : i64, tpu.core_type = #tpu.core_type<tc>, window_params = [{transform_indices = @transform_0, window_bounds = array<i64: 1, 8, 64>}, {pipeline_mode = #tpu.pipeline_mode<synchronous>, transform_indices = @transform_1, window_bounds = array<i64: 16, 8>}, {pipeline_mode = #tpu.pipeline_mode<synchronous>, transform_indices = @transform_2, window_bounds = array<i64: 16, 1>}, {transform_indices = @transform_3, window_bounds = array<i64: 1, 16, 64>}]} {
    %c0 = arith.constant 0 : index
    %c0_0 = arith.constant 0 : index
    %0 = vector.load %arg2[%c0, %c0_0] : memref<16x8xbf16, #tpu.memory_space<vmem>>, vector<16x8xbf16>
    %c0_1 = arith.constant 0 : index
    %c0_2 = arith.constant 0 : index
    %c0_3 = arith.constant 0 : index
    %1 = vector.load %arg1[%c0_1, %c0_2, %c0_3] : memref<1x8x64xbf16, #tpu.memory_space<vmem>>, vector<1x8x64xbf16>
    %2 = vector.shape_cast %1 : vector<1x8x64xbf16> to vector<8x64xbf16>
    %cst = arith.constant dense<0.000000e+00> : vector<16x64xf32>
    %3 = tpu.matmul %0, %2, %cst {dimension_numbers = #tpu.dot_dimension_numbers<[1], [0], [0], [1], [0, 0, 1, 1], [], []>} : vector<16x8xbf16>, vector<8x64xbf16>, vector<16x64xf32> -> vector<16x64xf32>
    %c0_4 = arith.constant 0 : index
    %c0_5 = arith.constant 0 : index
    %4 = vector.load %arg3[%c0_4, %c0_5] : memref<16x1xf32, #tpu.memory_space<vmem>>, vector<16x1xf32>
    %5 = vector.broadcast %4 : vector<16x1xf32> to vector<16x64xf32>
    %6 = arith.addf %3, %5 : vector<16x64xf32>
    %7 = arith.truncf %6 : vector<16x64xf32> to vector<16x64xbf16>
    %c0_6 = arith.constant 0 : index
    %c0_7 = arith.constant 0 : index
    %c0_8 = arith.constant 0 : index
    %8 = vector.load %arg4[%c0_6, %c0_7, %c0_8] : memref<1x16x64xbf16, #tpu.memory_space<vmem>>, vector<1x16x64xbf16>
    %9 = vector.shape_cast %8 : vector<1x16x64xbf16> to vector<16x64xbf16>
    %10 = vector.shape_cast %7 : vector<16x64xbf16> to vector<1x16x64xbf16>
    tpu.vector_store %arg4[%c0_6, %c0_7, %c0_8], %10 {strides = array<i32>} : memref<1x16x64xbf16, #tpu.memory_space<vmem>>, vector<1x16x64xbf16>,
    return
  }
  func.func @transform_0(%arg0: i32) -> (i32, i32, i32) {
    %c0_i32 = arith.constant 0 : i32
    %c0_i32_0 = arith.constant 0 : i32
    %c0_i32_1 = arith.constant 0 : i32
    return %arg0, %c0_i32, %c0_i32_0 : i32, i32, i32
  }
  func.func @transform_1(%arg0: i32) -> (i32, i32) {
    %c0_i32 = arith.constant 0 : i32
    %c0_i32_0 = arith.constant 0 : i32
    %c0_i32_1 = arith.constant 0 : i32
    return %c0_i32, %c0_i32_0 : i32, i32
  }
  func.func @transform_2(%arg0: i32) -> (i32, i32) {
    %c0_i32 = arith.constant 0 : i32
    %c0_i32_0 = arith.constant 0 : i32
    %c0_i32_1 = arith.constant 0 : i32
    return %c0_i32, %c0_i32_0 : i32, i32
  }
  func.func @transform_3(%arg0: i32) -> (i32, i32, i32) {
    %c0_i32 = arith.constant 0 : i32
    %c0_i32_0 = arith.constant 0 : i32
    %c0_i32_1 = arith.constant 0 : i32
    return %arg0, %c0_i32, %c0_i32_0 : i32, i32, i32
  }
}

module attributes {stable_mosaic.version = 11 : i64} {
  func.func @_double_conv_kernel(%arg0: i32, %arg1: memref<1x4x362xbf16, #tpu.memory_space<vmem>>, %arg2: memref<1x4x362xbf16, #tpu.memory_space<vmem>>, %arg3: memref<9x4x4xbf16, #tpu.memory_space<vmem>>, %arg4: memref<9x4x4xbf16, #tpu.memory_space<vmem>>, %arg5: memref<4x1xf32, #tpu.memory_space<vmem>>, %arg6: memref<9x4x4xbf16, #tpu.memory_space<vmem>>, %arg7: memref<4x1xf32, #tpu.memory_space<vmem>>, %arg8: memref<1x324xf32, #tpu.memory_space<vmem>>, %arg9: memref<1x4x324xf32, #tpu.memory_space<vmem>>, %arg10: memref<4x362xbf16, #tpu.memory_space<vmem>>) attributes {dimension_semantics = [#tpu.dimension_semantics<parallel>], iteration_bounds = array<i64: 2>, scalar_prefetch = 0 : i64, scratch_operands = 1 : i64, tpu.core_type = #tpu.core_type<tc>, window_params = [{transform_indices = @transform_0, window_bounds = array<i64: 1, 4, 362>}, {transform_indices = @transform_1, window_bounds = array<i64: 1, 4, 362>}, {pipeline_mode = #tpu.pipeline_mode<synchronous>, transform_indices = @transform_2, window_bounds = array<i64: 9, 4, 4>}, {pipeline_mode = #tpu.pipeline_mode<synchronous>, transform_indices = @transform_3, window_bounds = array<i64: 9, 4, 4>}, {pipeline_mode = #tpu.pipeline_mode<synchronous>, transform_indices = @transform_4, window_bounds = array<i64: 4, 1>}, {pipeline_mode = #tpu.pipeline_mode<synchronous>, transform_indices = @transform_5, window_bounds = array<i64: 9, 4, 4>}, {pipeline_mode = #tpu.pipeline_mode<synchronous>, transform_indices = @transform_6, window_bounds = array<i64: 4, 1>}, {pipeline_mode = #tpu.pipeline_mode<synchronous>, transform_indices = @transform_7, window_bounds = array<i64: 1, 324>}, {transform_indices = @transform_8, window_bounds = array<i64: 1, 4, 324>}]} {
    %cst = arith.constant 0.000000e+00 : f32
    %0 = vector.broadcast %cst : f32 to vector<4x324xf32>
    %c0 = arith.constant 0 : index
    %c0_0 = arith.constant 0 : index
    %c0_1 = arith.constant 0 : index
    %1 = vector.load %arg3[%c0, %c0_0, %c0_1] : memref<9x4x4xbf16, #tpu.memory_space<vmem>>, vector<1x4x4xbf16>
    %2 = vector.shape_cast %1 : vector<1x4x4xbf16> to vector<4x4xbf16>
    %c0_2 = arith.constant 0 : index
    %c0_3 = arith.constant 0 : index
    %c0_4 = arith.constant 0 : index
    %3 = vector.load %arg1[%c0_2, %c0_3, %c0_4] : memref<1x4x362xbf16, #tpu.memory_space<vmem>>, vector<1x4x324xbf16>
    %4 = vector.shape_cast %3 : vector<1x4x324xbf16> to vector<4x324xbf16>
    %cst_5 = arith.constant dense<0.000000e+00> : vector<4x324xf32>
    %5 = tpu.matmul %2, %4, %cst_5 {dimension_numbers = #tpu.dot_dimension_numbers<[1], [0], [0], [1], [0, 0, 1, 1], [], []>} : vector<4x4xbf16>, vector<4x324xbf16>, vector<4x324xf32> -> vector<4x324xf32>
    %6 = arith.addf %0, %5 : vector<4x324xf32>
    %c0_6 = arith.constant 0 : index
    %c0_7 = arith.constant 0 : index
    %c0_8 = arith.constant 0 : index
    %7 = vector.load %arg4[%c0_6, %c0_7, %c0_8] : memref<9x4x4xbf16, #tpu.memory_space<vmem>>, vector<1x4x4xbf16>
    %8 = vector.shape_cast %7 : vector<1x4x4xbf16> to vector<4x4xbf16>
    %c0_9 = arith.constant 0 : index
    %c0_10 = arith.constant 0 : index
    %c0_11 = arith.constant 0 : index
    %9 = vector.load %arg2[%c0_9, %c0_10, %c0_11] : memref<1x4x362xbf16, #tpu.memory_space<vmem>>, vector<1x4x324xbf16>
    %10 = vector.shape_cast %9 : vector<1x4x324xbf16> to vector<4x324xbf16>
    %cst_12 = arith.constant dense<0.000000e+00> : vector<4x324xf32>
    %11 = tpu.matmul %8, %10, %cst_12 {dimension_numbers = #tpu.dot_dimension_numbers<[1], [0], [0], [1], [0, 0, 1, 1], [], []>} : vector<4x4xbf16>, vector<4x324xbf16>, vector<4x324xf32> -> vector<4x324xf32>
    %12 = arith.addf %6, %11 : vector<4x324xf32>
    %c1 = arith.constant 1 : index
    %c0_13 = arith.constant 0 : index
    %c0_14 = arith.constant 0 : index
    %13 = vector.load %arg3[%c1, %c0_13, %c0_14] : memref<9x4x4xbf16, #tpu.memory_space<vmem>>, vector<1x4x4xbf16>
    %14 = vector.shape_cast %13 : vector<1x4x4xbf16> to vector<4x4xbf16>
    %c0_15 = arith.constant 0 : index
    %c0_16 = arith.constant 0 : index
    %c1_17 = arith.constant 1 : index
    %15 = vector.load %arg1[%c0_15, %c0_16, %c1_17] : memref<1x4x362xbf16, #tpu.memory_space<vmem>>, vector<1x4x324xbf16>
    %16 = vector.shape_cast %15 : vector<1x4x324xbf16> to vector<4x324xbf16>
    %cst_18 = arith.constant dense<0.000000e+00> : vector<4x324xf32>
    %17 = tpu.matmul %14, %16, %cst_18 {dimension_numbers = #tpu.dot_dimension_numbers<[1], [0], [0], [1], [0, 0, 1, 1], [], []>} : vector<4x4xbf16>, vector<4x324xbf16>, vector<4x324xf32> -> vector<4x324xf32>
    %18 = arith.addf %12, %17 : vector<4x324xf32>
    %c1_19 = arith.constant 1 : index
    %c0_20 = arith.constant 0 : index
    %c0_21 = arith.constant 0 : index
    %19 = vector.load %arg4[%c1_19, %c0_20, %c0_21] : memref<9x4x4xbf16, #tpu.memory_space<vmem>>, vector<1x4x4xbf16>
    %20 = vector.shape_cast %19 : vector<1x4x4xbf16> to vector<4x4xbf16>
    %c0_22 = arith.constant 0 : index
    %c0_23 = arith.constant 0 : index
    %c1_24 = arith.constant 1 : index
    %21 = vector.load %arg2[%c0_22, %c0_23, %c1_24] : memref<1x4x362xbf16, #tpu.memory_space<vmem>>, vector<1x4x324xbf16>
    %22 = vector.shape_cast %21 : vector<1x4x324xbf16> to vector<4x324xbf16>
    %cst_25 = arith.constant dense<0.000000e+00> : vector<4x324xf32>
    %23 = tpu.matmul %20, %22, %cst_25 {dimension_numbers = #tpu.dot_dimension_numbers<[1], [0], [0], [1], [0, 0, 1, 1], [], []>} : vector<4x4xbf16>, vector<4x324xbf16>, vector<4x324xf32> -> vector<4x324xf32>
    %24 = arith.addf %18, %23 : vector<4x324xf32>
    %c2 = arith.constant 2 : index
    %c0_26 = arith.constant 0 : index
    %c0_27 = arith.constant 0 : index
    %25 = vector.load %arg3[%c2, %c0_26, %c0_27] : memref<9x4x4xbf16, #tpu.memory_space<vmem>>, vector<1x4x4xbf16>
    %26 = vector.shape_cast %25 : vector<1x4x4xbf16> to vector<4x4xbf16>
    %c0_28 = arith.constant 0 : index
    %c0_29 = arith.constant 0 : index
    %c2_30 = arith.constant 2 : index
    %27 = vector.load %arg1[%c0_28, %c0_29, %c2_30] : memref<1x4x362xbf16, #tpu.memory_space<vmem>>, vector<1x4x324xbf16>
    %28 = vector.shape_cast %27 : vector<1x4x324xbf16> to vector<4x324xbf16>
    %cst_31 = arith.constant dense<0.000000e+00> : vector<4x324xf32>
    %29 = tpu.matmul %26, %28, %cst_31 {dimension_numbers = #tpu.dot_dimension_numbers<[1], [0], [0], [1], [0, 0, 1, 1], [], []>} : vector<4x4xbf16>, vector<4x324xbf16>, vector<4x324xf32> -> vector<4x324xf32>
    %30 = arith.addf %24, %29 : vector<4x324xf32>
    %c2_32 = arith.constant 2 : index
    %c0_33 = arith.constant 0 : index
    %c0_34 = arith.constant 0 : index
    %31 = vector.load %arg4[%c2_32, %c0_33, %c0_34] : memref<9x4x4xbf16, #tpu.memory_space<vmem>>, vector<1x4x4xbf16>
    %32 = vector.shape_cast %31 : vector<1x4x4xbf16> to vector<4x4xbf16>
    %c0_35 = arith.constant 0 : index
    %c0_36 = arith.constant 0 : index
    %c2_37 = arith.constant 2 : index
    %33 = vector.load %arg2[%c0_35, %c0_36, %c2_37] : memref<1x4x362xbf16, #tpu.memory_space<vmem>>, vector<1x4x324xbf16>
    %34 = vector.shape_cast %33 : vector<1x4x324xbf16> to vector<4x324xbf16>
    %cst_38 = arith.constant dense<0.000000e+00> : vector<4x324xf32>
    %35 = tpu.matmul %32, %34, %cst_38 {dimension_numbers = #tpu.dot_dimension_numbers<[1], [0], [0], [1], [0, 0, 1, 1], [], []>} : vector<4x4xbf16>, vector<4x324xbf16>, vector<4x324xf32> -> vector<4x324xf32>
    %36 = arith.addf %30, %35 : vector<4x324xf32>
    %c3 = arith.constant 3 : index
    %c0_39 = arith.constant 0 : index
    %c0_40 = arith.constant 0 : index
    %37 = vector.load %arg3[%c3, %c0_39, %c0_40] : memref<9x4x4xbf16, #tpu.memory_space<vmem>>, vector<1x4x4xbf16>
    %38 = vector.shape_cast %37 : vector<1x4x4xbf16> to vector<4x4xbf16>
    %c0_41 = arith.constant 0 : index
    %c0_42 = arith.constant 0 : index
    %c18 = arith.constant 18 : index
    %39 = vector.load %arg1[%c0_41, %c0_42, %c18] : memref<1x4x362xbf16, #tpu.memory_space<vmem>>, vector<1x4x324xbf16>
    %40 = vector.shape_cast %39 : vector<1x4x324xbf16> to vector<4x324xbf16>
    %cst_43 = arith.constant dense<0.000000e+00> : vector<4x324xf32>
    %41 = tpu.matmul %38, %40, %cst_43 {dimension_numbers = #tpu.dot_dimension_numbers<[1], [0], [0], [1], [0, 0, 1, 1], [], []>} : vector<4x4xbf16>, vector<4x324xbf16>, vector<4x324xf32> -> vector<4x324xf32>
    %42 = arith.addf %36, %41 : vector<4x324xf32>
    %c3_44 = arith.constant 3 : index
    %c0_45 = arith.constant 0 : index
    %c0_46 = arith.constant 0 : index
    %43 = vector.load %arg4[%c3_44, %c0_45, %c0_46] : memref<9x4x4xbf16, #tpu.memory_space<vmem>>, vector<1x4x4xbf16>
    %44 = vector.shape_cast %43 : vector<1x4x4xbf16> to vector<4x4xbf16>
    %c0_47 = arith.constant 0 : index
    %c0_48 = arith.constant 0 : index
    %c18_49 = arith.constant 18 : index
    %45 = vector.load %arg2[%c0_47, %c0_48, %c18_49] : memref<1x4x362xbf16, #tpu.memory_space<vmem>>, vector<1x4x324xbf16>
    %46 = vector.shape_cast %45 : vector<1x4x324xbf16> to vector<4x324xbf16>
    %cst_50 = arith.constant dense<0.000000e+00> : vector<4x324xf32>
    %47 = tpu.matmul %44, %46, %cst_50 {dimension_numbers = #tpu.dot_dimension_numbers<[1], [0], [0], [1], [0, 0, 1, 1], [], []>} : vector<4x4xbf16>, vector<4x324xbf16>, vector<4x324xf32> -> vector<4x324xf32>
    %48 = arith.addf %42, %47 : vector<4x324xf32>
    %c4 = arith.constant 4 : index
    %c0_51 = arith.constant 0 : index
    %c0_52 = arith.constant 0 : index
    %49 = vector.load %arg3[%c4, %c0_51, %c0_52] : memref<9x4x4xbf16, #tpu.memory_space<vmem>>, vector<1x4x4xbf16>
    %50 = vector.shape_cast %49 : vector<1x4x4xbf16> to vector<4x4xbf16>
    %c0_53 = arith.constant 0 : index
    %c0_54 = arith.constant 0 : index
    %c19 = arith.constant 19 : index
    %51 = vector.load %arg1[%c0_53, %c0_54, %c19] : memref<1x4x362xbf16, #tpu.memory_space<vmem>>, vector<1x4x324xbf16>
    %52 = vector.shape_cast %51 : vector<1x4x324xbf16> to vector<4x324xbf16>
    %cst_55 = arith.constant dense<0.000000e+00> : vector<4x324xf32>
    %53 = tpu.matmul %50, %52, %cst_55 {dimension_numbers = #tpu.dot_dimension_numbers<[1], [0], [0], [1], [0, 0, 1, 1], [], []>} : vector<4x4xbf16>, vector<4x324xbf16>, vector<4x324xf32> -> vector<4x324xf32>
    %54 = arith.addf %48, %53 : vector<4x324xf32>
    %c4_56 = arith.constant 4 : index
    %c0_57 = arith.constant 0 : index
    %c0_58 = arith.constant 0 : index
    %55 = vector.load %arg4[%c4_56, %c0_57, %c0_58] : memref<9x4x4xbf16, #tpu.memory_space<vmem>>, vector<1x4x4xbf16>
    %56 = vector.shape_cast %55 : vector<1x4x4xbf16> to vector<4x4xbf16>
    %c0_59 = arith.constant 0 : index
    %c0_60 = arith.constant 0 : index
    %c19_61 = arith.constant 19 : index
    %57 = vector.load %arg2[%c0_59, %c0_60, %c19_61] : memref<1x4x362xbf16, #tpu.memory_space<vmem>>, vector<1x4x324xbf16>
    %58 = vector.shape_cast %57 : vector<1x4x324xbf16> to vector<4x324xbf16>
    %cst_62 = arith.constant dense<0.000000e+00> : vector<4x324xf32>
    %59 = tpu.matmul %56, %58, %cst_62 {dimension_numbers = #tpu.dot_dimension_numbers<[1], [0], [0], [1], [0, 0, 1, 1], [], []>} : vector<4x4xbf16>, vector<4x324xbf16>, vector<4x324xf32> -> vector<4x324xf32>
    %60 = arith.addf %54, %59 : vector<4x324xf32>
    %c5 = arith.constant 5 : index
    %c0_63 = arith.constant 0 : index
    %c0_64 = arith.constant 0 : index
    %61 = vector.load %arg3[%c5, %c0_63, %c0_64] : memref<9x4x4xbf16, #tpu.memory_space<vmem>>, vector<1x4x4xbf16>
    %62 = vector.shape_cast %61 : vector<1x4x4xbf16> to vector<4x4xbf16>
    %c0_65 = arith.constant 0 : index
    %c0_66 = arith.constant 0 : index
    %c20 = arith.constant 20 : index
    %63 = vector.load %arg1[%c0_65, %c0_66, %c20] : memref<1x4x362xbf16, #tpu.memory_space<vmem>>, vector<1x4x324xbf16>
    %64 = vector.shape_cast %63 : vector<1x4x324xbf16> to vector<4x324xbf16>
    %cst_67 = arith.constant dense<0.000000e+00> : vector<4x324xf32>
    %65 = tpu.matmul %62, %64, %cst_67 {dimension_numbers = #tpu.dot_dimension_numbers<[1], [0], [0], [1], [0, 0, 1, 1], [], []>} : vector<4x4xbf16>, vector<4x324xbf16>, vector<4x324xf32> -> vector<4x324xf32>
    %66 = arith.addf %60, %65 : vector<4x324xf32>
    %c5_68 = arith.constant 5 : index
    %c0_69 = arith.constant 0 : index
    %c0_70 = arith.constant 0 : index
    %67 = vector.load %arg4[%c5_68, %c0_69, %c0_70] : memref<9x4x4xbf16, #tpu.memory_space<vmem>>, vector<1x4x4xbf16>
    %68 = vector.shape_cast %67 : vector<1x4x4xbf16> to vector<4x4xbf16>
    %c0_71 = arith.constant 0 : index
    %c0_72 = arith.constant 0 : index
    %c20_73 = arith.constant 20 : index
    %69 = vector.load %arg2[%c0_71, %c0_72, %c20_73] : memref<1x4x362xbf16, #tpu.memory_space<vmem>>, vector<1x4x324xbf16>
    %70 = vector.shape_cast %69 : vector<1x4x324xbf16> to vector<4x324xbf16>
    %cst_74 = arith.constant dense<0.000000e+00> : vector<4x324xf32>
    %71 = tpu.matmul %68, %70, %cst_74 {dimension_numbers = #tpu.dot_dimension_numbers<[1], [0], [0], [1], [0, 0, 1, 1], [], []>} : vector<4x4xbf16>, vector<4x324xbf16>, vector<4x324xf32> -> vector<4x324xf32>
    %72 = arith.addf %66, %71 : vector<4x324xf32>
    %c6 = arith.constant 6 : index
    %c0_75 = arith.constant 0 : index
    %c0_76 = arith.constant 0 : index
    %73 = vector.load %arg3[%c6, %c0_75, %c0_76] : memref<9x4x4xbf16, #tpu.memory_space<vmem>>, vector<1x4x4xbf16>
    %74 = vector.shape_cast %73 : vector<1x4x4xbf16> to vector<4x4xbf16>
    %c0_77 = arith.constant 0 : index
    %c0_78 = arith.constant 0 : index
    %c36 = arith.constant 36 : index
    %75 = vector.load %arg1[%c0_77, %c0_78, %c36] : memref<1x4x362xbf16, #tpu.memory_space<vmem>>, vector<1x4x324xbf16>
    %76 = vector.shape_cast %75 : vector<1x4x324xbf16> to vector<4x324xbf16>
    %cst_79 = arith.constant dense<0.000000e+00> : vector<4x324xf32>
    %77 = tpu.matmul %74, %76, %cst_79 {dimension_numbers = #tpu.dot_dimension_numbers<[1], [0], [0], [1], [0, 0, 1, 1], [], []>} : vector<4x4xbf16>, vector<4x324xbf16>, vector<4x324xf32> -> vector<4x324xf32>
    %78 = arith.addf %72, %77 : vector<4x324xf32>
    %c6_80 = arith.constant 6 : index
    %c0_81 = arith.constant 0 : index
    %c0_82 = arith.constant 0 : index
    %79 = vector.load %arg4[%c6_80, %c0_81, %c0_82] : memref<9x4x4xbf16, #tpu.memory_space<vmem>>, vector<1x4x4xbf16>
    %80 = vector.shape_cast %79 : vector<1x4x4xbf16> to vector<4x4xbf16>
    %c0_83 = arith.constant 0 : index
    %c0_84 = arith.constant 0 : index
    %c36_85 = arith.constant 36 : index
    %81 = vector.load %arg2[%c0_83, %c0_84, %c36_85] : memref<1x4x362xbf16, #tpu.memory_space<vmem>>, vector<1x4x324xbf16>
    %82 = vector.shape_cast %81 : vector<1x4x324xbf16> to vector<4x324xbf16>
    %cst_86 = arith.constant dense<0.000000e+00> : vector<4x324xf32>
    %83 = tpu.matmul %80, %82, %cst_86 {dimension_numbers = #tpu.dot_dimension_numbers<[1], [0], [0], [1], [0, 0, 1, 1], [], []>} : vector<4x4xbf16>, vector<4x324xbf16>, vector<4x324xf32> -> vector<4x324xf32>
    %84 = arith.addf %78, %83 : vector<4x324xf32>
    %c7 = arith.constant 7 : index
    %c0_87 = arith.constant 0 : index
    %c0_88 = arith.constant 0 : index
    %85 = vector.load %arg3[%c7, %c0_87, %c0_88] : memref<9x4x4xbf16, #tpu.memory_space<vmem>>, vector<1x4x4xbf16>
    %86 = vector.shape_cast %85 : vector<1x4x4xbf16> to vector<4x4xbf16>
    %c0_89 = arith.constant 0 : index
    %c0_90 = arith.constant 0 : index
    %c37 = arith.constant 37 : index
    %87 = vector.load %arg1[%c0_89, %c0_90, %c37] : memref<1x4x362xbf16, #tpu.memory_space<vmem>>, vector<1x4x324xbf16>
    %88 = vector.shape_cast %87 : vector<1x4x324xbf16> to vector<4x324xbf16>
    %cst_91 = arith.constant dense<0.000000e+00> : vector<4x324xf32>
    %89 = tpu.matmul %86, %88, %cst_91 {dimension_numbers = #tpu.dot_dimension_numbers<[1], [0], [0], [1], [0, 0, 1, 1], [], []>} : vector<4x4xbf16>, vector<4x324xbf16>, vector<4x324xf32> -> vector<4x324xf32>
    %90 = arith.addf %84, %89 : vector<4x324xf32>
    %c7_92 = arith.constant 7 : index
    %c0_93 = arith.constant 0 : index
    %c0_94 = arith.constant 0 : index
    %91 = vector.load %arg4[%c7_92, %c0_93, %c0_94] : memref<9x4x4xbf16, #tpu.memory_space<vmem>>, vector<1x4x4xbf16>
    %92 = vector.shape_cast %91 : vector<1x4x4xbf16> to vector<4x4xbf16>
    %c0_95 = arith.constant 0 : index
    %c0_96 = arith.constant 0 : index
    %c37_97 = arith.constant 37 : index
    %93 = vector.load %arg2[%c0_95, %c0_96, %c37_97] : memref<1x4x362xbf16, #tpu.memory_space<vmem>>, vector<1x4x324xbf16>
    %94 = vector.shape_cast %93 : vector<1x4x324xbf16> to vector<4x324xbf16>
    %cst_98 = arith.constant dense<0.000000e+00> : vector<4x324xf32>
    %95 = tpu.matmul %92, %94, %cst_98 {dimension_numbers = #tpu.dot_dimension_numbers<[1], [0], [0], [1], [0, 0, 1, 1], [], []>} : vector<4x4xbf16>, vector<4x324xbf16>, vector<4x324xf32> -> vector<4x324xf32>
    %96 = arith.addf %90, %95 : vector<4x324xf32>
    %c8 = arith.constant 8 : index
    %c0_99 = arith.constant 0 : index
    %c0_100 = arith.constant 0 : index
    %97 = vector.load %arg3[%c8, %c0_99, %c0_100] : memref<9x4x4xbf16, #tpu.memory_space<vmem>>, vector<1x4x4xbf16>
    %98 = vector.shape_cast %97 : vector<1x4x4xbf16> to vector<4x4xbf16>
    %c0_101 = arith.constant 0 : index
    %c0_102 = arith.constant 0 : index
    %c38 = arith.constant 38 : index
    %99 = vector.load %arg1[%c0_101, %c0_102, %c38] : memref<1x4x362xbf16, #tpu.memory_space<vmem>>, vector<1x4x324xbf16>
    %100 = vector.shape_cast %99 : vector<1x4x324xbf16> to vector<4x324xbf16>
    %cst_103 = arith.constant dense<0.000000e+00> : vector<4x324xf32>
    %101 = tpu.matmul %98, %100, %cst_103 {dimension_numbers = #tpu.dot_dimension_numbers<[1], [0], [0], [1], [0, 0, 1, 1], [], []>} : vector<4x4xbf16>, vector<4x324xbf16>, vector<4x324xf32> -> vector<4x324xf32>
    %102 = arith.addf %96, %101 : vector<4x324xf32>
    %c8_104 = arith.constant 8 : index
    %c0_105 = arith.constant 0 : index
    %c0_106 = arith.constant 0 : index
    %103 = vector.load %arg4[%c8_104, %c0_105, %c0_106] : memref<9x4x4xbf16, #tpu.memory_space<vmem>>, vector<1x4x4xbf16>
    %104 = vector.shape_cast %103 : vector<1x4x4xbf16> to vector<4x4xbf16>
    %c0_107 = arith.constant 0 : index
    %c0_108 = arith.constant 0 : index
    %c38_109 = arith.constant 38 : index
    %105 = vector.load %arg2[%c0_107, %c0_108, %c38_109] : memref<1x4x362xbf16, #tpu.memory_space<vmem>>, vector<1x4x324xbf16>
    %106 = vector.shape_cast %105 : vector<1x4x324xbf16> to vector<4x324xbf16>
    %cst_110 = arith.constant dense<0.000000e+00> : vector<4x324xf32>
    %107 = tpu.matmul %104, %106, %cst_110 {dimension_numbers = #tpu.dot_dimension_numbers<[1], [0], [0], [1], [0, 0, 1, 1], [], []>} : vector<4x4xbf16>, vector<4x324xbf16>, vector<4x324xf32> -> vector<4x324xf32>
    %108 = arith.addf %102, %107 : vector<4x324xf32>
    %c0_111 = arith.constant 0 : index
    %c0_112 = arith.constant 0 : index
    %109 = vector.load %arg5[%c0_111, %c0_112] : memref<4x1xf32, #tpu.memory_space<vmem>>, vector<4x1xf32>
    %110 = vector.broadcast %109 : vector<4x1xf32> to vector<4x324xf32>
    %111 = arith.addf %108, %110 : vector<4x324xf32>
    %cst_113 = arith.constant 0.000000e+00 : f32
    %112 = vector.broadcast %cst_113 : f32 to vector<4x324xf32>
    %113 = arith.maximumf %111, %112 : vector<4x324xf32>
    %c0_114 = arith.constant 0 : index
    %c0_115 = arith.constant 0 : index
    %114 = vector.load %arg8[%c0_114, %c0_115] : memref<1x324xf32, #tpu.memory_space<vmem>>, vector<1x324xf32>
    %115 = vector.broadcast %114 : vector<1x324xf32> to vector<4x324xf32>
    %116 = arith.mulf %113, %115 : vector<4x324xf32>
    %cst_116 = arith.constant 0.000000e+00 : bf16
    %117 = vector.broadcast %cst_116 : bf16 to vector<4x362xbf16>
    %c0_117 = arith.constant 0 : index
    %c0_118 = arith.constant 0 : index
    %118 = vector.load %arg10[%c0_117, %c0_118] : memref<4x362xbf16, #tpu.memory_space<vmem>>, vector<4x362xbf16>
    tpu.vector_store %arg10[%c0_117, %c0_118], %117 {strides = array<i32>} : memref<4x362xbf16, #tpu.memory_space<vmem>>, vector<4x362xbf16>,
    %119 = arith.truncf %116 : vector<4x324xf32> to vector<4x324xbf16>
    %c0_119 = arith.constant 0 : index
    %c19_120 = arith.constant 19 : index
    %120 = vector.load %arg10[%c0_119, %c19_120] : memref<4x362xbf16, #tpu.memory_space<vmem>>, vector<4x324xbf16>
    tpu.vector_store %arg10[%c0_119, %c19_120], %119 {strides = array<i32>} : memref<4x362xbf16, #tpu.memory_space<vmem>>, vector<4x324xbf16>,
    %cst_121 = arith.constant 0.000000e+00 : f32
    %121 = vector.broadcast %cst_121 : f32 to vector<4x324xf32>
    %c0_122 = arith.constant 0 : index
    %c0_123 = arith.constant 0 : index
    %c0_124 = arith.constant 0 : index
    %122 = vector.load %arg6[%c0_122, %c0_123, %c0_124] : memref<9x4x4xbf16, #tpu.memory_space<vmem>>, vector<1x4x4xbf16>
    %123 = vector.shape_cast %122 : vector<1x4x4xbf16> to vector<4x4xbf16>
    %c0_125 = arith.constant 0 : index
    %c0_126 = arith.constant 0 : index
    %124 = vector.load %arg10[%c0_125, %c0_126] : memref<4x362xbf16, #tpu.memory_space<vmem>>, vector<4x324xbf16>
    %cst_127 = arith.constant dense<0.000000e+00> : vector<4x324xf32>
    %125 = tpu.matmul %123, %124, %cst_127 {dimension_numbers = #tpu.dot_dimension_numbers<[1], [0], [0], [1], [0, 0, 1, 1], [], []>} : vector<4x4xbf16>, vector<4x324xbf16>, vector<4x324xf32> -> vector<4x324xf32>
    %126 = arith.addf %121, %125 : vector<4x324xf32>
    %c1_128 = arith.constant 1 : index
    %c0_129 = arith.constant 0 : index
    %c0_130 = arith.constant 0 : index
    %127 = vector.load %arg6[%c1_128, %c0_129, %c0_130] : memref<9x4x4xbf16, #tpu.memory_space<vmem>>, vector<1x4x4xbf16>
    %128 = vector.shape_cast %127 : vector<1x4x4xbf16> to vector<4x4xbf16>
    %c0_131 = arith.constant 0 : index
    %c1_132 = arith.constant 1 : index
    %129 = vector.load %arg10[%c0_131, %c1_132] : memref<4x362xbf16, #tpu.memory_space<vmem>>, vector<4x324xbf16>
    %cst_133 = arith.constant dense<0.000000e+00> : vector<4x324xf32>
    %130 = tpu.matmul %128, %129, %cst_133 {dimension_numbers = #tpu.dot_dimension_numbers<[1], [0], [0], [1], [0, 0, 1, 1], [], []>} : vector<4x4xbf16>, vector<4x324xbf16>, vector<4x324xf32> -> vector<4x324xf32>
    %131 = arith.addf %126, %130 : vector<4x324xf32>
    %c2_134 = arith.constant 2 : index
    %c0_135 = arith.constant 0 : index
    %c0_136 = arith.constant 0 : index
    %132 = vector.load %arg6[%c2_134, %c0_135, %c0_136] : memref<9x4x4xbf16, #tpu.memory_space<vmem>>, vector<1x4x4xbf16>
    %133 = vector.shape_cast %132 : vector<1x4x4xbf16> to vector<4x4xbf16>
    %c0_137 = arith.constant 0 : index
    %c2_138 = arith.constant 2 : index
    %134 = vector.load %arg10[%c0_137, %c2_138] : memref<4x362xbf16, #tpu.memory_space<vmem>>, vector<4x324xbf16>
    %cst_139 = arith.constant dense<0.000000e+00> : vector<4x324xf32>
    %135 = tpu.matmul %133, %134, %cst_139 {dimension_numbers = #tpu.dot_dimension_numbers<[1], [0], [0], [1], [0, 0, 1, 1], [], []>} : vector<4x4xbf16>, vector<4x324xbf16>, vector<4x324xf32> -> vector<4x324xf32>
    %136 = arith.addf %131, %135 : vector<4x324xf32>
    %c3_140 = arith.constant 3 : index
    %c0_141 = arith.constant 0 : index
    %c0_142 = arith.constant 0 : index
    %137 = vector.load %arg6[%c3_140, %c0_141, %c0_142] : memref<9x4x4xbf16, #tpu.memory_space<vmem>>, vector<1x4x4xbf16>
    %138 = vector.shape_cast %137 : vector<1x4x4xbf16> to vector<4x4xbf16>
    %c0_143 = arith.constant 0 : index
    %c18_144 = arith.constant 18 : index
    %139 = vector.load %arg10[%c0_143, %c18_144] : memref<4x362xbf16, #tpu.memory_space<vmem>>, vector<4x324xbf16>
    %cst_145 = arith.constant dense<0.000000e+00> : vector<4x324xf32>
    %140 = tpu.matmul %138, %139, %cst_145 {dimension_numbers = #tpu.dot_dimension_numbers<[1], [0], [0], [1], [0, 0, 1, 1], [], []>} : vector<4x4xbf16>, vector<4x324xbf16>, vector<4x324xf32> -> vector<4x324xf32>
    %141 = arith.addf %136, %140 : vector<4x324xf32>
    %c4_146 = arith.constant 4 : index
    %c0_147 = arith.constant 0 : index
    %c0_148 = arith.constant 0 : index
    %142 = vector.load %arg6[%c4_146, %c0_147, %c0_148] : memref<9x4x4xbf16, #tpu.memory_space<vmem>>, vector<1x4x4xbf16>
    %143 = vector.shape_cast %142 : vector<1x4x4xbf16> to vector<4x4xbf16>
    %c0_149 = arith.constant 0 : index
    %c19_150 = arith.constant 19 : index
    %144 = vector.load %arg10[%c0_149, %c19_150] : memref<4x362xbf16, #tpu.memory_space<vmem>>, vector<4x324xbf16>
    %cst_151 = arith.constant dense<0.000000e+00> : vector<4x324xf32>
    %145 = tpu.matmul %143, %144, %cst_151 {dimension_numbers = #tpu.dot_dimension_numbers<[1], [0], [0], [1], [0, 0, 1, 1], [], []>} : vector<4x4xbf16>, vector<4x324xbf16>, vector<4x324xf32> -> vector<4x324xf32>
    %146 = arith.addf %141, %145 : vector<4x324xf32>
    %c5_152 = arith.constant 5 : index
    %c0_153 = arith.constant 0 : index
    %c0_154 = arith.constant 0 : index
    %147 = vector.load %arg6[%c5_152, %c0_153, %c0_154] : memref<9x4x4xbf16, #tpu.memory_space<vmem>>, vector<1x4x4xbf16>
    %148 = vector.shape_cast %147 : vector<1x4x4xbf16> to vector<4x4xbf16>
    %c0_155 = arith.constant 0 : index
    %c20_156 = arith.constant 20 : index
    %149 = vector.load %arg10[%c0_155, %c20_156] : memref<4x362xbf16, #tpu.memory_space<vmem>>, vector<4x324xbf16>
    %cst_157 = arith.constant dense<0.000000e+00> : vector<4x324xf32>
    %150 = tpu.matmul %148, %149, %cst_157 {dimension_numbers = #tpu.dot_dimension_numbers<[1], [0], [0], [1], [0, 0, 1, 1], [], []>} : vector<4x4xbf16>, vector<4x324xbf16>, vector<4x324xf32> -> vector<4x324xf32>
    %151 = arith.addf %146, %150 : vector<4x324xf32>
    %c6_158 = arith.constant 6 : index
    %c0_159 = arith.constant 0 : index
    %c0_160 = arith.constant 0 : index
    %152 = vector.load %arg6[%c6_158, %c0_159, %c0_160] : memref<9x4x4xbf16, #tpu.memory_space<vmem>>, vector<1x4x4xbf16>
    %153 = vector.shape_cast %152 : vector<1x4x4xbf16> to vector<4x4xbf16>
    %c0_161 = arith.constant 0 : index
    %c36_162 = arith.constant 36 : index
    %154 = vector.load %arg10[%c0_161, %c36_162] : memref<4x362xbf16, #tpu.memory_space<vmem>>, vector<4x324xbf16>
    %cst_163 = arith.constant dense<0.000000e+00> : vector<4x324xf32>
    %155 = tpu.matmul %153, %154, %cst_163 {dimension_numbers = #tpu.dot_dimension_numbers<[1], [0], [0], [1], [0, 0, 1, 1], [], []>} : vector<4x4xbf16>, vector<4x324xbf16>, vector<4x324xf32> -> vector<4x324xf32>
    %156 = arith.addf %151, %155 : vector<4x324xf32>
    %c7_164 = arith.constant 7 : index
    %c0_165 = arith.constant 0 : index
    %c0_166 = arith.constant 0 : index
    %157 = vector.load %arg6[%c7_164, %c0_165, %c0_166] : memref<9x4x4xbf16, #tpu.memory_space<vmem>>, vector<1x4x4xbf16>
    %158 = vector.shape_cast %157 : vector<1x4x4xbf16> to vector<4x4xbf16>
    %c0_167 = arith.constant 0 : index
    %c37_168 = arith.constant 37 : index
    %159 = vector.load %arg10[%c0_167, %c37_168] : memref<4x362xbf16, #tpu.memory_space<vmem>>, vector<4x324xbf16>
    %cst_169 = arith.constant dense<0.000000e+00> : vector<4x324xf32>
    %160 = tpu.matmul %158, %159, %cst_169 {dimension_numbers = #tpu.dot_dimension_numbers<[1], [0], [0], [1], [0, 0, 1, 1], [], []>} : vector<4x4xbf16>, vector<4x324xbf16>, vector<4x324xf32> -> vector<4x324xf32>
    %161 = arith.addf %156, %160 : vector<4x324xf32>
    %c8_170 = arith.constant 8 : index
    %c0_171 = arith.constant 0 : index
    %c0_172 = arith.constant 0 : index
    %162 = vector.load %arg6[%c8_170, %c0_171, %c0_172] : memref<9x4x4xbf16, #tpu.memory_space<vmem>>, vector<1x4x4xbf16>
    %163 = vector.shape_cast %162 : vector<1x4x4xbf16> to vector<4x4xbf16>
    %c0_173 = arith.constant 0 : index
    %c38_174 = arith.constant 38 : index
    %164 = vector.load %arg10[%c0_173, %c38_174] : memref<4x362xbf16, #tpu.memory_space<vmem>>, vector<4x324xbf16>
    %cst_175 = arith.constant dense<0.000000e+00> : vector<4x324xf32>
    %165 = tpu.matmul %163, %164, %cst_175 {dimension_numbers = #tpu.dot_dimension_numbers<[1], [0], [0], [1], [0, 0, 1, 1], [], []>} : vector<4x4xbf16>, vector<4x324xbf16>, vector<4x324xf32> -> vector<4x324xf32>
    %166 = arith.addf %161, %165 : vector<4x324xf32>
    %c0_176 = arith.constant 0 : index
    %c0_177 = arith.constant 0 : index
    %167 = vector.load %arg7[%c0_176, %c0_177] : memref<4x1xf32, #tpu.memory_space<vmem>>, vector<4x1xf32>
    %168 = vector.broadcast %167 : vector<4x1xf32> to vector<4x324xf32>
    %169 = arith.addf %166, %168 : vector<4x324xf32>
    %cst_178 = arith.constant 0.000000e+00 : f32
    %170 = vector.broadcast %cst_178 : f32 to vector<4x324xf32>
    %171 = arith.maximumf %169, %170 : vector<4x324xf32>
    %c0_179 = arith.constant 0 : index
    %c0_180 = arith.constant 0 : index
    %c0_181 = arith.constant 0 : index
    %172 = vector.load %arg9[%c0_179, %c0_180, %c0_181] : memref<1x4x324xf32, #tpu.memory_space<vmem>>, vector<1x4x324xf32>
    %173 = vector.shape_cast %172 : vector<1x4x324xf32> to vector<4x324xf32>
    %174 = vector.shape_cast %171 : vector<4x324xf32> to vector<1x4x324xf32>
    tpu.vector_store %arg9[%c0_179, %c0_180, %c0_181], %174 {strides = array<i32>} : memref<1x4x324xf32, #tpu.memory_space<vmem>>, vector<1x4x324xf32>,
    return
  }
  func.func @transform_0(%arg0: i32) -> (i32, i32, i32) {
    %c0_i32 = arith.constant 0 : i32
    %c0_i32_0 = arith.constant 0 : i32
    %c0_i32_1 = arith.constant 0 : i32
    return %arg0, %c0_i32, %c0_i32_0 : i32, i32, i32
  }
  func.func @transform_1(%arg0: i32) -> (i32, i32, i32) {
    %c0_i32 = arith.constant 0 : i32
    %c0_i32_0 = arith.constant 0 : i32
    %c0_i32_1 = arith.constant 0 : i32
    return %arg0, %c0_i32, %c0_i32_0 : i32, i32, i32
  }
  func.func @transform_2(%arg0: i32) -> (i32, i32, i32) {
    %c0_i32 = arith.constant 0 : i32
    %c0_i32_0 = arith.constant 0 : i32
    %c0_i32_1 = arith.constant 0 : i32
    %c0_i32_2 = arith.constant 0 : i32
    return %c0_i32, %c0_i32_0, %c0_i32_1 : i32, i32, i32
  }
  func.func @transform_3(%arg0: i32) -> (i32, i32, i32) {
    %c0_i32 = arith.constant 0 : i32
    %c0_i32_0 = arith.constant 0 : i32
    %c0_i32_1 = arith.constant 0 : i32
    %c0_i32_2 = arith.constant 0 : i32
    return %c0_i32, %c0_i32_0, %c0_i32_1 : i32, i32, i32
  }
  func.func @transform_4(%arg0: i32) -> (i32, i32) {
    %c0_i32 = arith.constant 0 : i32
    %c0_i32_0 = arith.constant 0 : i32
    %c0_i32_1 = arith.constant 0 : i32
    return %c0_i32, %c0_i32_0 : i32, i32
  }
  func.func @transform_5(%arg0: i32) -> (i32, i32, i32) {
    %c0_i32 = arith.constant 0 : i32
    %c0_i32_0 = arith.constant 0 : i32
    %c0_i32_1 = arith.constant 0 : i32
    %c0_i32_2 = arith.constant 0 : i32
    return %c0_i32, %c0_i32_0, %c0_i32_1 : i32, i32, i32
  }
  func.func @transform_6(%arg0: i32) -> (i32, i32) {
    %c0_i32 = arith.constant 0 : i32
    %c0_i32_0 = arith.constant 0 : i32
    %c0_i32_1 = arith.constant 0 : i32
    return %c0_i32, %c0_i32_0 : i32, i32
  }
  func.func @transform_7(%arg0: i32) -> (i32, i32) {
    %c0_i32 = arith.constant 0 : i32
    %c0_i32_0 = arith.constant 0 : i32
    %c0_i32_1 = arith.constant 0 : i32
    return %c0_i32, %c0_i32_0 : i32, i32
  }
  func.func @transform_8(%arg0: i32) -> (i32, i32, i32) {
    %c0_i32 = arith.constant 0 : i32
    %c0_i32_0 = arith.constant 0 : i32
    %c0_i32_1 = arith.constant 0 : i32
    return %arg0, %c0_i32, %c0_i32_0 : i32, i32, i32
  }
}

</mosaic_0001>

<llo_original>
// kernel: tile.0
$region0: #{tile.0}
  %s0 = inlined_call_operand.vmem [shape: f32[4,4], index: 0, kind: input, shape index: {}]
  %s1 = inlined_call_operand.vmem [shape: f32[16,1], index: 1, kind: output, shape index: {}]
  $region1: #{tile.0} parent=0
    #allocation0 [shape = 'u8[4096]{0}', space=vmem, size = 0x1000, scoped, tag = 'scoped mem for input reshape']
    %s3 = sshllo.u32 0, 4
    %v4 = vld [vmem:[%s0] sm:%s3]
    %5 = vst [vmem:[#allocation0] sm:%s3] %v4
    %v6 = vld [vmem:[#allocation0] sm:$0xf]
    %vm7 = vcmask 7168
    %8 = vst.msk [vmem:[%s1] ss:$4 sm:$0xf] %vm7, %v6
    %v9 = vld [vmem:[#allocation0] sm:$0xf]
    %10 = vrot.lane.b32.xlu0 %v9, 127
    %v11 = vpop.permute.xlu0 %10
    %vm12 = vcmask 7168
    %s13 = scalar_lea.vmem %s1, 1
    %14 = vst.msk [vmem:[%s13] ss:$4 sm:$0xf] %vm12, %v11
    %v15 = vld [vmem:[#allocation0] sm:$0xf]
    %16 = vrot.lane.b32.xlu0 %v15, 126
    %v17 = vpop.permute.xlu0 %16
    %vm18 = vcmask 7168
    %s19 = scalar_lea.vmem %s1, 2
    %20 = vst.msk [vmem:[%s19] ss:$4 sm:$0xf] %vm18, %v17
    %v21 = vld [vmem:[#allocation0] sm:$0xf]
    %22 = vrot.lane.b32.xlu0 %v21, 125
    %v23 = vpop.permute.xlu0 %22
    %vm24 = vcmask 7168
    %s25 = scalar_lea.vmem %s1, 3
    %26 = vst.msk [vmem:[%s25] ss:$4 sm:$0xf] %vm24, %v23

// kernel: tile.8
$region0: #{tile.8}
  #allocation0 [shape = 's32[1]{0}', space=sflag, size = 0x4, scoped, tag = 'scoped memory for tile.8']
  %s0 = inlined_call_operand.vmem [shape: f32[4], index: 0, kind: input, shape index: {}]
  %s1 = inlined_call_operand.vmem [shape: f32[4,4], index: 1, kind: output, shape index: {}]
  // Predicated region
  $region2: #{tile.8} parent=0 // pred_check
    _
  $region3: #{tile.8} parent=0 // pred_check_branch
    %3 = sbr.rel (0) target = $region5
  $region4: #{tile.8} parent=0 // pred_region
    _
  $region5: #{tile.8} parent=0 // pred_fallthru
    _
  %v4 = vld [vmem:[%s0] ss:$0 sm:$0xff]
  %5 = vst [vmem:[%s1] sm:$0xf] %v4

// kernel: up_forward.2
$region0: #{up_forward.2}
  #allocation0 [shape = 'u32[]', space=smem, size = 0x4, offset = 0x4, fixed_abs, tag = 'smem constant byte address 0x4 - core index']
  #allocation1 [shape = 'u32[144,128]{1,0:T(1,128)}', space=vmem, size = 0x12000, scoped, tag = 'internal scratch']
  %s0 = inlined_call_operand.vmem [shape: bf16[2,8,64], index: 0, kind: input, shape index: {}]
  %s1 = inlined_call_operand.vmem [shape: bf16[16,8], index: 1, kind: input, shape index: {}]
  %s2 = inlined_call_operand.vmem [shape: f32[16,1], index: 2, kind: input, shape index: {}]
  %s3 = inlined_call_operand.vmem [shape: bf16[2,16,64], index: 3, kind: output, shape index: {}]
  %s4 = sld [smem:[#allocation0]]
  $region45: #{up_forward.2} parent=0
    _
  %s6 = ssub.s32 1, %s4
  %s7 = scalar_select 0, %s6, %s4
  loop: start=0, step=1, limit=4
  $region2: #{up_forward.2} parent=0 // loop_pre_header
    _
  $region3: #{up_forward.2} parent=0 // loop_header
    %s9 = sphi 0, %s13
    %p10 = scmp.ge.s32.totalorder %s9, 4
    %s19 = sphi 0, %s21
    %s22 = sphi 0, %s19
    %s23 = sphi 0, %s22
    %s39 = sphi 0, %s23
    %s43 = sphi 0, %s43
    %s45 = sphi 0, %s43
    %s46 = sphi 0, %s45
    %s60 = sphi 0, %s46
    %s64 = sphi 0, %s64
    %s66 = sphi 0, %s64
    %s67 = sphi 0, %s66
    %s81 = sphi 0, %s67
    %s87 = sphi 0, %s89
    %s90 = sphi 0, %s87
    %s91 = sphi 0, %s90
    %s107 = sphi 0, %s91
  $region4: #{up_forward.2} parent=0 // loop_header_branch
    %12 = sbr.rel (%p10) target = $region8
  $region5: #{up_forward.2} parent=0 // loop_body
    %s14 = ssub.s32 %s9, 1
    %s15 = ssub.s32 %s9, 2
    %s16 = sadd.s32 %s9, 1
    %s17 = ssub.s32 %s9, %s16
    %p18 = scmp.eq.s32.totalorder %s17, 0
    %s20 = sadd.s32 %s19, 1
    %s21 = scalar_select %p18, %s19, %s20
    %p24 = pneg %p18
    %p25 = scmp.eq.s32.totalorder %s9, 1
    %p26 = por %p24, %p25
    %p27 = scmp.ne.s32.totalorder %s19, %s22
    %p28 = scmp.eq.s32.totalorder %s9, 0
    %p29 = por %p27, %p28
    %p30 = scmp.ne.s32.totalorder %s19, %s22
    %p31 = scmp.eq.s32.totalorder %s14, 1
    %p32 = por %p30, %p31
    %p33 = scmp.ne.s32.totalorder %s22, %s23
    %p34 = scmp.eq.s32.totalorder %s14, 0
    %p35 = por %p33, %p34
    %p36 = scmp.ne.s32.totalorder %s22, %s23
    %p37 = scmp.eq.s32.totalorder %s15, 1
    %p38 = por %p36, %p37
    %p40 = scmp.ne.s32.totalorder %s23, %s39
    %p41 = scmp.eq.s32.totalorder %s15, 0
    %p42 = por %p40, %p41
    %s44 = sadd.s32 %s43, 1
    %p47 = scmp.eq.s32.totalorder %s9, 1
    %p48 = scmp.ne.s32.totalorder %s43, %s45
    %p49 = scmp.eq.s32.totalorder %s9, 0
    %p50 = por %p48, %p49
    %p51 = scmp.ne.s32.totalorder %s43, %s45
    %p52 = scmp.eq.s32.totalorder %s14, 1
    %p53 = por %p51, %p52
    %p54 = scmp.ne.s32.totalorder %s45, %s46
    %p55 = scmp.eq.s32.totalorder %s14, 0
    %p56 = por %p54, %p55
    %p57 = scmp.ne.s32.totalorder %s45, %s46
    %p58 = scmp.eq.s32.totalorder %s15, 1
    %p59 = por %p57, %p58
    %p61 = scmp.ne.s32.totalorder %s46, %s60
    %p62 = scmp.eq.s32.totalorder %s15, 0
    %p63 = por %p61, %p62
    %s65 = sadd.s32 %s64, 1
    %p68 = scmp.eq.s32.totalorder %s9, 1
    %p69 = scmp.ne.s32.totalorder %s64, %s66
    %p70 = scmp.eq.s32.totalorder %s9, 0
    %p71 = por %p69, %p70
    %p72 = scmp.ne.s32.totalorder %s64, %s66
    %p73 = scmp.eq.s32.totalorder %s14, 1
    %p74 = por %p72, %p73
    %p75 = scmp.ne.s32.totalorder %s66, %s67
    %p76 = scmp.eq.s32.totalorder %s14, 0
    %p77 = por %p75, %p76
    %p78 = scmp.ne.s32.totalorder %s66, %s67
    %p79 = scmp.eq.s32.totalorder %s15, 1
    %p80 = por %p78, %p79
    %p82 = scmp.ne.s32.totalorder %s67, %s81
    %p83 = scmp.eq.s32.totalorder %s15, 0
    %p84 = por %p82, %p83
    %s85 = ssub.s32 %s9, %s16
    %p86 = scmp.eq.s32.totalorder %s85, 0
    %s88 = sadd.s32 %s87, 1
    %s89 = scalar_select %p86, %s87, %s88
    %p92 = pneg %p86
    %p93 = scmp.eq.s32.totalorder %s9, 1
    %p94 = por %p92, %p93
    %p95 = scmp.ne.s32.totalorder %s87, %s90
    %p96 = scmp.eq.s32.totalorder %s9, 0
    %p97 = por %p95, %p96
    %p98 = scmp.ne.s32.totalorder %s87, %s90
    %p99 = scmp.eq.s32.totalorder %s14, 1
    %p100 = por %p98, %p99
    %p101 = scmp.ne.s32.totalorder %s90, %s91
    %p102 = scmp.eq.s32.totalorder %s14, 0
    %p103 = por %p101, %p102
    %p104 = scmp.ne.s32.totalorder %s90, %s91
    %p105 = scmp.eq.s32.totalorder %s15, 1
    %p106 = por %p104, %p105
    %p108 = scmp.ne.s32.totalorder %s91, %s107
    %p109 = scmp.eq.s32.totalorder %s15, 0
    %p110 = por %p108, %p109
    %p111 = scmp.le.s32.totalorder 1, %s9
    %p112 = scmp.lt.s32.totalorder %s9, 3
    %p113 = pnand %p111, %p112
    %p114 = pneg %p113
    // Predicated region
    $region9: #{up_forward.2} parent=5 // pred_check
      _
    $region10: #{up_forward.2} parent=5 // pred_check_branch
      %116 = sbr.rel (%p113) target = $region12
    $region11: #{up_forward.2} parent=5 // pred_region
      %s117 = ssub.s32 %s9, 1
      // Predicated region
      $region13: #{up_forward.2} parent=11 // pred_check
        %p118 = pneg %p56
      $region14: #{up_forward.2} parent=11 // pred_check_branch
        %120 = sbr.rel (%p118) target = $region16
      $region15: #{up_forward.2} parent=11 // pred_region
        _
      $region16: #{up_forward.2} parent=11 // pred_fallthru
        _
      // Predicated region
      $region17: #{up_forward.2} parent=11 // pred_check
        %p121 = pneg %p77
      $region18: #{up_forward.2} parent=11 // pred_check_branch
        %123 = sbr.rel (%p121) target = $region20
      $region19: #{up_forward.2} parent=11 // pred_region
        _
      $region20: #{up_forward.2} parent=11 // pred_fallthru
        _
    $region12: #{up_forward.2} parent=5 // pred_fallthru
      _
    %p124 = scmp.lt.s32.totalorder %s9, 2
    // Predicated region
    $region21: #{up_forward.2} parent=5 // pred_check
      %p125 = pneg %p124
    $region22: #{up_forward.2} parent=5 // pred_check_branch
      %127 = sbr.rel (%p125) target = $region24
    $region23: #{up_forward.2} parent=5 // pred_region
      // Predicated region
      $region25: #{up_forward.2} parent=23 // pred_check
        %p128 = pneg %p29
      $region26: #{up_forward.2} parent=23 // pred_check_branch
        %130 = sbr.rel (%p128) target = $region28
      $region27: #{up_forward.2} parent=23 // pred_region
        %p131 = scmp.lt.s32.totalorder %s9, 1
        %s132 = scalar_select %p131, %s9, 1
        %s133 = smul.addr %s132, 4
        %s134 = scalar_lea.vmem %s0, %s133
      $region28: #{up_forward.2} parent=23 // pred_fallthru
        _
    $region24: #{up_forward.2} parent=5 // pred_fallthru
      _
    %p135 = scmp.le.s32.totalorder 1, %s9
    %p136 = scmp.lt.s32.totalorder %s9, 3
    %p137 = pnand %p135, %p136
    %p138 = pneg %p137
    // Predicated region
    $region29: #{up_forward.2} parent=5 // pred_check
      _
    $region30: #{up_forward.2} parent=5 // pred_check_branch
      %140 = sbr.rel (%p137) target = $region32
    $region31: #{up_forward.2} parent=5 // pred_region
      %s141 = ssub.s32 %s9, 1
      %p142 = scmp.lt.s32.totalorder %s14, 1
      %s143 = scalar_select %p142, %s14, 1
      %s144 = smul.addr %s143, 4
      %s145 = scalar_lea.vmem %s0, %s144
      %p146 = pneg %p35
      %p147 = pneg %p32
      %p148 = pneg %p56
      %p149 = pneg %p53
      %p150 = pneg %p77
      %p151 = pneg %p74
      %p152 = pneg %p103
      %p153 = pneg %p100
      %p154 = scmp.lt.s32.totalorder %s14, 1
      %s155 = scalar_select %p154, %s14, 1
      %s156 = smul.addr %s155, 2
      %s157 = smul.addr %s156, 4
      %s158 = scalar_lea.vmem %s3, %s157
      %p159 = scmp.lt.s32.totalorder %s14, 1
      %s160 = scalar_select %p159, %s14, 1
      %s161 = smul.addr %s160, 4
      %s162 = scalar_lea.vmem %s0, %s161
      %p163 = scmp.lt.s32.totalorder %s14, 1
      %s164 = scalar_select %p163, %s14, 1
      %s165 = smul.addr %s164, 2
      %s166 = smul.addr %s165, 4
      %s167 = scalar_lea.vmem %s3, %s166
      %v169 = vld [vmem:[%s1] sm:$0xf]
      %v170 = vld [vmem:[%s1 + $0x4] sm:$0xf]
      %v171 = vld [vmem:[%s162] sm:$0xf]
      %v172 = vld [vmem:[%s2] sm:$0xff]
      %v173 = vld [vmem:[%s2 + $0x8] sm:$0xff]
      %175 = vset.pattern.permute.xlu0 0
      %176 = vperm.xlu0 %175, %v172
      %v177 = vpop.permute.xlu0 %176
      %180 = vset.pattern.permute.xlu0 0
      %181 = vperm.xlu0 %180, %v173
      %v182 = vpop.permute.xlu0 %181
      %v186 = vunpack.c.l.b16 %v169
      %v187 = vunpack.c.l.b16 %v170
      %v188 = vpack.c.b16 %v187, %v186
      %vm189 = vcmask 64512
      %v191 = vsel %vm189, %v188, 0
      %vm193 = vcmask 1043456
      %v195 = vsel %vm193, %v171, 0
      %197 = vmatprep.subr.bf16.mxu0 0
      %198 = vmatpush1.bf16.msra.mxu0 %v195
      %199 = vmatprep.subr.bf16.mxu0 0
      %200 = vmatpush1.bf16.msra.mxu0 0
      %201 = vmatprep.subr.bf16.mxu0 0
      %202 = vmatpush1.bf16.msra.mxu0 0
      %203 = vmatprep.subr.bf16.mxu0 0
      %204 = vmatpush1.bf16.msra.mxu0 0
      %205 = vmatprep.subr.bf16.mxu0 0
      %206 = vmatpush1.bf16.msra.mxu0 0
      %207 = vmatprep.subr.bf16.mxu0 0
      %208 = vmatpush1.bf16.msra.mxu0 0
      %209 = vmatprep.subr.bf16.mxu0 0
      %210 = vmatpush1.bf16.msra.mxu0 0
      %211 = vmatprep.subr.bf16.mxu0 0
      %212 = vmatpush1.bf16.msra.mxu0 0
      %213 = vmatprep.subr.bf16.mxu0 0
      %214 = vmatpush1.bf16.msra.mxu0 0
      %215 = vmatprep.subr.bf16.mxu0 0
      %216 = vmatpush1.bf16.msra.mxu0 0
      %217 = vmatprep.subr.bf16.mxu0 0
      %218 = vmatpush1.bf16.msra.mxu0 0
      %219 = vmatprep.subr.bf16.mxu0 0
      %220 = vmatpush1.bf16.msra.mxu0 0
      %221 = vmatprep.subr.bf16.mxu0 0
      %222 = vmatpush1.bf16.msra.mxu0 0
      %223 = vmatprep.subr.bf16.mxu0 0
      %224 = vmatpush1.bf16.msra.mxu0 0
      %225 = vmatprep.subr.bf16.mxu0 0
      %226 = vmatpush1.bf16.msra.mxu0 0
      %227 = vmatprep.subr.bf16.mxu0 0
      %228 = vmatpush1.bf16.msra.mxu0 0
      %229 = vmatprep.mubr.bf16.mxu0 0
      %230 = vmatmul.mubr.bf16.gmra.mrb[0].mxu0 %v191
      %v231 = vpop.f32.mrb[0].mxu0
      %v232 = vadd.f32 %v177, %v231
      %v233 = vpop.f32.mrb[0].mxu0
      %v234 = vpop.f32.mrb[0].mxu0
      %v235 = vadd.f32 %v182, %v234
      %v236 = vpop.f32.mrb[0].mxu0
      %237 = vdwg.mxu0
      %v238 = vpack.c.bf16 %v235, %v232
      %v240 = vunpack.c.l.b16 %v238
      %v241 = vunpack.c.h.b16 %v238
      %v242 = vpack.c.b16 %v240, %v240
      %v243 = vpack.c.b16 %v241, %v241
      %vm246 = vcmask 519168
      %247 = vst.msk [vmem:[%s167] sm:$0xf] %vm246, %v242
      %248 = vst.msk [vmem:[%s167 + $0x4] sm:$0xf] %vm246, %v243
      %p249 = scmp.lt.s32.totalorder %s14, 1
      %s250 = scalar_select %p249, %s14, 1
      %s251 = smul.addr %s250, 2
      %s252 = smul.addr %s251, 4
      %s253 = scalar_lea.vmem %s3, %s252
      // Predicated region
      $region33: #{up_forward.2} parent=31 // pred_check
        %p254 = pneg %p100
      $region34: #{up_forward.2} parent=31 // pred_check_branch
        %256 = sbr.rel (%p254) target = $region36
      $region35: #{up_forward.2} parent=31 // pred_region
        _
      $region36: #{up_forward.2} parent=31 // pred_fallthru
        _
    $region32: #{up_forward.2} parent=5 // pred_fallthru
      _
    %p257 = scmp.le.s32.totalorder 2, %s9
    // Predicated region
    $region37: #{up_forward.2} parent=5 // pred_check
      %p258 = pneg %p257
    $region38: #{up_forward.2} parent=5 // pred_check_branch
      %260 = sbr.rel (%p258) target = $region40
    $region39: #{up_forward.2} parent=5 // pred_region
      %s261 = ssub.s32 %s9, 2
      // Predicated region
      $region41: #{up_forward.2} parent=39 // pred_check
        %p262 = pneg %p106
      $region42: #{up_forward.2} parent=39 // pred_check_branch
        %264 = sbr.rel (%p262) target = $region44
      $region43: #{up_forward.2} parent=39 // pred_region
        %p265 = scmp.lt.s32.totalorder %s15, 1
        %s266 = scalar_select %p265, %s15, 1
        %s267 = smul.addr %s266, 2
        %s268 = smul.addr %s267, 4
        %s269 = scalar_lea.vmem %s3, %s268
      $region44: #{up_forward.2} parent=39 // pred_fallthru
        _
    $region40: #{up_forward.2} parent=5 // pred_fallthru
      _
  $region6: #{up_forward.2} parent=0 // loop_footer
    %s13 = sadd.s32 1, %s9
  $region7: #{up_forward.2} parent=0 // loop_footer_branch
    %8 = sbr.rel target = $region3
  $region8: #{up_forward.2} parent=0 // loop_exit
    _

// kernel: up_forward.3
$region0: #{up_forward.3}
  #allocation0 [shape = 'u32[]', space=smem, size = 0x4, offset = 0x4, fixed_abs, tag = 'smem constant byte address 0x4 - core index']
  #allocation1 [shape = 'u32[144,128]{1,0:T(1,128)}', space=vmem, size = 0x12000, scoped, tag = 'internal scratch']
  #allocation2 [shape = 'bf16[4,362]{1,0:T(4,128)(2,1)}', space=vmem, size = 0xc00, scoped, tag = 'scratch operand']
  %s0 = inlined_call_operand.vmem [shape: bf16[2,4,362], index: 0, kind: input, shape index: {}]
  %s1 = inlined_call_operand.vmem [shape: bf16[2,4,362], index: 1, kind: input, shape index: {}]
  %s2 = inlined_call_operand.vmem [shape: bf16[9,4,4], index: 2, kind: input, shape index: {}]
  %s3 = inlined_call_operand.vmem [shape: bf16[9,4,4], index: 3, kind: input, shape index: {}]
  %s4 = inlined_call_operand.vmem [shape: f32[4,1], index: 4, kind: input, shape index: {}]
  %s5 = inlined_call_operand.vmem [shape: bf16[9,4,4], index: 5, kind: input, shape index: {}]
  %s6 = inlined_call_operand.vmem [shape: f32[4,1], index: 6, kind: input, shape index: {}]
  %s7 = inlined_call_operand.vmem [shape: f32[1,324], index: 7, kind: input, shape index: {}]
  %s8 = inlined_call_operand.vmem [shape: f32[2,4,324], index: 8, kind: output, shape index: {}]
  %s9 = sld [smem:[#allocation0]]
  $region65: #{up_forward.3} parent=0
    _
  %s11 = ssub.s32 1, %s9
  %s12 = scalar_select 0, %s11, %s9
  loop: start=0, step=1, limit=4
  $region2: #{up_forward.3} parent=0 // loop_pre_header
    _
  $region3: #{up_forward.3} parent=0 // loop_header
    %s14 = sphi 0, %s18
    %p15 = scmp.ge.s32.totalorder %s14, 4
    %s24 = sphi 0, %s26
    %s27 = sphi 0, %s24
    %s28 = sphi 0, %s27
    %s44 = sphi 0, %s28
    %s50 = sphi 0, %s52
    %s53 = sphi 0, %s50
    %s54 = sphi 0, %s53
    %s70 = sphi 0, %s54
    %s74 = sphi 0, %s74
    %s76 = sphi 0, %s74
    %s77 = sphi 0, %s76
    %s91 = sphi 0, %s77
    %s95 = sphi 0, %s95
    %s97 = sphi 0, %s95
    %s98 = sphi 0, %s97
    %s112 = sphi 0, %s98
    %s116 = sphi 0, %s116
    %s118 = sphi 0, %s116
    %s119 = sphi 0, %s118
    %s133 = sphi 0, %s119
    %s137 = sphi 0, %s137
    %s139 = sphi 0, %s137
    %s140 = sphi 0, %s139
    %s154 = sphi 0, %s140
    %s158 = sphi 0, %s158
    %s160 = sphi 0, %s158
    %s161 = sphi 0, %s160
    %s175 = sphi 0, %s161
    %s179 = sphi 0, %s179
    %s181 = sphi 0, %s179
    %s182 = sphi 0, %s181
    %s196 = sphi 0, %s182
    %s202 = sphi 0, %s204
    %s205 = sphi 0, %s202
    %s206 = sphi 0, %s205
    %s222 = sphi 0, %s206
  $region4: #{up_forward.3} parent=0 // loop_header_branch
    %17 = sbr.rel (%p15) target = $region8
  $region5: #{up_forward.3} parent=0 // loop_body
    %s19 = ssub.s32 %s14, 1
    %s20 = ssub.s32 %s14, 2
    %s21 = sadd.s32 %s14, 1
    %s22 = ssub.s32 %s14, %s21
    %p23 = scmp.eq.s32.totalorder %s22, 0
    %s25 = sadd.s32 %s24, 1
    %s26 = scalar_select %p23, %s24, %s25
    %p29 = pneg %p23
    %p30 = scmp.eq.s32.totalorder %s14, 1
    %p31 = por %p29, %p30
    %p32 = scmp.ne.s32.totalorder %s24, %s27
    %p33 = scmp.eq.s32.totalorder %s14, 0
    %p34 = por %p32, %p33
    %p35 = scmp.ne.s32.totalorder %s24, %s27
    %p36 = scmp.eq.s32.totalorder %s19, 1
    %p37 = por %p35, %p36
    %p38 = scmp.ne.s32.totalorder %s27, %s28
    %p39 = scmp.eq.s32.totalorder %s19, 0
    %p40 = por %p38, %p39
    %p41 = scmp.ne.s32.totalorder %s27, %s28
    %p42 = scmp.eq.s32.totalorder %s20, 1
    %p43 = por %p41, %p42
    %p45 = scmp.ne.s32.totalorder %s28, %s44
    %p46 = scmp.eq.s32.totalorder %s20, 0
    %p47 = por %p45, %p46
    %s48 = ssub.s32 %s14, %s21
    %p49 = scmp.eq.s32.totalorder %s48, 0
    %s51 = sadd.s32 %s50, 1
    %s52 = scalar_select %p49, %s50, %s51
    %p55 = pneg %p49
    %p56 = scmp.eq.s32.totalorder %s14, 1
    %p57 = por %p55, %p56
    %p58 = scmp.ne.s32.totalorder %s50, %s53
    %p59 = scmp.eq.s32.totalorder %s14, 0
    %p60 = por %p58, %p59
    %p61 = scmp.ne.s32.totalorder %s50, %s53
    %p62 = scmp.eq.s32.totalorder %s19, 1
    %p63 = por %p61, %p62
    %p64 = scmp.ne.s32.totalorder %s53, %s54
    %p65 = scmp.eq.s32.totalorder %s19, 0
    %p66 = por %p64, %p65
    %p67 = scmp.ne.s32.totalorder %s53, %s54
    %p68 = scmp.eq.s32.totalorder %s20, 1
    %p69 = por %p67, %p68
    %p71 = scmp.ne.s32.totalorder %s54, %s70
    %p72 = scmp.eq.s32.totalorder %s20, 0
    %p73 = por %p71, %p72
    %s75 = sadd.s32 %s74, 1
    %p78 = scmp.eq.s32.totalorder %s14, 1
    %p79 = scmp.ne.s32.totalorder %s74, %s76
    %p80 = scmp.eq.s32.totalorder %s14, 0
    %p81 = por %p79, %p80
    %p82 = scmp.ne.s32.totalorder %s74, %s76
    %p83 = scmp.eq.s32.totalorder %s19, 1
    %p84 = por %p82, %p83
    %p85 = scmp.ne.s32.totalorder %s76, %s77
    %p86 = scmp.eq.s32.totalorder %s19, 0
    %p87 = por %p85, %p86
    %p88 = scmp.ne.s32.totalorder %s76, %s77
    %p89 = scmp.eq.s32.totalorder %s20, 1
    %p90 = por %p88, %p89
    %p92 = scmp.ne.s32.totalorder %s77, %s91
    %p93 = scmp.eq.s32.totalorder %s20, 0
    %p94 = por %p92, %p93
    %s96 = sadd.s32 %s95, 1
    %p99 = scmp.eq.s32.totalorder %s14, 1
    %p100 = scmp.ne.s32.totalorder %s95, %s97
    %p101 = scmp.eq.s32.totalorder %s14, 0
    %p102 = por %p100, %p101
    %p103 = scmp.ne.s32.totalorder %s95, %s97
    %p104 = scmp.eq.s32.totalorder %s19, 1
    %p105 = por %p103, %p104
    %p106 = scmp.ne.s32.totalorder %s97, %s98
    %p107 = scmp.eq.s32.totalorder %s19, 0
    %p108 = por %p106, %p107
    %p109 = scmp.ne.s32.totalorder %s97, %s98
    %p110 = scmp.eq.s32.totalorder %s20, 1
    %p111 = por %p109, %p110
    %p113 = scmp.ne.s32.totalorder %s98, %s112
    %p114 = scmp.eq.s32.totalorder %s20, 0
    %p115 = por %p113, %p114
    %s117 = sadd.s32 %s116, 1
    %p120 = scmp.eq.s32.totalorder %s14, 1
    %p121 = scmp.ne.s32.totalorder %s116, %s118
    %p122 = scmp.eq.s32.totalorder %s14, 0
    %p123 = por %p121, %p122
    %p124 = scmp.ne.s32.totalorder %s116, %s118
    %p125 = scmp.eq.s32.totalorder %s19, 1
    %p126 = por %p124, %p125
    %p127 = scmp.ne.s32.totalorder %s118, %s119
    %p128 = scmp.eq.s32.totalorder %s19, 0
    %p129 = por %p127, %p128
    %p130 = scmp.ne.s32.totalorder %s118, %s119
    %p131 = scmp.eq.s32.totalorder %s20, 1
    %p132 = por %p130, %p131
    %p134 = scmp.ne.s32.totalorder %s119, %s133
    %p135 = scmp.eq.s32.totalorder %s20, 0
    %p136 = por %p134, %p135
    %s138 = sadd.s32 %s137, 1
    %p141 = scmp.eq.s32.totalorder %s14, 1
    %p142 = scmp.ne.s32.totalorder %s137, %s139
    %p143 = scmp.eq.s32.totalorder %s14, 0
    %p144 = por %p142, %p143
    %p145 = scmp.ne.s32.totalorder %s137, %s139
    %p146 = scmp.eq.s32.totalorder %s19, 1
    %p147 = por %p145, %p146
    %p148 = scmp.ne.s32.totalorder %s139, %s140
    %p149 = scmp.eq.s32.totalorder %s19, 0
    %p150 = por %p148, %p149
    %p151 = scmp.ne.s32.totalorder %s139, %s140
    %p152 = scmp.eq.s32.totalorder %s20, 1
    %p153 = por %p151, %p152
    %p155 = scmp.ne.s32.totalorder %s140, %s154
    %p156 = scmp.eq.s32.totalorder %s20, 0
    %p157 = por %p155, %p156
    %s159 = sadd.s32 %s158, 1
    %p162 = scmp.eq.s32.totalorder %s14, 1
    %p163 = scmp.ne.s32.totalorder %s158, %s160
    %p164 = scmp.eq.s32.totalorder %s14, 0
    %p165 = por %p163, %p164
    %p166 = scmp.ne.s32.totalorder %s158, %s160
    %p167 = scmp.eq.s32.totalorder %s19, 1
    %p168 = por %p166, %p167
    %p169 = scmp.ne.s32.totalorder %s160, %s161
    %p170 = scmp.eq.s32.totalorder %s19, 0
    %p171 = por %p169, %p170
    %p172 = scmp.ne.s32.totalorder %s160, %s161
    %p173 = scmp.eq.s32.totalorder %s20, 1
    %p174 = por %p172, %p173
    %p176 = scmp.ne.s32.totalorder %s161, %s175
    %p177 = scmp.eq.s32.totalorder %s20, 0
    %p178 = por %p176, %p177
    %s180 = sadd.s32 %s179, 1
    %p183 = scmp.eq.s32.totalorder %s14, 1
    %p184 = scmp.ne.s32.totalorder %s179, %s181
    %p185 = scmp.eq.s32.totalorder %s14, 0
    %p186 = por %p184, %p185
    %p187 = scmp.ne.s32.totalorder %s179, %s181
    %p188 = scmp.eq.s32.totalorder %s19, 1
    %p189 = por %p187, %p188
    %p190 = scmp.ne.s32.totalorder %s181, %s182
    %p191 = scmp.eq.s32.totalorder %s19, 0
    %p192 = por %p190, %p191
    %p193 = scmp.ne.s32.totalorder %s181, %s182
    %p194 = scmp.eq.s32.totalorder %s20, 1
    %p195 = por %p193, %p194
    %p197 = scmp.ne.s32.totalorder %s182, %s196
    %p198 = scmp.eq.s32.totalorder %s20, 0
    %p199 = por %p197, %p198
    %s200 = ssub.s32 %s14, %s21
    %p201 = scmp.eq.s32.totalorder %s200, 0
    %s203 = sadd.s32 %s202, 1
    %s204 = scalar_select %p201, %s202, %s203
    %p207 = pneg %p201
    %p208 = scmp.eq.s32.totalorder %s14, 1
    %p209 = por %p207, %p208
    %p210 = scmp.ne.s32.totalorder %s202, %s205
    %p211 = scmp.eq.s32.totalorder %s14, 0
    %p212 = por %p210, %p211
    %p213 = scmp.ne.s32.totalorder %s202, %s205
    %p214 = scmp.eq.s32.totalorder %s19, 1
    %p215 = por %p213, %p214
    %p216 = scmp.ne.s32.totalorder %s205, %s206
    %p217 = scmp.eq.s32.totalorder %s19, 0
    %p218 = por %p216, %p217
    %p219 = scmp.ne.s32.totalorder %s205, %s206
    %p220 = scmp.eq.s32.totalorder %s20, 1
    %p221 = por %p219, %p220
    %p223 = scmp.ne.s32.totalorder %s206, %s222
    %p224 = scmp.eq.s32.totalorder %s20, 0
    %p225 = por %p223, %p224
    %p226 = scmp.le.s32.totalorder 1, %s14
    %p227 = scmp.lt.s32.totalorder %s14, 3
    %p228 = pnand %p226, %p227
    %p229 = pneg %p228
    // Predicated region
    $region9: #{up_forward.3} parent=5 // pred_check
      _
    $region10: #{up_forward.3} parent=5 // pred_check_branch
      %231 = sbr.rel (%p228) target = $region12
    $region11: #{up_forward.3} parent=5 // pred_region
      %s232 = ssub.s32 %s14, 1
      // Predicated region
      $region13: #{up_forward.3} parent=11 // pred_check
        %p233 = pneg %p87
      $region14: #{up_forward.3} parent=11 // pred_check_branch
        %235 = sbr.rel (%p233) target = $region16
      $region15: #{up_forward.3} parent=11 // pred_region
        _
      $region16: #{up_forward.3} parent=11 // pred_fallthru
        _
      // Predicated region
      $region17: #{up_forward.3} parent=11 // pred_check
        %p236 = pneg %p108
      $region18: #{up_forward.3} parent=11 // pred_check_branch
        %238 = sbr.rel (%p236) target = $region20
      $region19: #{up_forward.3} parent=11 // pred_region
        _
      $region20: #{up_forward.3} parent=11 // pred_fallthru
        _
      // Predicated region
      $region21: #{up_forward.3} parent=11 // pred_check
        %p239 = pneg %p129
      $region22: #{up_forward.3} parent=11 // pred_check_branch
        %241 = sbr.rel (%p239) target = $region24
      $region23: #{up_forward.3} parent=11 // pred_region
        _
      $region24: #{up_forward.3} parent=11 // pred_fallthru
        _
      // Predicated region
      $region25: #{up_forward.3} parent=11 // pred_check
        %p242 = pneg %p150
      $region26: #{up_forward.3} parent=11 // pred_check_branch
        %244 = sbr.rel (%p242) target = $region28
      $region27: #{up_forward.3} parent=11 // pred_region
        _
      $region28: #{up_forward.3} parent=11 // pred_fallthru
        _
      // Predicated region
      $region29: #{up_forward.3} parent=11 // pred_check
        %p245 = pneg %p171
      $region30: #{up_forward.3} parent=11 // pred_check_branch
        %247 = sbr.rel (%p245) target = $region32
      $region31: #{up_forward.3} parent=11 // pred_region
        _
      $region32: #{up_forward.3} parent=11 // pred_fallthru
        _
      // Predicated region
      $region33: #{up_forward.3} parent=11 // pred_check
        %p248 = pneg %p192
      $region34: #{up_forward.3} parent=11 // pred_check_branch
        %250 = sbr.rel (%p248) target = $region36
      $region35: #{up_forward.3} parent=11 // pred_region
        _
      $region36: #{up_forward.3} parent=11 // pred_fallthru
        _
    $region12: #{up_forward.3} parent=5 // pred_fallthru
      _
    %p251 = scmp.lt.s32.totalorder %s14, 2
    // Predicated region
    $region37: #{up_forward.3} parent=5 // pred_check
      %p252 = pneg %p251
    $region38: #{up_forward.3} parent=5 // pred_check_branch
      %254 = sbr.rel (%p252) target = $region40
    $region39: #{up_forward.3} parent=5 // pred_region
      // Predicated region
      $region41: #{up_forward.3} parent=39 // pred_check
        %p255 = pneg %p34
      $region42: #{up_forward.3} parent=39 // pred_check_branch
        %257 = sbr.rel (%p255) target = $region44
      $region43: #{up_forward.3} parent=39 // pred_region
        %p258 = scmp.lt.s32.totalorder %s14, 1
        %s259 = scalar_select %p258, %s14, 1
        %s260 = smul.addr %s259, 3
        %s261 = smul.addr %s260, 2
        %s262 = scalar_lea.vmem %s0, %s261
      $region44: #{up_forward.3} parent=39 // pred_fallthru
        _
      // Predicated region
      $region45: #{up_forward.3} parent=39 // pred_check
        %p263 = pneg %p60
      $region46: #{up_forward.3} parent=39 // pred_check_branch
        %265 = sbr.rel (%p263) target = $region48
      $region47: #{up_forward.3} parent=39 // pred_region
        %p266 = scmp.lt.s32.totalorder %s14, 1
        %s267 = scalar_select %p266, %s14, 1
        %s268 = smul.addr %s267, 3
        %s269 = smul.addr %s268, 2
        %s270 = scalar_lea.vmem %s1, %s269
      $region48: #{up_forward.3} parent=39 // pred_fallthru
        _
    $region40: #{up_forward.3} parent=5 // pred_fallthru
      _
    %p271 = scmp.le.s32.totalorder 1, %s14
    %p272 = scmp.lt.s32.totalorder %s14, 3
    %p273 = pnand %p271, %p272
    %p274 = pneg %p273
    // Predicated region
    $region49: #{up_forward.3} parent=5 // pred_check
      _
    $region50: #{up_forward.3} parent=5 // pred_check_branch
      %276 = sbr.rel (%p273) target = $region52
    $region51: #{up_forward.3} parent=5 // pred_region
      %s277 = ssub.s32 %s14, 1
      %p278 = scmp.lt.s32.totalorder %s19, 1
      %s279 = scalar_select %p278, %s19, 1
      %s280 = smul.addr %s279, 3
      %s281 = smul.addr %s280, 2
      %s282 = scalar_lea.vmem %s0, %s281
      %p283 = pneg %p40
      %p284 = pneg %p37
      %p285 = scmp.lt.s32.totalorder %s19, 1
      %s286 = scalar_select %p285, %s19, 1
      %s287 = smul.addr %s286, 3
      %s288 = smul.addr %s287, 2
      %s289 = scalar_lea.vmem %s1, %s288
      %p290 = pneg %p66
      %p291 = pneg %p63
      %p292 = pneg %p87
      %p293 = pneg %p84
      %p294 = pneg %p108
      %p295 = pneg %p105
      %p296 = pneg %p129
      %p297 = pneg %p126
      %p298 = pneg %p150
      %p299 = pneg %p147
      %p300 = pneg %p171
      %p301 = pneg %p168
      %p302 = pneg %p192
      %p303 = pneg %p189
      %p304 = pneg %p218
      %p305 = pneg %p215
      %p306 = scmp.lt.s32.totalorder %s19, 1
      %s307 = scalar_select %p306, %s19, 1
      %s308 = smul.addr %s307, 3
      %s309 = smul.addr %s308, 4
      %s310 = scalar_lea.vmem %s8, %s309
      %p311 = scmp.lt.s32.totalorder %s19, 1
      %s312 = scalar_select %p311, %s19, 1
      %s313 = smul.addr %s312, 3
      %s314 = smul.addr %s313, 2
      %s315 = scalar_lea.vmem %s0, %s314
      %p316 = scmp.lt.s32.totalorder %s19, 1
      %s317 = scalar_select %p316, %s19, 1
      %s318 = smul.addr %s317, 3
      %s319 = smul.addr %s318, 2
      %s320 = scalar_lea.vmem %s1, %s319
      %p321 = scmp.lt.s32.totalorder %s19, 1
      %s322 = scalar_select %p321, %s19, 1
      %s323 = smul.addr %s322, 3
      %s324 = smul.addr %s323, 4
      %s325 = scalar_lea.vmem %s8, %s324
      %v327 = vld [vmem:[%s2] sm:$0x3]
      %v328 = vld [vmem:[%s315] sm:$0x3f]
      %v329 = vld [vmem:[%s3] sm:$0x3]
      %v330 = vld [vmem:[%s320] sm:$0x3f]
      %v332 = vcombine.high %v330, %v330
      %v334 = vunpack.c.l.s4 1983009808
      %v335 = vunpack.c.0.s8 %v334
      %v336 = vlaneseq
      %v337 = vshrl.u32 %v336, 7
      %v338 = vsub.s32 %v335, %v337
      %v339 = vrot.slane %v330, %v338
      %v341 = vunpack.c.l.s4 1983009808
      %v342 = vunpack.c.0.s8 %v341
      %v343 = vlaneseq
      %v344 = vshrl.u32 %v343, 7
      %v345 = vsub.s32 %v342, %v344
      %v346 = vrot.slane %v332, %v345
      %v347 = vcombine.high %v339, %v339
      %vm348 = vcmask 31744
      %v350 = vsel %vm348, %v329, 0
      %vm352 = vcmask 1041408
      %v354 = vsel %vm352, %v339, 0
      %v357 = vsel %vm352, %v347, 0
      %v360 = vsel %vm352, %v346, 0
      %362 = vmatprep.subr.bf16.mxu0 %v357
      %363 = vmatpush1.bf16.msra.mxu0 %v354
      %364 = vmatprep.subr.bf16.mxu0 0
      %365 = vmatpush1.bf16.msra.mxu0 0
      %366 = vmatprep.subr.bf16.mxu0 0
      %367 = vmatpush1.bf16.msra.mxu0 0
      %368 = vmatprep.subr.bf16.mxu0 0
      %369 = vmatpush1.bf16.msra.mxu0 0
      %370 = vmatprep.subr.bf16.mxu0 0
      %371 = vmatpush1.bf16.msra.mxu0 0
      %372 = vmatprep.subr.bf16.mxu0 0
      %373 = vmatpush1.bf16.msra.mxu0 0
      %374 = vmatprep.subr.bf16.mxu0 0
      %375 = vmatpush1.bf16.msra.mxu0 0
      %376 = vmatprep.subr.bf16.mxu0 0
      %377 = vmatpush1.bf16.msra.mxu0 0
      %378 = vmatprep.subr.bf16.mxu0 0
      %379 = vmatpush1.bf16.msra.mxu0 0
      %380 = vmatprep.subr.bf16.mxu0 0
      %381 = vmatpush1.bf16.msra.mxu0 0
      %382 = vmatprep.subr.bf16.mxu0 0
      %383 = vmatpush1.bf16.msra.mxu0 0
      %384 = vmatprep.subr.bf16.mxu0 0
      %385 = vmatpush1.bf16.msra.mxu0 0
      %386 = vmatprep.subr.bf16.mxu0 0
      %387 = vmatpush1.bf16.msra.mxu0 0
      %388 = vmatprep.subr.bf16.mxu0 0
      %389 = vmatpush1.bf16.msra.mxu0 0
      %390 = vmatprep.subr.bf16.mxu0 0
      %391 = vmatpush1.bf16.msra.mxu0 0
      %392 = vmatprep.subr.bf16.mxu0 0
      %393 = vmatpush1.bf16.msra.mxu0 0
      %394 = vmatprep.mubr.bf16.mxu0 0
      %395 = vmatmul.mubr.bf16.gmra.mrb[0].mxu0 %v350
      %v396 = vpop.f32.mrb[0].mxu0
      %v397 = vadd.f32 0.0, %v396
      %v398 = vpop.f32.mrb[0].mxu0
      %v399 = vadd.f32 0.0, %v398
      %v400 = vpop.f32.mrb[0].mxu0
      %v401 = vpop.f32.mrb[0].mxu0
      %402 = vdwg.mxu0
      %403 = vmatprep.subr.bf16.mxu0 0
      %404 = vmatpush1.bf16.msra.mxu0 %v360
      %405 = vmatprep.subr.bf16.mxu0 0
      %406 = vmatpush1.bf16.msra.mxu0 0
      %407 = vmatprep.subr.bf16.mxu0 0
      %408 = vmatpush1.bf16.msra.mxu0 0
      %409 = vmatprep.subr.bf16.mxu0 0
      %410 = vmatpush1.bf16.msra.mxu0 0
      %411 = vmatprep.subr.bf16.mxu0 0
      %412 = vmatpush1.bf16.msra.mxu0 0
      %413 = vmatprep.subr.bf16.mxu0 0
      %414 = vmatpush1.bf16.msra.mxu0 0
      %415 = vmatprep.subr.bf16.mxu0 0
      %416 = vmatpush1.bf16.msra.mxu0 0
      %417 = vmatprep.subr.bf16.mxu0 0
      %418 = vmatpush1.bf16.msra.mxu0 0
      %419 = vmatprep.subr.bf16.mxu0 0
      %420 = vmatpush1.bf16.msra.mxu0 0
      %421 = vmatprep.subr.bf16.mxu0 0
      %422 = vmatpush1.bf16.msra.mxu0 0
      %423 = vmatprep.subr.bf16.mxu0 0
      %424 = vmatpush1.bf16.msra.mxu0 0
      %425 = vmatprep.subr.bf16.mxu0 0
      %426 = vmatpush1.bf16.msra.mxu0 0
      %427 = vmatprep.subr.bf16.mxu0 0
      %428 = vmatpush1.bf16.msra.mxu0 0
      %429 = vmatprep.subr.bf16.mxu0 0
      %430 = vmatpush1.bf16.msra.mxu0 0
      %431 = vmatprep.subr.bf16.mxu0 0
      %432 = vmatpush1.bf16.msra.mxu0 0
      %433 = vmatprep.subr.bf16.mxu0 0
      %434 = vmatpush1.bf16.msra.mxu0 0
      %435 = vmatprep.mubr.bf16.mxu0 0
      %436 = vmatmul.mubr.bf16.gmra.mrb[0].mxu0 %v350
      %v437 = vpop.f32.mrb[0].mxu0
      %v438 = vadd.f32 0.0, %v437
      %v439 = vpop.f32.mrb[0].mxu0
      %v440 = vpop.f32.mrb[0].mxu0
      %v441 = vpop.f32.mrb[0].mxu0
      %442 = vdwg.mxu0
      %v444 = vcombine.high %v328, %v328
      %v446 = vunpack.c.l.s4 1983009808
      %v447 = vunpack.c.0.s8 %v446
      %v448 = vlaneseq
      %v449 = vshrl.u32 %v448, 7
      %v450 = vsub.s32 %v447, %v449
      %v451 = vrot.slane %v328, %v450
      %v453 = vunpack.c.l.s4 1983009808
      %v454 = vunpack.c.0.s8 %v453
      %v455 = vlaneseq
      %v456 = vshrl.u32 %v455, 7
      %v457 = vsub.s32 %v454, %v456
      %v458 = vrot.slane %v444, %v457
      %v459 = vcombine.high %v451, %v451
      %v461 = vsel %vm348, %v327, 0
      %v464 = vsel %vm352, %v451, 0
      %v467 = vsel %vm352, %v459, 0
      %v470 = vsel %vm352, %v458, 0
      %472 = vmatprep.subr.bf16.mxu0 %v467
      %473 = vmatpush1.bf16.msra.mxu0 %v464
      %474 = vmatprep.subr.bf16.mxu0 0
      %475 = vmatpush1.bf16.msra.mxu0 0
      %476 = vmatprep.subr.bf16.mxu0 0
      %477 = vmatpush1.bf16.msra.mxu0 0
      %478 = vmatprep.subr.bf16.mxu0 0
      %479 = vmatpush1.bf16.msra.mxu0 0
      %480 = vmatprep.subr.bf16.mxu0 0
      %481 = vmatpush1.bf16.msra.mxu0 0
      %482 = vmatprep.subr.bf16.mxu0 0
      %483 = vmatpush1.bf16.msra.mxu0 0
      %484 = vmatprep.subr.bf16.mxu0 0
      %485 = vmatpush1.bf16.msra.mxu0 0
      %486 = vmatprep.subr.bf16.mxu0 0
      %487 = vmatpush1.bf16.msra.mxu0 0
      %488 = vmatprep.subr.bf16.mxu0 0
      %489 = vmatpush1.bf16.msra.mxu0 0
      %490 = vmatprep.subr.bf16.mxu0 0
      %491 = vmatpush1.bf16.msra.mxu0 0
      %492 = vmatprep.subr.bf16.mxu0 0
      %493 = vmatpush1.bf16.msra.mxu0 0
      %494 = vmatprep.subr.bf16.mxu0 0
      %495 = vmatpush1.bf16.msra.mxu0 0
      %496 = vmatprep.subr.bf16.mxu0 0
      %497 = vmatpush1.bf16.msra.mxu0 0
      %498 = vmatprep.subr.bf16.mxu0 0
      %499 = vmatpush1.bf16.msra.mxu0 0
      %500 = vmatprep.subr.bf16.mxu0 0
      %501 = vmatpush1.bf16.msra.mxu0 0
      %502 = vmatprep.subr.bf16.mxu0 0
      %503 = vmatpush1.bf16.msra.mxu0 0
      %504 = vmatprep.mubr.bf16.mxu0 0
      %505 = vmatmul.mubr.bf16.gmra.mrb[0].mxu0 %v461
      %v506 = vpop.f32.mrb[0].mxu0
      %v507 = vadd.f32 %v397, %v506
      %v508 = vpop.f32.mrb[0].mxu0
      %v509 = vadd.f32 %v399, %v508
      %v510 = vpop.f32.mrb[0].mxu0
      %v511 = vpop.f32.mrb[0].mxu0
      %512 = vdwg.mxu0
      %513 = vmatprep.subr.bf16.mxu0 0
      %514 = vmatpush1.bf16.msra.mxu0 %v470
      %515 = vmatprep.subr.bf16.mxu0 0
      %516 = vmatpush1.bf16.msra.mxu0 0
      %517 = vmatprep.subr.bf16.mxu0 0
      %518 = vmatpush1.bf16.msra.mxu0 0
      %519 = vmatprep.subr.bf16.mxu0 0
      %520 = vmatpush1.bf16.msra.mxu0 0
      %521 = vmatprep.subr.bf16.mxu0 0
      %522 = vmatpush1.bf16.msra.mxu0 0
      %523 = vmatprep.subr.bf16.mxu0 0
      %524 = vmatpush1.bf16.msra.mxu0 0
      %525 = vmatprep.subr.bf16.mxu0 0
      %526 = vmatpush1.bf16.msra.mxu0 0
      %527 = vmatprep.subr.bf16.mxu0 0
      %528 = vmatpush1.bf16.msra.mxu0 0
      %529 = vmatprep.subr.bf16.mxu0 0
      %530 = vmatpush1.bf16.msra.mxu0 0
      %531 = vmatprep.subr.bf16.mxu0 0
      %532 = vmatpush1.bf16.msra.mxu0 0
      %533 = vmatprep.subr.bf16.mxu0 0
      %534 = vmatpush1.bf16.msra.mxu0 0
      %535 = vmatprep.subr.bf16.mxu0 0
      %536 = vmatpush1.bf16.msra.mxu0 0
      %537 = vmatprep.subr.bf16.mxu0 0
      %538 = vmatpush1.bf16.msra.mxu0 0
      %539 = vmatprep.subr.bf16.mxu0 0
      %540 = vmatpush1.bf16.msra.mxu0 0
      %541 = vmatprep.subr.bf16.mxu0 0
      %542 = vmatpush1.bf16.msra.mxu0 0
      %543 = vmatprep.subr.bf16.mxu0 0
      %544 = vmatpush1.bf16.msra.mxu0 0
      %545 = vmatprep.mubr.bf16.mxu0 0
      %546 = vmatmul.mubr.bf16.gmra.mrb[0].mxu0 %v461
      %v547 = vpop.f32.mrb[0].mxu0
      %v548 = vadd.f32 %v438, %v547
      %v549 = vpop.f32.mrb[0].mxu0
      %v550 = vpop.f32.mrb[0].mxu0
      %v551 = vpop.f32.mrb[0].mxu0
      %552 = vdwg.mxu0
      %s553 = scalar_lea.vmem %s2, 2
      %v554 = vld [vmem:[%s553] sm:$0x3]
      %v555 = vld [vmem:[%s315] sm:$0x3f]
      %v557 = vcombine.high %v555, %v555
      %v559 = vunpack.c.l.s4 1983009808
      %v560 = vunpack.c.0.s8 %v559
      %v561 = vlaneseq
      %v562 = vshrl.u32 %v561, 7
      %v563 = vsub.s32 %v560, %v562
      %v564 = vrot.slane %v555, %v563
      %v566 = vunpack.c.l.s4 1983009808
      %v567 = vunpack.c.0.s8 %v566
      %v568 = vlaneseq
      %v569 = vshrl.u32 %v568, 7
      %v570 = vsub.s32 %v567, %v569
      %v571 = vrot.slane %v557, %v570
      %v572 = vcombine.high %v564, %v564
      %573 = vrot.lane.b32.xlu0 %v564, 127
      %v574 = vpop.permute.xlu0 %573
      %575 = vrot.lane.b32.xlu0 %v572, 127
      %v576 = vpop.permute.xlu0 %575
      %577 = vrot.lane.b32.xlu0 %v571, 127
      %v578 = vpop.permute.xlu0 %577
      %vm579 = vcmask 1039360
      %v580 = vsel %vm579, %v574, %v576
      %v581 = vsel %vm579, %v576, %v578
      %v583 = vsel %vm348, %v554, 0
      %v586 = vsel %vm352, %v580, 0
      %v589 = vsel %vm352, %v581, 0
      %v592 = vsel %vm352, %v578, 0
      %594 = vmatprep.subr.bf16.mxu0 %v589
      %595 = vmatpush1.bf16.msra.mxu0 %v586
      %596 = vmatprep.subr.bf16.mxu0 0
      %597 = vmatpush1.bf16.msra.mxu0 0
      %598 = vmatprep.subr.bf16.mxu0 0
      %599 = vmatpush1.bf16.msra.mxu0 0
      %600 = vmatprep.subr.bf16.mxu0 0
      %601 = vmatpush1.bf16.msra.mxu0 0
      %602 = vmatprep.subr.bf16.mxu0 0
      %603 = vmatpush1.bf16.msra.mxu0 0
      %604 = vmatprep.subr.bf16.mxu0 0
      %605 = vmatpush1.bf16.msra.mxu0 0
      %606 = vmatprep.subr.bf16.mxu0 0
      %607 = vmatpush1.bf16.msra.mxu0 0
      %608 = vmatprep.subr.bf16.mxu0 0
      %609 = vmatpush1.bf16.msra.mxu0 0
      %610 = vmatprep.subr.bf16.mxu0 0
      %611 = vmatpush1.bf16.msra.mxu0 0
      %612 = vmatprep.subr.bf16.mxu0 0
      %613 = vmatpush1.bf16.msra.mxu0 0
      %614 = vmatprep.subr.bf16.mxu0 0
      %615 = vmatpush1.bf16.msra.mxu0 0
      %616 = vmatprep.subr.bf16.mxu0 0
      %617 = vmatpush1.bf16.msra.mxu0 0
      %618 = vmatprep.subr.bf16.mxu0 0
      %619 = vmatpush1.bf16.msra.mxu0 0
      %620 = vmatprep.subr.bf16.mxu0 0
      %621 = vmatpush1.bf16.msra.mxu0 0
      %622 = vmatprep.subr.bf16.mxu0 0
      %623 = vmatpush1.bf16.msra.mxu0 0
      %624 = vmatprep.subr.bf16.mxu0 0
      %625 = vmatpush1.bf16.msra.mxu0 0
      %626 = vmatprep.mubr.bf16.mxu0 0
      %627 = vmatmul.mubr.bf16.gmra.mrb[0].mxu0 %v583
      %v628 = vpop.f32.mrb[0].mxu0
      %v629 = vadd.f32 0.0, %v628
      %v630 = vpop.f32.mrb[0].mxu0
      %v631 = vadd.f32 0.0, %v630
      %v632 = vpop.f32.mrb[0].mxu0
      %v633 = vpop.f32.mrb[0].mxu0
      %634 = vdwg.mxu0
      %635 = vmatprep.subr.bf16.mxu0 0
      %636 = vmatpush1.bf16.msra.mxu0 %v592
      %637 = vmatprep.subr.bf16.mxu0 0
      %638 = vmatpush1.bf16.msra.mxu0 0
      %639 = vmatprep.subr.bf16.mxu0 0
      %640 = vmatpush1.bf16.msra.mxu0 0
      %641 = vmatprep.subr.bf16.mxu0 0
      %642 = vmatpush1.bf16.msra.mxu0 0
      %643 = vmatprep.subr.bf16.mxu0 0
      %644 = vmatpush1.bf16.msra.mxu0 0
      %645 = vmatprep.subr.bf16.mxu0 0
      %646 = vmatpush1.bf16.msra.mxu0 0
      %647 = vmatprep.subr.bf16.mxu0 0
      %648 = vmatpush1.bf16.msra.mxu0 0
      %649 = vmatprep.subr.bf16.mxu0 0
      %650 = vmatpush1.bf16.msra.mxu0 0
      %651 = vmatprep.subr.bf16.mxu0 0
      %652 = vmatpush1.bf16.msra.mxu0 0
      %653 = vmatprep.subr.bf16.mxu0 0
      %654 = vmatpush1.bf16.msra.mxu0 0
      %655 = vmatprep.subr.bf16.mxu0 0
      %656 = vmatpush1.bf16.msra.mxu0 0
      %657 = vmatprep.subr.bf16.mxu0 0
      %658 = vmatpush1.bf16.msra.mxu0 0
      %659 = vmatprep.subr.bf16.mxu0 0
      %660 = vmatpush1.bf16.msra.mxu0 0
      %661 = vmatprep.subr.bf16.mxu0 0
      %662 = vmatpush1.bf16.msra.mxu0 0
      %663 = vmatprep.subr.bf16.mxu0 0
      %664 = vmatpush1.bf16.msra.mxu0 0
      %665 = vmatprep.subr.bf16.mxu0 0
      %666 = vmatpush1.bf16.msra.mxu0 0
      %667 = vmatprep.mubr.bf16.mxu0 0
      %668 = vmatmul.mubr.bf16.gmra.mrb[0].mxu0 %v583
      %v669 = vpop.f32.mrb[0].mxu0
      %v670 = vadd.f32 0.0, %v669
      %v671 = vpop.f32.mrb[0].mxu0
      %v672 = vpop.f32.mrb[0].mxu0
      %v673 = vpop.f32.mrb[0].mxu0
      %674 = vdwg.mxu0
      %v675 = vadd.f32 %v507, %v629
      %v676 = vadd.f32 %v509, %v631
      %v677 = vadd.f32 %v548, %v670
      %s678 = scalar_lea.vmem %s3, 2
      %v679 = vld [vmem:[%s678] sm:$0x3]
      %v680 = vld [vmem:[%s320] sm:$0x3f]
      %v682 = vcombine.high %v680, %v680
      %v684 = vunpack.c.l.s4 1983009808
      %v685 = vunpack.c.0.s8 %v684
      %v686 = vlaneseq
      %v687 = vshrl.u32 %v686, 7
      %v688 = vsub.s32 %v685, %v687
      %v689 = vrot.slane %v680, %v688
      %v691 = vunpack.c.l.s4 1983009808
      %v692 = vunpack.c.0.s8 %v691
      %v693 = vlaneseq
      %v694 = vshrl.u32 %v693, 7
      %v695 = vsub.s32 %v692, %v694
      %v696 = vrot.slane %v682, %v695
      %v697 = vcombine.high %v689, %v689
      %698 = vrot.lane.b32.xlu0 %v689, 127
      %v699 = vpop.permute.xlu0 %698
      %700 = vrot.lane.b32.xlu0 %v697, 127
      %v701 = vpop.permute.xlu0 %700
      %702 = vrot.lane.b32.xlu0 %v696, 127
      %v703 = vpop.permute.xlu0 %702
      %v704 = vsel %vm579, %v699, %v701
      %v705 = vsel %vm579, %v701, %v703
      %v707 = vsel %vm348, %v679, 0
      %v710 = vsel %vm352, %v704, 0
      %v713 = vsel %vm352, %v705, 0
      %v716 = vsel %vm352, %v703, 0
      %718 = vmatprep.subr.bf16.mxu0 %v713
      %719 = vmatpush1.bf16.msra.mxu0 %v710
      %720 = vmatprep.subr.bf16.mxu0 0
      %721 = vmatpush1.bf16.msra.mxu0 0
      %722 = vmatprep.subr.bf16.mxu0 0
      %723 = vmatpush1.bf16.msra.mxu0 0
      %724 = vmatprep.subr.bf16.mxu0 0
      %725 = vmatpush1.bf16.msra.mxu0 0
      %726 = vmatprep.subr.bf16.mxu0 0
      %727 = vmatpush1.bf16.msra.mxu0 0
      %728 = vmatprep.subr.bf16.mxu0 0
      %729 = vmatpush1.bf16.msra.mxu0 0
      %730 = vmatprep.subr.bf16.mxu0 0
      %731 = vmatpush1.bf16.msra.mxu0 0
      %732 = vmatprep.subr.bf16.mxu0 0
      %733 = vmatpush1.bf16.msra.mxu0 0
      %734 = vmatprep.subr.bf16.mxu0 0
      %735 = vmatpush1.bf16.msra.mxu0 0
      %736 = vmatprep.subr.bf16.mxu0 0
      %737 = vmatpush1.bf16.msra.mxu0 0
      %738 = vmatprep.subr.bf16.mxu0 0
      %739 = vmatpush1.bf16.msra.mxu0 0
      %740 = vmatprep.subr.bf16.mxu0 0
      %741 = vmatpush1.bf16.msra.mxu0 0
      %742 = vmatprep.subr.bf16.mxu0 0
      %743 = vmatpush1.bf16.msra.mxu0 0
      %744 = vmatprep.subr.bf16.mxu0 0
      %745 = vmatpush1.bf16.msra.mxu0 0
      %746 = vmatprep.subr.bf16.mxu0 0
      %747 = vmatpush1.bf16.msra.mxu0 0
      %748 = vmatprep.subr.bf16.mxu0 0
      %749 = vmatpush1.bf16.msra.mxu0 0
      %750 = vmatprep.mubr.bf16.mxu0 0
      %751 = vmatmul.mubr.bf16.gmra.mrb[0].mxu0 %v707
      %v752 = vpop.f32.mrb[0].mxu0
      %v753 = vadd.f32 0.0, %v752
      %v754 = vpop.f32.mrb[0].mxu0
      %v755 = vadd.f32 0.0, %v754
      %v756 = vpop.f32.mrb[0].mxu0
      %v757 = vpop.f32.mrb[0].mxu0
      %758 = vdwg.mxu0
      %759 = vmatprep.subr.bf16.mxu0 0
      %760 = vmatpush1.bf16.msra.mxu0 %v716
      %761 = vmatprep.subr.bf16.mxu0 0
      %762 = vmatpush1.bf16.msra.mxu0 0
      %763 = vmatprep.subr.bf16.mxu0 0
      %764 = vmatpush1.bf16.msra.mxu0 0
      %765 = vmatprep.subr.bf16.mxu0 0
      %766 = vmatpush1.bf16.msra.mxu0 0
      %767 = vmatprep.subr.bf16.mxu0 0
      %768 = vmatpush1.bf16.msra.mxu0 0
      %769 = vmatprep.subr.bf16.mxu0 0
      %770 = vmatpush1.bf16.msra.mxu0 0
      %771 = vmatprep.subr.bf16.mxu0 0
      %772 = vmatpush1.bf16.msra.mxu0 0
      %773 = vmatprep.subr.bf16.mxu0 0
      %774 = vmatpush1.bf16.msra.mxu0 0
      %775 = vmatprep.subr.bf16.mxu0 0
      %776 = vmatpush1.bf16.msra.mxu0 0
      %777 = vmatprep.subr.bf16.mxu0 0
      %778 = vmatpush1.bf16.msra.mxu0 0
      %779 = vmatprep.subr.bf16.mxu0 0
      %780 = vmatpush1.bf16.msra.mxu0 0
      %781 = vmatprep.subr.bf16.mxu0 0
      %782 = vmatpush1.bf16.msra.mxu0 0
      %783 = vmatprep.subr.bf16.mxu0 0
      %784 = vmatpush1.bf16.msra.mxu0 0
      %785 = vmatprep.subr.bf16.mxu0 0
      %786 = vmatpush1.bf16.msra.mxu0 0
      %787 = vmatprep.subr.bf16.mxu0 0
      %788 = vmatpush1.bf16.msra.mxu0 0
      %789 = vmatprep.subr.bf16.mxu0 0
      %790 = vmatpush1.bf16.msra.mxu0 0
      %791 = vmatprep.mubr.bf16.mxu0 0
      %792 = vmatmul.mubr.bf16.gmra.mrb[0].mxu0 %v707
      %v793 = vpop.f32.mrb[0].mxu0
      %v794 = vadd.f32 0.0, %v793
      %v795 = vpop.f32.mrb[0].mxu0
      %v796 = vpop.f32.mrb[0].mxu0
      %v797 = vpop.f32.mrb[0].mxu0
      %798 = vdwg.mxu0
      %v799 = vadd.f32 %v675, %v753
      %v800 = vadd.f32 %v676, %v755
      %v801 = vadd.f32 %v677, %v794
      %s802 = scalar_lea.vmem %s2, 4
      %v803 = vld [vmem:[%s802] sm:$0x3]
      %v804 = vld [vmem:[%s315] sm:$0x3f]
      %v806 = vcombine.high %v804, %v804
      %v808 = vunpack.c.l.s4 1983009808
      %v809 = vunpack.c.0.s8 %v808
      %v810 = vlaneseq
      %v811 = vshrl.u32 %v810, 7
      %v812 = vsub.s32 %v809, %v811
      %v813 = vrot.slane %v804, %v812
      %v815 = vunpack.c.l.s4 1983009808
      %v816 = vunpack.c.0.s8 %v815
      %v817 = vlaneseq
      %v818 = vshrl.u32 %v817, 7
      %v819 = vsub.s32 %v816, %v818
      %v820 = vrot.slane %v806, %v819
      %v821 = vcombine.high %v813, %v813
      %822 = vrot.lane.b32.xlu0 %v813, 126
      %v823 = vpop.permute.xlu0 %822
      %824 = vrot.lane.b32.xlu0 %v821, 126
      %v825 = vpop.permute.xlu0 %824
      %826 = vrot.lane.b32.xlu0 %v820, 126
      %v827 = vpop.permute.xlu0 %826
      %vm828 = vcmask 1031168
      %v829 = vsel %vm828, %v823, %v825
      %v830 = vsel %vm828, %v825, %v827
      %v832 = vsel %vm348, %v803, 0
      %v835 = vsel %vm352, %v829, 0
      %v838 = vsel %vm352, %v830, 0
      %v841 = vsel %vm352, %v827, 0
      %843 = vmatprep.subr.bf16.mxu0 %v838
      %844 = vmatpush1.bf16.msra.mxu0 %v835
      %845 = vmatprep.subr.bf16.mxu0 0
      %846 = vmatpush1.bf16.msra.mxu0 0
      %847 = vmatprep.subr.bf16.mxu0 0
      %848 = vmatpush1.bf16.msra.mxu0 0
      %849 = vmatprep.subr.bf16.mxu0 0
      %850 = vmatpush1.bf16.msra.mxu0 0
      %851 = vmatprep.subr.bf16.mxu0 0
      %852 = vmatpush1.bf16.msra.mxu0 0
      %853 = vmatprep.subr.bf16.mxu0 0
      %854 = vmatpush1.bf16.msra.mxu0 0
      %855 = vmatprep.subr.bf16.mxu0 0
      %856 = vmatpush1.bf16.msra.mxu0 0
      %857 = vmatprep.subr.bf16.mxu0 0
      %858 = vmatpush1.bf16.msra.mxu0 0
      %859 = vmatprep.subr.bf16.mxu0 0
      %860 = vmatpush1.bf16.msra.mxu0 0
      %861 = vmatprep.subr.bf16.mxu0 0
      %862 = vmatpush1.bf16.msra.mxu0 0
      %863 = vmatprep.subr.bf16.mxu0 0
      %864 = vmatpush1.bf16.msra.mxu0 0
      %865 = vmatprep.subr.bf16.mxu0 0
      %866 = vmatpush1.bf16.msra.mxu0 0
      %867 = vmatprep.subr.bf16.mxu0 0
      %868 = vmatpush1.bf16.msra.mxu0 0
      %869 = vmatprep.subr.bf16.mxu0 0
      %870 = vmatpush1.bf16.msra.mxu0 0
      %871 = vmatprep.subr.bf16.mxu0 0
      %872 = vmatpush1.bf16.msra.mxu0 0
      %873 = vmatprep.subr.bf16.mxu0 0
      %874 = vmatpush1.bf16.msra.mxu0 0
      %875 = vmatprep.mubr.bf16.mxu0 0
      %876 = vmatmul.mubr.bf16.gmra.mrb[0].mxu0 %v832
      %v877 = vpop.f32.mrb[0].mxu0
      %v878 = vadd.f32 0.0, %v877
      %v879 = vpop.f32.mrb[0].mxu0
      %v880 = vadd.f32 0.0, %v879
      %v881 = vpop.f32.mrb[0].mxu0
      %v882 = vpop.f32.mrb[0].mxu0
      %883 = vdwg.mxu0
      %884 = vmatprep.subr.bf16.mxu0 0
      %885 = vmatpush1.bf16.msra.mxu0 %v841
      %886 = vmatprep.subr.bf16.mxu0 0
      %887 = vmatpush1.bf16.msra.mxu0 0
      %888 = vmatprep.subr.bf16.mxu0 0
      %889 = vmatpush1.bf16.msra.mxu0 0
      %890 = vmatprep.subr.bf16.mxu0 0
      %891 = vmatpush1.bf16.msra.mxu0 0
      %892 = vmatprep.subr.bf16.mxu0 0
      %893 = vmatpush1.bf16.msra.mxu0 0
      %894 = vmatprep.subr.bf16.mxu0 0
      %895 = vmatpush1.bf16.msra.mxu0 0
      %896 = vmatprep.subr.bf16.mxu0 0
      %897 = vmatpush1.bf16.msra.mxu0 0
      %898 = vmatprep.subr.bf16.mxu0 0
      %899 = vmatpush1.bf16.msra.mxu0 0
      %900 = vmatprep.subr.bf16.mxu0 0
      %901 = vmatpush1.bf16.msra.mxu0 0
      %902 = vmatprep.subr.bf16.mxu0 0
      %903 = vmatpush1.bf16.msra.mxu0 0
      %904 = vmatprep.subr.bf16.mxu0 0
      %905 = vmatpush1.bf16.msra.mxu0 0
      %906 = vmatprep.subr.bf16.mxu0 0
      %907 = vmatpush1.bf16.msra.mxu0 0
      %908 = vmatprep.subr.bf16.mxu0 0
      %909 = vmatpush1.bf16.msra.mxu0 0
      %910 = vmatprep.subr.bf16.mxu0 0
      %911 = vmatpush1.bf16.msra.mxu0 0
      %912 = vmatprep.subr.bf16.mxu0 0
      %913 = vmatpush1.bf16.msra.mxu0 0
      %914 = vmatprep.subr.bf16.mxu0 0
      %915 = vmatpush1.bf16.msra.mxu0 0
      %916 = vmatprep.mubr.bf16.mxu0 0
      %917 = vmatmul.mubr.bf16.gmra.mrb[0].mxu0 %v832
      %v918 = vpop.f32.mrb[0].mxu0
      %v919 = vadd.f32 0.0, %v918
      %v920 = vpop.f32.mrb[0].mxu0
      %v921 = vpop.f32.mrb[0].mxu0
      %v922 = vpop.f32.mrb[0].mxu0
      %923 = vdwg.mxu0
      %v924 = vadd.f32 %v799, %v878
      %v925 = vadd.f32 %v800, %v880
      %v926 = vadd.f32 %v801, %v919
      %s927 = scalar_lea.vmem %s3, 4
      %v928 = vld [vmem:[%s927] sm:$0x3]
      %v929 = vld [vmem:[%s320] sm:$0x3f]
      %v931 = vcombine.high %v929, %v929
      %v933 = vunpack.c.l.s4 1983009808
      %v934 = vunpack.c.0.s8 %v933
      %v935 = vlaneseq
      %v936 = vshrl.u32 %v935, 7
      %v937 = vsub.s32 %v934, %v936
      %v938 = vrot.slane %v929, %v937
      %v940 = vunpack.c.l.s4 1983009808
      %v941 = vunpack.c.0.s8 %v940
      %v942 = vlaneseq
      %v943 = vshrl.u32 %v942, 7
      %v944 = vsub.s32 %v941, %v943
      %v945 = vrot.slane %v931, %v944
      %v946 = vcombine.high %v938, %v938
      %947 = vrot.lane.b32.xlu0 %v938, 126
      %v948 = vpop.permute.xlu0 %947
      %949 = vrot.lane.b32.xlu0 %v946, 126
      %v950 = vpop.permute.xlu0 %949
      %951 = vrot.lane.b32.xlu0 %v945, 126
      %v952 = vpop.permute.xlu0 %951
      %v953 = vsel %vm828, %v948, %v950
      %v954 = vsel %vm828, %v950, %v952
      %v956 = vsel %vm348, %v928, 0
      %v959 = vsel %vm352, %v953, 0
      %v962 = vsel %vm352, %v954, 0
      %v965 = vsel %vm352, %v952, 0
      %967 = vmatprep.subr.bf16.mxu0 %v962
      %968 = vmatpush1.bf16.msra.mxu0 %v959
      %969 = vmatprep.subr.bf16.mxu0 0
      %970 = vmatpush1.bf16.msra.mxu0 0
      %971 = vmatprep.subr.bf16.mxu0 0
      %972 = vmatpush1.bf16.msra.mxu0 0
      %973 = vmatprep.subr.bf16.mxu0 0
      %974 = vmatpush1.bf16.msra.mxu0 0
      %975 = vmatprep.subr.bf16.mxu0 0
      %976 = vmatpush1.bf16.msra.mxu0 0
      %977 = vmatprep.subr.bf16.mxu0 0
      %978 = vmatpush1.bf16.msra.mxu0 0
      %979 = vmatprep.subr.bf16.mxu0 0
      %980 = vmatpush1.bf16.msra.mxu0 0
      %981 = vmatprep.subr.bf16.mxu0 0
      %982 = vmatpush1.bf16.msra.mxu0 0
      %983 = vmatprep.subr.bf16.mxu0 0
      %984 = vmatpush1.bf16.msra.mxu0 0
      %985 = vmatprep.subr.bf16.mxu0 0
      %986 = vmatpush1.bf16.msra.mxu0 0
      %987 = vmatprep.subr.bf16.mxu0 0
      %988 = vmatpush1.bf16.msra.mxu0 0
      %989 = vmatprep.subr.bf16.mxu0 0
      %990 = vmatpush1.bf16.msra.mxu0 0
      %991 = vmatprep.subr.bf16.mxu0 0
      %992 = vmatpush1.bf16.msra.mxu0 0
      %993 = vmatprep.subr.bf16.mxu0 0
      %994 = vmatpush1.bf16.msra.mxu0 0
      %995 = vmatprep.subr.bf16.mxu0 0
      %996 = vmatpush1.bf16.msra.mxu0 0
      %997 = vmatprep.subr.bf16.mxu0 0
      %998 = vmatpush1.bf16.msra.mxu0 0
      %999 = vmatprep.mubr.bf16.mxu0 0
      %1000 = vmatmul.mubr.bf16.gmra.mrb[0].mxu0 %v956
      %v1001 = vpop.f32.mrb[0].mxu0
      %v1002 = vadd.f32 0.0, %v1001
      %v1003 = vpop.f32.mrb[0].mxu0
      %v1004 = vadd.f32 0.0, %v1003
      %v1005 = vpop.f32.mrb[0].mxu0
      %v1006 = vpop.f32.mrb[0].mxu0
      %1007 = vdwg.mxu0
      %1008 = vmatprep.subr.bf16.mxu0 0
      %1009 = vmatpush1.bf16.msra.mxu0 %v965
      %1010 = vmatprep.subr.bf16.mxu0 0
      %1011 = vmatpush1.bf16.msra.mxu0 0
      %1012 = vmatprep.subr.bf16.mxu0 0
      %1013 = vmatpush1.bf16.msra.mxu0 0
      %1014 = vmatprep.subr.bf16.mxu0 0
      %1015 = vmatpush1.bf16.msra.mxu0 0
      %1016 = vmatprep.subr.bf16.mxu0 0
      %1017 = vmatpush1.bf16.msra.mxu0 0
      %1018 = vmatprep.subr.bf16.mxu0 0
      %1019 = vmatpush1.bf16.msra.mxu0 0
      %1020 = vmatprep.subr.bf16.mxu0 0
      %1021 = vmatpush1.bf16.msra.mxu0 0
      %1022 = vmatprep.subr.bf16.mxu0 0
      %1023 = vmatpush1.bf16.msra.mxu0 0
      %1024 = vmatprep.subr.bf16.mxu0 0
      %1025 = vmatpush1.bf16.msra.mxu0 0
      %1026 = vmatprep.subr.bf16.mxu0 0
      %1027 = vmatpush1.bf16.msra.mxu0 0
      %1028 = vmatprep.subr.bf16.mxu0 0
      %1029 = vmatpush1.bf16.msra.mxu0 0
      %1030 = vmatprep.subr.bf16.mxu0 0
      %1031 = vmatpush1.bf16.msra.mxu0 0
      %1032 = vmatprep.subr.bf16.mxu0 0
      %1033 = vmatpush1.bf16.msra.mxu0 0
      %1034 = vmatprep.subr.bf16.mxu0 0
      %1035 = vmatpush1.bf16.msra.mxu0 0
      %1036 = vmatprep.subr.bf16.mxu0 0
      %1037 = vmatpush1.bf16.msra.mxu0 0
      %1038 = vmatprep.subr.bf16.mxu0 0
      %1039 = vmatpush1.bf16.msra.mxu0 0
      %1040 = vmatprep.mubr.bf16.mxu0 0
      %1041 = vmatmul.mubr.bf16.gmra.mrb[0].mxu0 %v956
      %v1042 = vpop.f32.mrb[0].mxu0
      %v1043 = vadd.f32 0.0, %v1042
      %v1044 = vpop.f32.mrb[0].mxu0
      %v1045 = vpop.f32.mrb[0].mxu0
      %v1046 = vpop.f32.mrb[0].mxu0
      %1047 = vdwg.mxu0
      %v1048 = vadd.f32 %v924, %v1002
      %v1049 = vadd.f32 %v925, %v1004
      %v1050 = vadd.f32 %v926, %v1043
      %s1051 = scalar_lea.vmem %s2, 6
      %v1052 = vld [vmem:[%s1051] sm:$0x3]
      %v1053 = vld [vmem:[%s315] sm:$0x3f]
      %v1055 = vcombine.high %v1053, %v1053
      %v1057 = vunpack.c.l.s4 1983009808
      %v1058 = vunpack.c.0.s8 %v1057
      %v1059 = vlaneseq
      %v1060 = vshrl.u32 %v1059, 7
      %v1061 = vsub.s32 %v1058, %v1060
      %v1062 = vrot.slane %v1053, %v1061
      %v1064 = vunpack.c.l.s4 1983009808
      %v1065 = vunpack.c.0.s8 %v1064
      %v1066 = vlaneseq
      %v1067 = vshrl.u32 %v1066, 7
      %v1068 = vsub.s32 %v1065, %v1067
      %v1069 = vrot.slane %v1055, %v1068
      %v1070 = vcombine.high %v1062, %v1062
      %1071 = vrot.lane.b32.xlu0 %v1062, 110
      %v1072 = vpop.permute.xlu0 %1071
      %1073 = vrot.lane.b32.xlu0 %v1070, 110
      %v1074 = vpop.permute.xlu0 %1073
      %1075 = vrot.lane.b32.xlu0 %v1069, 110
      %v1076 = vpop.permute.xlu0 %1075
      %vm1077 = vcmask 900096
      %v1078 = vsel %vm1077, %v1072, %v1074
      %v1079 = vsel %vm1077, %v1074, %v1076
      %v1081 = vsel %vm348, %v1052, 0
      %v1084 = vsel %vm352, %v1078, 0
      %v1087 = vsel %vm352, %v1079, 0
      %v1090 = vsel %vm352, %v1076, 0
      %1092 = vmatprep.subr.bf16.mxu0 %v1087
      %1093 = vmatpush1.bf16.msra.mxu0 %v1084
      %1094 = vmatprep.subr.bf16.mxu0 0
      %1095 = vmatpush1.bf16.msra.mxu0 0
      %1096 = vmatprep.subr.bf16.mxu0 0
      %1097 = vmatpush1.bf16.msra.mxu0 0
      %1098 = vmatprep.subr.bf16.mxu0 0
      %1099 = vmatpush1.bf16.msra.mxu0 0
      %1100 = vmatprep.subr.bf16.mxu0 0
      %1101 = vmatpush1.bf16.msra.mxu0 0
      %1102 = vmatprep.subr.bf16.mxu0 0
      %1103 = vmatpush1.bf16.msra.mxu0 0
      %1104 = vmatprep.subr.bf16.mxu0 0
      %1105 = vmatpush1.bf16.msra.mxu0 0
      %1106 = vmatprep.subr.bf16.mxu0 0
      %1107 = vmatpush1.bf16.msra.mxu0 0
      %1108 = vmatprep.subr.bf16.mxu0 0
      %1109 = vmatpush1.bf16.msra.mxu0 0
      %1110 = vmatprep.subr.bf16.mxu0 0
      %1111 = vmatpush1.bf16.msra.mxu0 0
      %1112 = vmatprep.subr.bf16.mxu0 0
      %1113 = vmatpush1.bf16.msra.mxu0 0
      %1114 = vmatprep.subr.bf16.mxu0 0
      %1115 = vmatpush1.bf16.msra.mxu0 0
      %1116 = vmatprep.subr.bf16.mxu0 0
      %1117 = vmatpush1.bf16.msra.mxu0 0
      %1118 = vmatprep.subr.bf16.mxu0 0
      %1119 = vmatpush1.bf16.msra.mxu0 0
      %1120 = vmatprep.subr.bf16.mxu0 0
      %1121 = vmatpush1.bf16.msra.mxu0 0
      %1122 = vmatprep.subr.bf16.mxu0 0
      %1123 = vmatpush1.bf16.msra.mxu0 0
      %1124 = vmatprep.mubr.bf16.mxu0 0
      %1125 = vmatmul.mubr.bf16.gmra.mrb[0].mxu0 %v1081
      %v1126 = vpop.f32.mrb[0].mxu0
      %v1127 = vadd.f32 0.0, %v1126
      %v1128 = vpop.f32.mrb[0].mxu0
      %v1129 = vadd.f32 0.0, %v1128
      %v1130 = vpop.f32.mrb[0].mxu0
      %v1131 = vpop.f32.mrb[0].mxu0
      %1132 = vdwg.mxu0
      %1133 = vmatprep.subr.bf16.mxu0 0
      %1134 = vmatpush1.bf16.msra.mxu0 %v1090
      %1135 = vmatprep.subr.bf16.mxu0 0
      %1136 = vmatpush1.bf16.msra.mxu0 0
      %1137 = vmatprep.subr.bf16.mxu0 0
      %1138 = vmatpush1.bf16.msra.mxu0 0
      %1139 = vmatprep.subr.bf16.mxu0 0
      %1140 = vmatpush1.bf16.msra.mxu0 0
      %1141 = vmatprep.subr.bf16.mxu0 0
      %1142 = vmatpush1.bf16.msra.mxu0 0
      %1143 = vmatprep.subr.bf16.mxu0 0
      %1144 = vmatpush1.bf16.msra.mxu0 0
      %1145 = vmatprep.subr.bf16.mxu0 0
      %1146 = vmatpush1.bf16.msra.mxu0 0
      %1147 = vmatprep.subr.bf16.mxu0 0
      %1148 = vmatpush1.bf16.msra.mxu0 0
      %1149 = vmatprep.subr.bf16.mxu0 0
      %1150 = vmatpush1.bf16.msra.mxu0 0
      %1151 = vmatprep.subr.bf16.mxu0 0
      %1152 = vmatpush1.bf16.msra.mxu0 0
      %1153 = vmatprep.subr.bf16.mxu0 0
      %1154 = vmatpush1.bf16.msra.mxu0 0
      %1155 = vmatprep.subr.bf16.mxu0 0
      %1156 = vmatpush1.bf16.msra.mxu0 0
      %1157 = vmatprep.subr.bf16.mxu0 0
      %1158 = vmatpush1.bf16.msra.mxu0 0
      %1159 = vmatprep.subr.bf16.mxu0 0
      %1160 = vmatpush1.bf16.msra.mxu0 0
      %1161 = vmatprep.subr.bf16.mxu0 0
      %1162 = vmatpush1.bf16.msra.mxu0 0
      %1163 = vmatprep.subr.bf16.mxu0 0
      %1164 = vmatpush1.bf16.msra.mxu0 0
      %1165 = vmatprep.mubr.bf16.mxu0 0
      %1166 = vmatmul.mubr.bf16.gmra.mrb[0].mxu0 %v1081
      %v1167 = vpop.f32.mrb[0].mxu0
      %v1168 = vadd.f32 0.0, %v1167
      %v1169 = vpop.f32.mrb[0].mxu0
      %v1170 = vpop.f32.mrb[0].mxu0
      %v1171 = vpop.f32.mrb[0].mxu0
      %1172 = vdwg.mxu0
      %v1173 = vadd.f32 %v1048, %v1127
      %v1174 = vadd.f32 %v1049, %v1129
      %v1175 = vadd.f32 %v1050, %v1168
      %s1176 = scalar_lea.vmem %s3, 6
      %v1177 = vld [vmem:[%s1176] sm:$0x3]
      %v1178 = vld [vmem:[%s320] sm:$0x3f]
      %v1180 = vcombine.high %v1178, %v1178
      %v1182 = vunpack.c.l.s4 1983009808
      %v1183 = vunpack.c.0.s8 %v1182
      %v1184 = vlaneseq
      %v1185 = vshrl.u32 %v1184, 7
      %v1186 = vsub.s32 %v1183, %v1185
      %v1187 = vrot.slane %v1178, %v1186
      %v1189 = vunpack.c.l.s4 1983009808
      %v1190 = vunpack.c.0.s8 %v1189
      %v1191 = vlaneseq
      %v1192 = vshrl.u32 %v1191, 7
      %v1193 = vsub.s32 %v1190, %v1192
      %v1194 = vrot.slane %v1180, %v1193
      %v1195 = vcombine.high %v1187, %v1187
      %1196 = vrot.lane.b32.xlu0 %v1187, 110
      %v1197 = vpop.permute.xlu0 %1196
      %1198 = vrot.lane.b32.xlu0 %v1195, 110
      %v1199 = vpop.permute.xlu0 %1198
      %1200 = vrot.lane.b32.xlu0 %v1194, 110
      %v1201 = vpop.permute.xlu0 %1200
      %v1202 = vsel %vm1077, %v1197, %v1199
      %v1203 = vsel %vm1077, %v1199, %v1201
      %v1205 = vsel %vm348, %v1177, 0
      %v1208 = vsel %vm352, %v1202, 0
      %v1211 = vsel %vm352, %v1203, 0
      %v1214 = vsel %vm352, %v1201, 0
      %1216 = vmatprep.subr.bf16.mxu0 %v1211
      %1217 = vmatpush1.bf16.msra.mxu0 %v1208
      %1218 = vmatprep.subr.bf16.mxu0 0
      %1219 = vmatpush1.bf16.msra.mxu0 0
      %1220 = vmatprep.subr.bf16.mxu0 0
      %1221 = vmatpush1.bf16.msra.mxu0 0
      %1222 = vmatprep.subr.bf16.mxu0 0
      %1223 = vmatpush1.bf16.msra.mxu0 0
      %1224 = vmatprep.subr.bf16.mxu0 0
      %1225 = vmatpush1.bf16.msra.mxu0 0
      %1226 = vmatprep.subr.bf16.mxu0 0
      %1227 = vmatpush1.bf16.msra.mxu0 0
      %1228 = vmatprep.subr.bf16.mxu0 0
      %1229 = vmatpush1.bf16.msra.mxu0 0
      %1230 = vmatprep.subr.bf16.mxu0 0
      %1231 = vmatpush1.bf16.msra.mxu0 0
      %1232 = vmatprep.subr.bf16.mxu0 0
      %1233 = vmatpush1.bf16.msra.mxu0 0
      %1234 = vmatprep.subr.bf16.mxu0 0
      %1235 = vmatpush1.bf16.msra.mxu0 0
      %1236 = vmatprep.subr.bf16.mxu0 0
      %1237 = vmatpush1.bf16.msra.mxu0 0
      %1238 = vmatprep.subr.bf16.mxu0 0
      %1239 = vmatpush1.bf16.msra.mxu0 0
      %1240 = vmatprep.subr.bf16.mxu0 0
      %1241 = vmatpush1.bf16.msra.mxu0 0
      %1242 = vmatprep.subr.bf16.mxu0 0
      %1243 = vmatpush1.bf16.msra.mxu0 0
      %1244 = vmatprep.subr.bf16.mxu0 0
      %1245 = vmatpush1.bf16.msra.mxu0 0
      %1246 = vmatprep.subr.bf16.mxu0 0
      %1247 = vmatpush1.bf16.msra.mxu0 0
      %1248 = vmatprep.mubr.bf16.mxu0 0
      %1249 = vmatmul.mubr.bf16.gmra.mrb[0].mxu0 %v1205
      %v1250 = vpop.f32.mrb[0].mxu0
      %v1251 = vadd.f32 0.0, %v1250
      %v1252 = vpop.f32.mrb[0].mxu0
      %v1253 = vadd.f32 0.0, %v1252
      %v1254 = vpop.f32.mrb[0].mxu0
      %v1255 = vpop.f32.mrb[0].mxu0
      %1256 = vdwg.mxu0
      %1257 = vmatprep.subr.bf16.mxu0 0
      %1258 = vmatpush1.bf16.msra.mxu0 %v1214
      %1259 = vmatprep.subr.bf16.mxu0 0
      %1260 = vmatpush1.bf16.msra.mxu0 0
      %1261 = vmatprep.subr.bf16.mxu0 0
      %1262 = vmatpush1.bf16.msra.mxu0 0
      %1263 = vmatprep.subr.bf16.mxu0 0
      %1264 = vmatpush1.bf16.msra.mxu0 0
      %1265 = vmatprep.subr.bf16.mxu0 0
      %1266 = vmatpush1.bf16.msra.mxu0 0
      %1267 = vmatprep.subr.bf16.mxu0 0
      %1268 = vmatpush1.bf16.msra.mxu0 0
      %1269 = vmatprep.subr.bf16.mxu0 0
      %1270 = vmatpush1.bf16.msra.mxu0 0
      %1271 = vmatprep.subr.bf16.mxu0 0
      %1272 = vmatpush1.bf16.msra.mxu0 0
      %1273 = vmatprep.subr.bf16.mxu0 0
      %1274 = vmatpush1.bf16.msra.mxu0 0
      %1275 = vmatprep.subr.bf16.mxu0 0
      %1276 = vmatpush1.bf16.msra.mxu0 0
      %1277 = vmatprep.subr.bf16.mxu0 0
      %1278 = vmatpush1.bf16.msra.mxu0 0
      %1279 = vmatprep.subr.bf16.mxu0 0
      %1280 = vmatpush1.bf16.msra.mxu0 0
      %1281 = vmatprep.subr.bf16.mxu0 0
      %1282 = vmatpush1.bf16.msra.mxu0 0
      %1283 = vmatprep.subr.bf16.mxu0 0
      %1284 = vmatpush1.bf16.msra.mxu0 0
      %1285 = vmatprep.subr.bf16.mxu0 0
      %1286 = vmatpush1.bf16.msra.mxu0 0
      %1287 = vmatprep.subr.bf16.mxu0 0
      %1288 = vmatpush1.bf16.msra.mxu0 0
      %1289 = vmatprep.mubr.bf16.mxu0 0
      %1290 = vmatmul.mubr.bf16.gmra.mrb[0].mxu0 %v1205
      %v1291 = vpop.f32.mrb[0].mxu0
      %v1292 = vadd.f32 0.0, %v1291
      %v1293 = vpop.f32.mrb[0].mxu0
      %v1294 = vpop.f32.mrb[0].mxu0
      %v1295 = vpop.f32.mrb[0].mxu0
      %1296 = vdwg.mxu0
      %v1297 = vadd.f32 %v1173, %v1251
      %v1298 = vadd.f32 %v1174, %v1253
      %v1299 = vadd.f32 %v1175, %v1292
      %s1300 = scalar_lea.vmem %s2, 8
      %v1301 = vld [vmem:[%s1300] sm:$0x3]
      %v1302 = vld [vmem:[%s315] sm:$0x3f]
      %v1304 = vcombine.high %v1302, %v1302
      %v1306 = vunpack.c.l.s4 1983009808
      %v1307 = vunpack.c.0.s8 %v1306
      %v1308 = vlaneseq
      %v1309 = vshrl.u32 %v1308, 7
      %v1310 = vsub.s32 %v1307, %v1309
      %v1311 = vrot.slane %v1302, %v1310
      %v1313 = vunpack.c.l.s4 1983009808
      %v1314 = vunpack.c.0.s8 %v1313
      %v1315 = vlaneseq
      %v1316 = vshrl.u32 %v1315, 7
      %v1317 = vsub.s32 %v1314, %v1316
      %v1318 = vrot.slane %v1304, %v1317
      %v1319 = vcombine.high %v1311, %v1311
      %1320 = vrot.lane.b32.xlu0 %v1311, 109
      %v1321 = vpop.permute.xlu0 %1320
      %1322 = vrot.lane.b32.xlu0 %v1319, 109
      %v1323 = vpop.permute.xlu0 %1322
      %1324 = vrot.lane.b32.xlu0 %v1318, 109
      %v1325 = vpop.permute.xlu0 %1324
      %vm1326 = vcmask 891904
      %v1327 = vsel %vm1326, %v1321, %v1323
      %v1328 = vsel %vm1326, %v1323, %v1325
      %v1330 = vsel %vm348, %v1301, 0
      %v1333 = vsel %vm352, %v1327, 0
      %v1336 = vsel %vm352, %v1328, 0
      %v1339 = vsel %vm352, %v1325, 0
      %1341 = vmatprep.subr.bf16.mxu0 %v1336
      %1342 = vmatpush1.bf16.msra.mxu0 %v1333
      %1343 = vmatprep.subr.bf16.mxu0 0
      %1344 = vmatpush1.bf16.msra.mxu0 0
      %1345 = vmatprep.subr.bf16.mxu0 0
      %1346 = vmatpush1.bf16.msra.mxu0 0
      %1347 = vmatprep.subr.bf16.mxu0 0
      %1348 = vmatpush1.bf16.msra.mxu0 0
      %1349 = vmatprep.subr.bf16.mxu0 0
      %1350 = vmatpush1.bf16.msra.mxu0 0
      %1351 = vmatprep.subr.bf16.mxu0 0
      %1352 = vmatpush1.bf16.msra.mxu0 0
      %1353 = vmatprep.subr.bf16.mxu0 0
      %1354 = vmatpush1.bf16.msra.mxu0 0
      %1355 = vmatprep.subr.bf16.mxu0 0
      %1356 = vmatpush1.bf16.msra.mxu0 0
      %1357 = vmatprep.subr.bf16.mxu0 0
      %1358 = vmatpush1.bf16.msra.mxu0 0
      %1359 = vmatprep.subr.bf16.mxu0 0
      %1360 = vmatpush1.bf16.msra.mxu0 0
      %1361 = vmatprep.subr.bf16.mxu0 0
      %1362 = vmatpush1.bf16.msra.mxu0 0
      %1363 = vmatprep.subr.bf16.mxu0 0
      %1364 = vmatpush1.bf16.msra.mxu0 0
      %1365 = vmatprep.subr.bf16.mxu0 0
      %1366 = vmatpush1.bf16.msra.mxu0 0
      %1367 = vmatprep.subr.bf16.mxu0 0
      %1368 = vmatpush1.bf16.msra.mxu0 0
      %1369 = vmatprep.subr.bf16.mxu0 0
      %1370 = vmatpush1.bf16.msra.mxu0 0
      %1371 = vmatprep.subr.bf16.mxu0 0
      %1372 = vmatpush1.bf16.msra.mxu0 0
      %1373 = vmatprep.mubr.bf16.mxu0 0
      %1374 = vmatmul.mubr.bf16.gmra.mrb[0].mxu0 %v1330
      %v1375 = vpop.f32.mrb[0].mxu0
      %v1376 = vadd.f32 0.0, %v1375
      %v1377 = vpop.f32.mrb[0].mxu0
      %v1378 = vadd.f32 0.0, %v1377
      %v1379 = vpop.f32.mrb[0].mxu0
      %v1380 = vpop.f32.mrb[0].mxu0
      %1381 = vdwg.mxu0
      %1382 = vmatprep.subr.bf16.mxu0 0
      %1383 = vmatpush1.bf16.msra.mxu0 %v1339
      %1384 = vmatprep.subr.bf16.mxu0 0
      %1385 = vmatpush1.bf16.msra.mxu0 0
      %1386 = vmatprep.subr.bf16.mxu0 0
      %1387 = vmatpush1.bf16.msra.mxu0 0
      %1388 = vmatprep.subr.bf16.mxu0 0
      %1389 = vmatpush1.bf16.msra.mxu0 0
      %1390 = vmatprep.subr.bf16.mxu0 0
      %1391 = vmatpush1.bf16.msra.mxu0 0
      %1392 = vmatprep.subr.bf16.mxu0 0
      %1393 = vmatpush1.bf16.msra.mxu0 0
      %1394 = vmatprep.subr.bf16.mxu0 0
      %1395 = vmatpush1.bf16.msra.mxu0 0
      %1396 = vmatprep.subr.bf16.mxu0 0
      %1397 = vmatpush1.bf16.msra.mxu0 0
      %1398 = vmatprep.subr.bf16.mxu0 0
      %1399 = vmatpush1.bf16.msra.mxu0 0
      %1400 = vmatprep.subr.bf16.mxu0 0
      %1401 = vmatpush1.bf16.msra.mxu0 0
      %1402 = vmatprep.subr.bf16.mxu0 0
      %1403 = vmatpush1.bf16.msra.mxu0 0
      %1404 = vmatprep.subr.bf16.mxu0 0
      %1405 = vmatpush1.bf16.msra.mxu0 0
      %1406 = vmatprep.subr.bf16.mxu0 0
      %1407 = vmatpush1.bf16.msra.mxu0 0
      %1408 = vmatprep.subr.bf16.mxu0 0
      %1409 = vmatpush1.bf16.msra.mxu0 0
      %1410 = vmatprep.subr.bf16.mxu0 0
      %1411 = vmatpush1.bf16.msra.mxu0 0
      %1412 = vmatprep.subr.bf16.mxu0 0
      %1413 = vmatpush1.bf16.msra.mxu0 0
      %1414 = vmatprep.mubr.bf16.mxu0 0
      %1415 = vmatmul.mubr.bf16.gmra.mrb[0].mxu0 %v1330
      %v1416 = vpop.f32.mrb[0].mxu0
      %v1417 = vadd.f32 0.0, %v1416
      %v1418 = vpop.f32.mrb[0].mxu0
      %v1419 = vpop.f32.mrb[0].mxu0
      %v1420 = vpop.f32.mrb[0].mxu0
      %1421 = vdwg.mxu0
      %v1422 = vadd.f32 %v1297, %v1376
      %v1423 = vadd.f32 %v1298, %v1378
      %v1424 = vadd.f32 %v1299, %v1417
      %s1425 = scalar_lea.vmem %s3, 8
      %v1426 = vld [vmem:[%s1425] sm:$0x3]
      %v1427 = vld [vmem:[%s320] sm:$0x3f]
      %v1429 = vcombine.high %v1427, %v1427
      %v1431 = vunpack.c.l.s4 1983009808
      %v1432 = vunpack.c.0.s8 %v1431
      %v1433 = vlaneseq
      %v1434 = vshrl.u32 %v1433, 7
      %v1435 = vsub.s32 %v1432, %v1434
      %v1436 = vrot.slane %v1427, %v1435
      %v1438 = vunpack.c.l.s4 1983009808
      %v1439 = vunpack.c.0.s8 %v1438
      %v1440 = vlaneseq
      %v1441 = vshrl.u32 %v1440, 7
      %v1442 = vsub.s32 %v1439, %v1441
      %v1443 = vrot.slane %v1429, %v1442
      %v1444 = vcombine.high %v1436, %v1436
      %1445 = vrot.lane.b32.xlu0 %v1436, 109
      %v1446 = vpop.permute.xlu0 %1445
      %1447 = vrot.lane.b32.xlu0 %v1444, 109
      %v1448 = vpop.permute.xlu0 %1447
      %1449 = vrot.lane.b32.xlu0 %v1443, 109
      %v1450 = vpop.permute.xlu0 %1449
      %v1451 = vsel %vm1326, %v1446, %v1448
      %v1452 = vsel %vm1326, %v1448, %v1450
      %v1454 = vsel %vm348, %v1426, 0
      %v1457 = vsel %vm352, %v1451, 0
      %v1460 = vsel %vm352, %v1452, 0
      %v1463 = vsel %vm352, %v1450, 0
      %1465 = vmatprep.subr.bf16.mxu0 %v1460
      %1466 = vmatpush1.bf16.msra.mxu0 %v1457
      %1467 = vmatprep.subr.bf16.mxu0 0
      %1468 = vmatpush1.bf16.msra.mxu0 0
      %1469 = vmatprep.subr.bf16.mxu0 0
      %1470 = vmatpush1.bf16.msra.mxu0 0
      %1471 = vmatprep.subr.bf16.mxu0 0
      %1472 = vmatpush1.bf16.msra.mxu0 0
      %1473 = vmatprep.subr.bf16.mxu0 0
      %1474 = vmatpush1.bf16.msra.mxu0 0
      %1475 = vmatprep.subr.bf16.mxu0 0
      %1476 = vmatpush1.bf16.msra.mxu0 0
      %1477 = vmatprep.subr.bf16.mxu0 0
      %1478 = vmatpush1.bf16.msra.mxu0 0
      %1479 = vmatprep.subr.bf16.mxu0 0
      %1480 = vmatpush1.bf16.msra.mxu0 0
      %1481 = vmatprep.subr.bf16.mxu0 0
      %1482 = vmatpush1.bf16.msra.mxu0 0
      %1483 = vmatprep.subr.bf16.mxu0 0
      %1484 = vmatpush1.bf16.msra.mxu0 0
      %1485 = vmatprep.subr.bf16.mxu0 0
      %1486 = vmatpush1.bf16.msra.mxu0 0
      %1487 = vmatprep.subr.bf16.mxu0 0
      %1488 = vmatpush1.bf16.msra.mxu0 0
      %1489 = vmatprep.subr.bf16.mxu0 0
      %1490 = vmatpush1.bf16.msra.mxu0 0
      %1491 = vmatprep.subr.bf16.mxu0 0
      %1492 = vmatpush1.bf16.msra.mxu0 0
      %1493 = vmatprep.subr.bf16.mxu0 0
      %1494 = vmatpush1.bf16.msra.mxu0 0
      %1495 = vmatprep.subr.bf16.mxu0 0
      %1496 = vmatpush1.bf16.msra.mxu0 0
      %1497 = vmatprep.mubr.bf16.mxu0 0
      %1498 = vmatmul.mubr.bf16.gmra.mrb[0].mxu0 %v1454
      %v1499 = vpop.f32.mrb[0].mxu0
      %v1500 = vadd.f32 0.0, %v1499
      %v1501 = vpop.f32.mrb[0].mxu0
      %v1502 = vadd.f32 0.0, %v1501
      %v1503 = vpop.f32.mrb[0].mxu0
      %v1504 = vpop.f32.mrb[0].mxu0
      %1505 = vdwg.mxu0
      %1506 = vmatprep.subr.bf16.mxu0 0
      %1507 = vmatpush1.bf16.msra.mxu0 %v1463
      %1508 = vmatprep.subr.bf16.mxu0 0
      %1509 = vmatpush1.bf16.msra.mxu0 0
      %1510 = vmatprep.subr.bf16.mxu0 0
      %1511 = vmatpush1.bf16.msra.mxu0 0
      %1512 = vmatprep.subr.bf16.mxu0 0
      %1513 = vmatpush1.bf16.msra.mxu0 0
      %1514 = vmatprep.subr.bf16.mxu0 0
      %1515 = vmatpush1.bf16.msra.mxu0 0
      %1516 = vmatprep.subr.bf16.mxu0 0
      %1517 = vmatpush1.bf16.msra.mxu0 0
      %1518 = vmatprep.subr.bf16.mxu0 0
      %1519 = vmatpush1.bf16.msra.mxu0 0
      %1520 = vmatprep.subr.bf16.mxu0 0
      %1521 = vmatpush1.bf16.msra.mxu0 0
      %1522 = vmatprep.subr.bf16.mxu0 0
      %1523 = vmatpush1.bf16.msra.mxu0 0
      %1524 = vmatprep.subr.bf16.mxu0 0
      %1525 = vmatpush1.bf16.msra.mxu0 0
      %1526 = vmatprep.subr.bf16.mxu0 0
      %1527 = vmatpush1.bf16.msra.mxu0 0
      %1528 = vmatprep.subr.bf16.mxu0 0
      %1529 = vmatpush1.bf16.msra.mxu0 0
      %1530 = vmatprep.subr.bf16.mxu0 0
      %1531 = vmatpush1.bf16.msra.mxu0 0
      %1532 = vmatprep.subr.bf16.mxu0 0
      %1533 = vmatpush1.bf16.msra.mxu0 0
      %1534 = vmatprep.subr.bf16.mxu0 0
      %1535 = vmatpush1.bf16.msra.mxu0 0
      %1536 = vmatprep.subr.bf16.mxu0 0
      %1537 = vmatpush1.bf16.msra.mxu0 0
      %1538 = vmatprep.mubr.bf16.mxu0 0
      %1539 = vmatmul.mubr.bf16.gmra.mrb[0].mxu0 %v1454
      %v1540 = vpop.f32.mrb[0].mxu0
      %v1541 = vadd.f32 0.0, %v1540
      %v1542 = vpop.f32.mrb[0].mxu0
      %v1543 = vpop.f32.mrb[0].mxu0
      %v1544 = vpop.f32.mrb[0].mxu0
      %1545 = vdwg.mxu0
      %v1546 = vadd.f32 %v1422, %v1500
      %v1547 = vadd.f32 %v1423, %v1502
      %v1548 = vadd.f32 %v1424, %v1541
      %s1549 = scalar_lea.vmem %s2, 10
      %v1550 = vld [vmem:[%s1549] sm:$0x3]
      %v1551 = vld [vmem:[%s315] sm:$0x3f]
      %v1553 = vcombine.high %v1551, %v1551
      %v1555 = vunpack.c.l.s4 1983009808
      %v1556 = vunpack.c.0.s8 %v1555
      %v1557 = vlaneseq
      %v1558 = vshrl.u32 %v1557, 7
      %v1559 = vsub.s32 %v1556, %v1558
      %v1560 = vrot.slane %v1551, %v1559
      %v1562 = vunpack.c.l.s4 1983009808
      %v1563 = vunpack.c.0.s8 %v1562
      %v1564 = vlaneseq
      %v1565 = vshrl.u32 %v1564, 7
      %v1566 = vsub.s32 %v1563, %v1565
      %v1567 = vrot.slane %v1553, %v1566
      %v1568 = vcombine.high %v1560, %v1560
      %1569 = vrot.lane.b32.xlu0 %v1560, 108
      %v1570 = vpop.permute.xlu0 %1569
      %1571 = vrot.lane.b32.xlu0 %v1568, 108
      %v1572 = vpop.permute.xlu0 %1571
      %1573 = vrot.lane.b32.xlu0 %v1567, 108
      %v1574 = vpop.permute.xlu0 %1573
      %vm1575 = vcmask 883712
      %v1576 = vsel %vm1575, %v1570, %v1572
      %v1577 = vsel %vm1575, %v1572, %v1574
      %v1579 = vsel %vm348, %v1550, 0
      %v1582 = vsel %vm352, %v1576, 0
      %v1585 = vsel %vm352, %v1577, 0
      %v1588 = vsel %vm352, %v1574, 0
      %1590 = vmatprep.subr.bf16.mxu0 %v1585
      %1591 = vmatpush1.bf16.msra.mxu0 %v1582
      %1592 = vmatprep.subr.bf16.mxu0 0
      %1593 = vmatpush1.bf16.msra.mxu0 0
      %1594 = vmatprep.subr.bf16.mxu0 0
      %1595 = vmatpush1.bf16.msra.mxu0 0
      %1596 = vmatprep.subr.bf16.mxu0 0
      %1597 = vmatpush1.bf16.msra.mxu0 0
      %1598 = vmatprep.subr.bf16.mxu0 0
      %1599 = vmatpush1.bf16.msra.mxu0 0
      %1600 = vmatprep.subr.bf16.mxu0 0
      %1601 = vmatpush1.bf16.msra.mxu0 0
      %1602 = vmatprep.subr.bf16.mxu0 0
      %1603 = vmatpush1.bf16.msra.mxu0 0
      %1604 = vmatprep.subr.bf16.mxu0 0
      %1605 = vmatpush1.bf16.msra.mxu0 0
      %1606 = vmatprep.subr.bf16.mxu0 0
      %1607 = vmatpush1.bf16.msra.mxu0 0
      %1608 = vmatprep.subr.bf16.mxu0 0
      %1609 = vmatpush1.bf16.msra.mxu0 0
      %1610 = vmatprep.subr.bf16.mxu0 0
      %1611 = vmatpush1.bf16.msra.mxu0 0
      %1612 = vmatprep.subr.bf16.mxu0 0
      %1613 = vmatpush1.bf16.msra.mxu0 0
      %1614 = vmatprep.subr.bf16.mxu0 0
      %1615 = vmatpush1.bf16.msra.mxu0 0
      %1616 = vmatprep.subr.bf16.mxu0 0
      %1617 = vmatpush1.bf16.msra.mxu0 0
      %1618 = vmatprep.subr.bf16.mxu0 0
      %1619 = vmatpush1.bf16.msra.mxu0 0
      %1620 = vmatprep.subr.bf16.mxu0 0
      %1621 = vmatpush1.bf16.msra.mxu0 0
      %1622 = vmatprep.mubr.bf16.mxu0 0
      %1623 = vmatmul.mubr.bf16.gmra.mrb[0].mxu0 %v1579
      %v1624 = vpop.f32.mrb[0].mxu0
      %v1625 = vadd.f32 0.0, %v1624
      %v1626 = vpop.f32.mrb[0].mxu0
      %v1627 = vadd.f32 0.0, %v1626
      %v1628 = vpop.f32.mrb[0].mxu0
      %v1629 = vpop.f32.mrb[0].mxu0
      %1630 = vdwg.mxu0
      %1631 = vmatprep.subr.bf16.mxu0 0
      %1632 = vmatpush1.bf16.msra.mxu0 %v1588
      %1633 = vmatprep.subr.bf16.mxu0 0
      %1634 = vmatpush1.bf16.msra.mxu0 0
      %1635 = vmatprep.subr.bf16.mxu0 0
      %1636 = vmatpush1.bf16.msra.mxu0 0
      %1637 = vmatprep.subr.bf16.mxu0 0
      %1638 = vmatpush1.bf16.msra.mxu0 0
      %1639 = vmatprep.subr.bf16.mxu0 0
      %1640 = vmatpush1.bf16.msra.mxu0 0
      %1641 = vmatprep.subr.bf16.mxu0 0
      %1642 = vmatpush1.bf16.msra.mxu0 0
      %1643 = vmatprep.subr.bf16.mxu0 0
      %1644 = vmatpush1.bf16.msra.mxu0 0
      %1645 = vmatprep.subr.bf16.mxu0 0
      %1646 = vmatpush1.bf16.msra.mxu0 0
      %1647 = vmatprep.subr.bf16.mxu0 0
      %1648 = vmatpush1.bf16.msra.mxu0 0
      %1649 = vmatprep.subr.bf16.mxu0 0
      %1650 = vmatpush1.bf16.msra.mxu0 0
      %1651 = vmatprep.subr.bf16.mxu0 0
      %1652 = vmatpush1.bf16.msra.mxu0 0
      %1653 = vmatprep.subr.bf16.mxu0 0
      %1654 = vmatpush1.bf16.msra.mxu0 0
      %1655 = vmatprep.subr.bf16.mxu0 0
      %1656 = vmatpush1.bf16.msra.mxu0 0
      %1657 = vmatprep.subr.bf16.mxu0 0
      %1658 = vmatpush1.bf16.msra.mxu0 0
      %1659 = vmatprep.subr.bf16.mxu0 0
      %1660 = vmatpush1.bf16.msra.mxu0 0
      %1661 = vmatprep.subr.bf16.mxu0 0
      %1662 = vmatpush1.bf16.msra.mxu0 0
      %1663 = vmatprep.mubr.bf16.mxu0 0
      %1664 = vmatmul.mubr.bf16.gmra.mrb[0].mxu0 %v1579
      %v1665 = vpop.f32.mrb[0].mxu0
      %v1666 = vadd.f32 0.0, %v1665
      %v1667 = vpop.f32.mrb[0].mxu0
      %v1668 = vpop.f32.mrb[0].mxu0
      %v1669 = vpop.f32.mrb[0].mxu0
      %1670 = vdwg.mxu0
      %v1671 = vadd.f32 %v1546, %v1625
      %v1672 = vadd.f32 %v1547, %v1627
      %v1673 = vadd.f32 %v1548, %v1666
      %s1674 = scalar_lea.vmem %s3, 10
      %v1675 = vld [vmem:[%s1674] sm:$0x3]
      %v1676 = vld [vmem:[%s320] sm:$0x3f]
      %v1678 = vcombine.high %v1676, %v1676
      %v1680 = vunpack.c.l.s4 1983009808
      %v1681 = vunpack.c.0.s8 %v1680
      %v1682 = vlaneseq
      %v1683 = vshrl.u32 %v1682, 7
      %v1684 = vsub.s32 %v1681, %v1683
      %v1685 = vrot.slane %v1676, %v1684
      %v1687 = vunpack.c.l.s4 1983009808
      %v1688 = vunpack.c.0.s8 %v1687
      %v1689 = vlaneseq
      %v1690 = vshrl.u32 %v1689, 7
      %v1691 = vsub.s32 %v1688, %v1690
      %v1692 = vrot.slane %v1678, %v1691
      %v1693 = vcombine.high %v1685, %v1685
      %1694 = vrot.lane.b32.xlu0 %v1685, 108
      %v1695 = vpop.permute.xlu0 %1694
      %1696 = vrot.lane.b32.xlu0 %v1693, 108
      %v1697 = vpop.permute.xlu0 %1696
      %1698 = vrot.lane.b32.xlu0 %v1692, 108
      %v1699 = vpop.permute.xlu0 %1698
      %v1700 = vsel %vm1575, %v1695, %v1697
      %v1701 = vsel %vm1575, %v1697, %v1699
      %v1703 = vsel %vm348, %v1675, 0
      %v1706 = vsel %vm352, %v1700, 0
      %v1709 = vsel %vm352, %v1701, 0
      %v1712 = vsel %vm352, %v1699, 0
      %1714 = vmatprep.subr.bf16.mxu0 %v1709
      %1715 = vmatpush1.bf16.msra.mxu0 %v1706
      %1716 = vmatprep.subr.bf16.mxu0 0
      %1717 = vmatpush1.bf16.msra.mxu0 0
      %1718 = vmatprep.subr.bf16.mxu0 0
      %1719 = vmatpush1.bf16.msra.mxu0 0
      %1720 = vmatprep.subr.bf16.mxu0 0
      %1721 = vmatpush1.bf16.msra.mxu0 0
      %1722 = vmatprep.subr.bf16.mxu0 0
      %1723 = vmatpush1.bf16.msra.mxu0 0
      %1724 = vmatprep.subr.bf16.mxu0 0
      %1725 = vmatpush1.bf16.msra.mxu0 0
      %1726 = vmatprep.subr.bf16.mxu0 0
      %1727 = vmatpush1.bf16.msra.mxu0 0
      %1728 = vmatprep.subr.bf16.mxu0 0
      %1729 = vmatpush1.bf16.msra.mxu0 0
      %1730 = vmatprep.subr.bf16.mxu0 0
      %1731 = vmatpush1.bf16.msra.mxu0 0
      %1732 = vmatprep.subr.bf16.mxu0 0
      %1733 = vmatpush1.bf16.msra.mxu0 0
      %1734 = vmatprep.subr.bf16.mxu0 0
      %1735 = vmatpush1.bf16.msra.mxu0 0
      %1736 = vmatprep.subr.bf16.mxu0 0
      %1737 = vmatpush1.bf16.msra.mxu0 0
      %1738 = vmatprep.subr.bf16.mxu0 0
      %1739 = vmatpush1.bf16.msra.mxu0 0
      %1740 = vmatprep.subr.bf16.mxu0 0
      %1741 = vmatpush1.bf16.msra.mxu0 0
      %1742 = vmatprep.subr.bf16.mxu0 0
      %1743 = vmatpush1.bf16.msra.mxu0 0
      %1744 = vmatprep.subr.bf16.mxu0 0
      %1745 = vmatpush1.bf16.msra.mxu0 0
      %1746 = vmatprep.mubr.bf16.mxu0 0
      %1747 = vmatmul.mubr.bf16.gmra.mrb[0].mxu0 %v1703
      %v1748 = vpop.f32.mrb[0].mxu0
      %v1749 = vadd.f32 0.0, %v1748
      %v1750 = vpop.f32.mrb[0].mxu0
      %v1751 = vadd.f32 0.0, %v1750
      %v1752 = vpop.f32.mrb[0].mxu0
      %v1753 = vpop.f32.mrb[0].mxu0
      %1754 = vdwg.mxu0
      %1755 = vmatprep.subr.bf16.mxu0 0
      %1756 = vmatpush1.bf16.msra.mxu0 %v1712
      %1757 = vmatprep.subr.bf16.mxu0 0
      %1758 = vmatpush1.bf16.msra.mxu0 0
      %1759 = vmatprep.subr.bf16.mxu0 0
      %1760 = vmatpush1.bf16.msra.mxu0 0
      %1761 = vmatprep.subr.bf16.mxu0 0
      %1762 = vmatpush1.bf16.msra.mxu0 0
      %1763 = vmatprep.subr.bf16.mxu0 0
      %1764 = vmatpush1.bf16.msra.mxu0 0
      %1765 = vmatprep.subr.bf16.mxu0 0
      %1766 = vmatpush1.bf16.msra.mxu0 0
      %1767 = vmatprep.subr.bf16.mxu0 0
      %1768 = vmatpush1.bf16.msra.mxu0 0
      %1769 = vmatprep.subr.bf16.mxu0 0
      %1770 = vmatpush1.bf16.msra.mxu0 0
      %1771 = vmatprep.subr.bf16.mxu0 0
      %1772 = vmatpush1.bf16.msra.mxu0 0
      %1773 = vmatprep.subr.bf16.mxu0 0
      %1774 = vmatpush1.bf16.msra.mxu0 0
      %1775 = vmatprep.subr.bf16.mxu0 0
      %1776 = vmatpush1.bf16.msra.mxu0 0
      %1777 = vmatprep.subr.bf16.mxu0 0
      %1778 = vmatpush1.bf16.msra.mxu0 0
      %1779 = vmatprep.subr.bf16.mxu0 0
      %1780 = vmatpush1.bf16.msra.mxu0 0
      %1781 = vmatprep.subr.bf16.mxu0 0
      %1782 = vmatpush1.bf16.msra.mxu0 0
      %1783 = vmatprep.subr.bf16.mxu0 0
      %1784 = vmatpush1.bf16.msra.mxu0 0
      %1785 = vmatprep.subr.bf16.mxu0 0
      %1786 = vmatpush1.bf16.msra.mxu0 0
      %1787 = vmatprep.mubr.bf16.mxu0 0
      %1788 = vmatmul.mubr.bf16.gmra.mrb[0].mxu0 %v1703
      %v1789 = vpop.f32.mrb[0].mxu0
      %v1790 = vadd.f32 0.0, %v1789
      %v1791 = vpop.f32.mrb[0].mxu0
      %v1792 = vpop.f32.mrb[0].mxu0
      %v1793 = vpop.f32.mrb[0].mxu0
      %1794 = vdwg.mxu0
      %v1795 = vadd.f32 %v1671, %v1749
      %v1796 = vadd.f32 %v1672, %v1751
      %v1797 = vadd.f32 %v1673, %v1790
      %s1798 = scalar_lea.vmem %s2, 12
      %v1799 = vld [vmem:[%s1798] sm:$0x3]
      %v1800 = vld [vmem:[%s315] sm:$0x3f]
      %v1802 = vcombine.high %v1800, %v1800
      %v1804 = vunpack.c.l.s4 1983009808
      %v1805 = vunpack.c.0.s8 %v1804
      %v1806 = vlaneseq
      %v1807 = vshrl.u32 %v1806, 7
      %v1808 = vsub.s32 %v1805, %v1807
      %v1809 = vrot.slane %v1800, %v1808
      %v1811 = vunpack.c.l.s4 1983009808
      %v1812 = vunpack.c.0.s8 %v1811
      %v1813 = vlaneseq
      %v1814 = vshrl.u32 %v1813, 7
      %v1815 = vsub.s32 %v1812, %v1814
      %v1816 = vrot.slane %v1802, %v1815
      %v1817 = vcombine.high %v1809, %v1809
      %1818 = vrot.lane.b32.xlu0 %v1809, 92
      %v1819 = vpop.permute.xlu0 %1818
      %1820 = vrot.lane.b32.xlu0 %v1817, 92
      %v1821 = vpop.permute.xlu0 %1820
      %1822 = vrot.lane.b32.xlu0 %v1816, 92
      %v1823 = vpop.permute.xlu0 %1822
      %vm1824 = vcmask 752640
      %v1825 = vsel %vm1824, %v1819, %v1821
      %v1826 = vsel %vm1824, %v1821, %v1823
      %v1828 = vsel %vm348, %v1799, 0
      %v1831 = vsel %vm352, %v1825, 0
      %v1834 = vsel %vm352, %v1826, 0
      %v1837 = vsel %vm352, %v1823, 0
      %1839 = vmatprep.subr.bf16.mxu0 %v1834
      %1840 = vmatpush1.bf16.msra.mxu0 %v1831
      %1841 = vmatprep.subr.bf16.mxu0 0
      %1842 = vmatpush1.bf16.msra.mxu0 0
      %1843 = vmatprep.subr.bf16.mxu0 0
      %1844 = vmatpush1.bf16.msra.mxu0 0
      %1845 = vmatprep.subr.bf16.mxu0 0
      %1846 = vmatpush1.bf16.msra.mxu0 0
      %1847 = vmatprep.subr.bf16.mxu0 0
      %1848 = vmatpush1.bf16.msra.mxu0 0
      %1849 = vmatprep.subr.bf16.mxu0 0
      %1850 = vmatpush1.bf16.msra.mxu0 0
      %1851 = vmatprep.subr.bf16.mxu0 0
      %1852 = vmatpush1.bf16.msra.mxu0 0
      %1853 = vmatprep.subr.bf16.mxu0 0
      %1854 = vmatpush1.bf16.msra.mxu0 0
      %1855 = vmatprep.subr.bf16.mxu0 0
      %1856 = vmatpush1.bf16.msra.mxu0 0
      %1857 = vmatprep.subr.bf16.mxu0 0
      %1858 = vmatpush1.bf16.msra.mxu0 0
      %1859 = vmatprep.subr.bf16.mxu0 0
      %1860 = vmatpush1.bf16.msra.mxu0 0
      %1861 = vmatprep.subr.bf16.mxu0 0
      %1862 = vmatpush1.bf16.msra.mxu0 0
      %1863 = vmatprep.subr.bf16.mxu0 0
      %1864 = vmatpush1.bf16.msra.mxu0 0
      %1865 = vmatprep.subr.bf16.mxu0 0
      %1866 = vmatpush1.bf16.msra.mxu0 0
      %1867 = vmatprep.subr.bf16.mxu0 0
      %1868 = vmatpush1.bf16.msra.mxu0 0
      %1869 = vmatprep.subr.bf16.mxu0 0
      %1870 = vmatpush1.bf16.msra.mxu0 0
      %1871 = vmatprep.mubr.bf16.mxu0 0
      %1872 = vmatmul.mubr.bf16.gmra.mrb[0].mxu0 %v1828
      %v1873 = vpop.f32.mrb[0].mxu0
      %v1874 = vadd.f32 0.0, %v1873
      %v1875 = vpop.f32.mrb[0].mxu0
      %v1876 = vadd.f32 0.0, %v1875
      %v1877 = vpop.f32.mrb[0].mxu0
      %v1878 = vpop.f32.mrb[0].mxu0
      %1879 = vdwg.mxu0
      %1880 = vmatprep.subr.bf16.mxu0 0
      %1881 = vmatpush1.bf16.msra.mxu0 %v1837
      %1882 = vmatprep.subr.bf16.mxu0 0
      %1883 = vmatpush1.bf16.msra.mxu0 0
      %1884 = vmatprep.subr.bf16.mxu0 0
      %1885 = vmatpush1.bf16.msra.mxu0 0
      %1886 = vmatprep.subr.bf16.mxu0 0
      %1887 = vmatpush1.bf16.msra.mxu0 0
      %1888 = vmatprep.subr.bf16.mxu0 0
      %1889 = vmatpush1.bf16.msra.mxu0 0
      %1890 = vmatprep.subr.bf16.mxu0 0
      %1891 = vmatpush1.bf16.msra.mxu0 0
      %1892 = vmatprep.subr.bf16.mxu0 0
      %1893 = vmatpush1.bf16.msra.mxu0 0
      %1894 = vmatprep.subr.bf16.mxu0 0
      %1895 = vmatpush1.bf16.msra.mxu0 0
      %1896 = vmatprep.subr.bf16.mxu0 0
      %1897 = vmatpush1.bf16.msra.mxu0 0
      %1898 = vmatprep.subr.bf16.mxu0 0
      %1899 = vmatpush1.bf16.msra.mxu0 0
      %1900 = vmatprep.subr.bf16.mxu0 0
      %1901 = vmatpush1.bf16.msra.mxu0 0
      %1902 = vmatprep.subr.bf16.mxu0 0
      %1903 = vmatpush1.bf16.msra.mxu0 0
      %1904 = vmatprep.subr.bf16.mxu0 0
      %1905 = vmatpush1.bf16.msra.mxu0 0
      %1906 = vmatprep.subr.bf16.mxu0 0
      %1907 = vmatpush1.bf16.msra.mxu0 0
      %1908 = vmatprep.subr.bf16.mxu0 0
      %1909 = vmatpush1.bf16.msra.mxu0 0
      %1910 = vmatprep.subr.bf16.mxu0 0
      %1911 = vmatpush1.bf16.msra.mxu0 0
      %1912 = vmatprep.mubr.bf16.mxu0 0
      %1913 = vmatmul.mubr.bf16.gmra.mrb[0].mxu0 %v1828
      %v1914 = vpop.f32.mrb[0].mxu0
      %v1915 = vadd.f32 0.0, %v1914
      %v1916 = vpop.f32.mrb[0].mxu0
      %v1917 = vpop.f32.mrb[0].mxu0
      %v1918 = vpop.f32.mrb[0].mxu0
      %1919 = vdwg.mxu0
      %v1920 = vadd.f32 %v1795, %v1874
      %v1921 = vadd.f32 %v1796, %v1876
      %v1922 = vadd.f32 %v1797, %v1915
      %s1923 = scalar_lea.vmem %s3, 12
      %v1924 = vld [vmem:[%s1923] sm:$0x3]
      %v1925 = vld [vmem:[%s320] sm:$0x3f]
      %v1927 = vcombine.high %v1925, %v1925
      %v1929 = vunpack.c.l.s4 1983009808
      %v1930 = vunpack.c.0.s8 %v1929
      %v1931 = vlaneseq
      %v1932 = vshrl.u32 %v1931, 7
      %v1933 = vsub.s32 %v1930, %v1932
      %v1934 = vrot.slane %v1925, %v1933
      %v1936 = vunpack.c.l.s4 1983009808
      %v1937 = vunpack.c.0.s8 %v1936
      %v1938 = vlaneseq
      %v1939 = vshrl.u32 %v1938, 7
      %v1940 = vsub.s32 %v1937, %v1939
      %v1941 = vrot.slane %v1927, %v1940
      %v1942 = vcombine.high %v1934, %v1934
      %1943 = vrot.lane.b32.xlu0 %v1934, 92
      %v1944 = vpop.permute.xlu0 %1943
      %1945 = vrot.lane.b32.xlu0 %v1942, 92
      %v1946 = vpop.permute.xlu0 %1945
      %1947 = vrot.lane.b32.xlu0 %v1941, 92
      %v1948 = vpop.permute.xlu0 %1947
      %v1949 = vsel %vm1824, %v1944, %v1946
      %v1950 = vsel %vm1824, %v1946, %v1948
      %v1952 = vsel %vm348, %v1924, 0
      %v1955 = vsel %vm352, %v1949, 0
      %v1958 = vsel %vm352, %v1950, 0
      %v1961 = vsel %vm352, %v1948, 0
      %1963 = vmatprep.subr.bf16.mxu0 %v1958
      %1964 = vmatpush1.bf16.msra.mxu0 %v1955
      %1965 = vmatprep.subr.bf16.mxu0 0
      %1966 = vmatpush1.bf16.msra.mxu0 0
      %1967 = vmatprep.subr.bf16.mxu0 0
      %1968 = vmatpush1.bf16.msra.mxu0 0
      %1969 = vmatprep.subr.bf16.mxu0 0
      %1970 = vmatpush1.bf16.msra.mxu0 0
      %1971 = vmatprep.subr.bf16.mxu0 0
      %1972 = vmatpush1.bf16.msra.mxu0 0
      %1973 = vmatprep.subr.bf16.mxu0 0
      %1974 = vmatpush1.bf16.msra.mxu0 0
      %1975 = vmatprep.subr.bf16.mxu0 0
      %1976 = vmatpush1.bf16.msra.mxu0 0
      %1977 = vmatprep.subr.bf16.mxu0 0
      %1978 = vmatpush1.bf16.msra.mxu0 0
      %1979 = vmatprep.subr.bf16.mxu0 0
      %1980 = vmatpush1.bf16.msra.mxu0 0
      %1981 = vmatprep.subr.bf16.mxu0 0
      %1982 = vmatpush1.bf16.msra.mxu0 0
      %1983 = vmatprep.subr.bf16.mxu0 0
      %1984 = vmatpush1.bf16.msra.mxu0 0
      %1985 = vmatprep.subr.bf16.mxu0 0
      %1986 = vmatpush1.bf16.msra.mxu0 0
      %1987 = vmatprep.subr.bf16.mxu0 0
      %1988 = vmatpush1.bf16.msra.mxu0 0
      %1989 = vmatprep.subr.bf16.mxu0 0
      %1990 = vmatpush1.bf16.msra.mxu0 0
      %1991 = vmatprep.subr.bf16.mxu0 0
      %1992 = vmatpush1.bf16.msra.mxu0 0
      %1993 = vmatprep.subr.bf16.mxu0 0
      %1994 = vmatpush1.bf16.msra.mxu0 0
      %1995 = vmatprep.mubr.bf16.mxu0 0
      %1996 = vmatmul.mubr.bf16.gmra.mrb[0].mxu0 %v1952
      %v1997 = vpop.f32.mrb[0].mxu0
      %v1998 = vadd.f32 0.0, %v1997
      %v1999 = vpop.f32.mrb[0].mxu0
      %v2000 = vadd.f32 0.0, %v1999
      %v2001 = vpop.f32.mrb[0].mxu0
      %v2002 = vpop.f32.mrb[0].mxu0
      %2003 = vdwg.mxu0
      %2004 = vmatprep.subr.bf16.mxu0 0
      %2005 = vmatpush1.bf16.msra.mxu0 %v1961
      %2006 = vmatprep.subr.bf16.mxu0 0
      %2007 = vmatpush1.bf16.msra.mxu0 0
      %2008 = vmatprep.subr.bf16.mxu0 0
      %2009 = vmatpush1.bf16.msra.mxu0 0
      %2010 = vmatprep.subr.bf16.mxu0 0
      %2011 = vmatpush1.bf16.msra.mxu0 0
      %2012 = vmatprep.subr.bf16.mxu0 0
      %2013 = vmatpush1.bf16.msra.mxu0 0
      %2014 = vmatprep.subr.bf16.mxu0 0
      %2015 = vmatpush1.bf16.msra.mxu0 0
      %2016 = vmatprep.subr.bf16.mxu0 0
      %2017 = vmatpush1.bf16.msra.mxu0 0
      %2018 = vmatprep.subr.bf16.mxu0 0
      %2019 = vmatpush1.bf16.msra.mxu0 0
      %2020 = vmatprep.subr.bf16.mxu0 0
      %2021 = vmatpush1.bf16.msra.mxu0 0
      %2022 = vmatprep.subr.bf16.mxu0 0
      %2023 = vmatpush1.bf16.msra.mxu0 0
      %2024 = vmatprep.subr.bf16.mxu0 0
      %2025 = vmatpush1.bf16.msra.mxu0 0
      %2026 = vmatprep.subr.bf16.mxu0 0
      %2027 = vmatpush1.bf16.msra.mxu0 0
      %2028 = vmatprep.subr.bf16.mxu0 0
      %2029 = vmatpush1.bf16.msra.mxu0 0
      %2030 = vmatprep.subr.bf16.mxu0 0
      %2031 = vmatpush1.bf16.msra.mxu0 0
      %2032 = vmatprep.subr.bf16.mxu0 0
      %2033 = vmatpush1.bf16.msra.mxu0 0
      %2034 = vmatprep.subr.bf16.mxu0 0
      %2035 = vmatpush1.bf16.msra.mxu0 0
      %2036 = vmatprep.mubr.bf16.mxu0 0
      %2037 = vmatmul.mubr.bf16.gmra.mrb[0].mxu0 %v1952
      %v2038 = vpop.f32.mrb[0].mxu0
      %v2039 = vadd.f32 0.0, %v2038
      %v2040 = vpop.f32.mrb[0].mxu0
      %v2041 = vpop.f32.mrb[0].mxu0
      %v2042 = vpop.f32.mrb[0].mxu0
      %2043 = vdwg.mxu0
      %v2044 = vadd.f32 %v1920, %v1998
      %v2045 = vadd.f32 %v1921, %v2000
      %v2046 = vadd.f32 %v1922, %v2039
      %s2047 = scalar_lea.vmem %s2, 14
      %v2048 = vld [vmem:[%s2047] sm:$0x3]
      %v2049 = vld [vmem:[%s315] sm:$0x3f]
      %v2051 = vcombine.high %v2049, %v2049
      %v2053 = vunpack.c.l.s4 1983009808
      %v2054 = vunpack.c.0.s8 %v2053
      %v2055 = vlaneseq
      %v2056 = vshrl.u32 %v2055, 7
      %v2057 = vsub.s32 %v2054, %v2056
      %v2058 = vrot.slane %v2049, %v2057
      %v2060 = vunpack.c.l.s4 1983009808
      %v2061 = vunpack.c.0.s8 %v2060
      %v2062 = vlaneseq
      %v2063 = vshrl.u32 %v2062, 7
      %v2064 = vsub.s32 %v2061, %v2063
      %v2065 = vrot.slane %v2051, %v2064
      %v2066 = vcombine.high %v2058, %v2058
      %2067 = vrot.lane.b32.xlu0 %v2058, 91
      %v2068 = vpop.permute.xlu0 %2067
      %2069 = vrot.lane.b32.xlu0 %v2066, 91
      %v2070 = vpop.permute.xlu0 %2069
      %2071 = vrot.lane.b32.xlu0 %v2065, 91
      %v2072 = vpop.permute.xlu0 %2071
      %vm2073 = vcmask 744448
      %v2074 = vsel %vm2073, %v2068, %v2070
      %v2075 = vsel %vm2073, %v2070, %v2072
      %v2077 = vsel %vm348, %v2048, 0
      %v2080 = vsel %vm352, %v2074, 0
      %v2083 = vsel %vm352, %v2075, 0
      %v2086 = vsel %vm352, %v2072, 0
      %2088 = vmatprep.subr.bf16.mxu0 %v2083
      %2089 = vmatpush1.bf16.msra.mxu0 %v2080
      %2090 = vmatprep.subr.bf16.mxu0 0
      %2091 = vmatpush1.bf16.msra.mxu0 0
      %2092 = vmatprep.subr.bf16.mxu0 0
      %2093 = vmatpush1.bf16.msra.mxu0 0
      %2094 = vmatprep.subr.bf16.mxu0 0
      %2095 = vmatpush1.bf16.msra.mxu0 0
      %2096 = vmatprep.subr.bf16.mxu0 0
      %2097 = vmatpush1.bf16.msra.mxu0 0
      %2098 = vmatprep.subr.bf16.mxu0 0
      %2099 = vmatpush1.bf16.msra.mxu0 0
      %2100 = vmatprep.subr.bf16.mxu0 0
      %2101 = vmatpush1.bf16.msra.mxu0 0
      %2102 = vmatprep.subr.bf16.mxu0 0
      %2103 = vmatpush1.bf16.msra.mxu0 0
      %2104 = vmatprep.subr.bf16.mxu0 0
      %2105 = vmatpush1.bf16.msra.mxu0 0
      %2106 = vmatprep.subr.bf16.mxu0 0
      %2107 = vmatpush1.bf16.msra.mxu0 0
      %2108 = vmatprep.subr.bf16.mxu0 0
      %2109 = vmatpush1.bf16.msra.mxu0 0
      %2110 = vmatprep.subr.bf16.mxu0 0
      %2111 = vmatpush1.bf16.msra.mxu0 0
      %2112 = vmatprep.subr.bf16.mxu0 0
      %2113 = vmatpush1.bf16.msra.mxu0 0
      %2114 = vmatprep.subr.bf16.mxu0 0
      %2115 = vmatpush1.bf16.msra.mxu0 0
      %2116 = vmatprep.subr.bf16.mxu0 0
      %2117 = vmatpush1.bf16.msra.mxu0 0
      %2118 = vmatprep.subr.bf16.mxu0 0
      %2119 = vmatpush1.bf16.msra.mxu0 0
      %2120 = vmatprep.mubr.bf16.mxu0 0
      %2121 = vmatmul.mubr.bf16.gmra.mrb[0].mxu0 %v2077
      %v2122 = vpop.f32.mrb[0].mxu0
      %v2123 = vadd.f32 0.0, %v2122
      %v2124 = vpop.f32.mrb[0].mxu0
      %v2125 = vadd.f32 0.0, %v2124
      %v2126 = vpop.f32.mrb[0].mxu0
      %v2127 = vpop.f32.mrb[0].mxu0
      %2128 = vdwg.mxu0
      %2129 = vmatprep.subr.bf16.mxu0 0
      %2130 = vmatpush1.bf16.msra.mxu0 %v2086
      %2131 = vmatprep.subr.bf16.mxu0 0
      %2132 = vmatpush1.bf16.msra.mxu0 0
      %2133 = vmatprep.subr.bf16.mxu0 0
      %2134 = vmatpush1.bf16.msra.mxu0 0
      %2135 = vmatprep.subr.bf16.mxu0 0
      %2136 = vmatpush1.bf16.msra.mxu0 0
      %2137 = vmatprep.subr.bf16.mxu0 0
      %2138 = vmatpush1.bf16.msra.mxu0 0
      %2139 = vmatprep.subr.bf16.mxu0 0
      %2140 = vmatpush1.bf16.msra.mxu0 0
      %2141 = vmatprep.subr.bf16.mxu0 0
      %2142 = vmatpush1.bf16.msra.mxu0 0
      %2143 = vmatprep.subr.bf16.mxu0 0
      %2144 = vmatpush1.bf16.msra.mxu0 0
      %2145 = vmatprep.subr.bf16.mxu0 0
      %2146 = vmatpush1.bf16.msra.mxu0 0
      %2147 = vmatprep.subr.bf16.mxu0 0
      %2148 = vmatpush1.bf16.msra.mxu0 0
      %2149 = vmatprep.subr.bf16.mxu0 0
      %2150 = vmatpush1.bf16.msra.mxu0 0
      %2151 = vmatprep.subr.bf16.mxu0 0
      %2152 = vmatpush1.bf16.msra.mxu0 0
      %2153 = vmatprep.subr.bf16.mxu0 0
      %2154 = vmatpush1.bf16.msra.mxu0 0
      %2155 = vmatprep.subr.bf16.mxu0 0
      %2156 = vmatpush1.bf16.msra.mxu0 0
      %2157 = vmatprep.subr.bf16.mxu0 0
      %2158 = vmatpush1.bf16.msra.mxu0 0
      %2159 = vmatprep.subr.bf16.mxu0 0
      %2160 = vmatpush1.bf16.msra.mxu0 0
      %2161 = vmatprep.mubr.bf16.mxu0 0
      %2162 = vmatmul.mubr.bf16.gmra.mrb[0].mxu0 %v2077
      %v2163 = vpop.f32.mrb[0].mxu0
      %v2164 = vadd.f32 0.0, %v2163
      %v2165 = vpop.f32.mrb[0].mxu0
      %v2166 = vpop.f32.mrb[0].mxu0
      %v2167 = vpop.f32.mrb[0].mxu0
      %2168 = vdwg.mxu0
      %v2169 = vadd.f32 %v2044, %v2123
      %v2170 = vadd.f32 %v2045, %v2125
      %v2171 = vadd.f32 %v2046, %v2164
      %s2172 = scalar_lea.vmem %s3, 14
      %v2173 = vld [vmem:[%s2172] sm:$0x3]
      %v2174 = vld [vmem:[%s320] sm:$0x3f]
      %v2176 = vcombine.high %v2174, %v2174
      %v2178 = vunpack.c.l.s4 1983009808
      %v2179 = vunpack.c.0.s8 %v2178
      %v2180 = vlaneseq
      %v2181 = vshrl.u32 %v2180, 7
      %v2182 = vsub.s32 %v2179, %v2181
      %v2183 = vrot.slane %v2174, %v2182
      %v2185 = vunpack.c.l.s4 1983009808
      %v2186 = vunpack.c.0.s8 %v2185
      %v2187 = vlaneseq
      %v2188 = vshrl.u32 %v2187, 7
      %v2189 = vsub.s32 %v2186, %v2188
      %v2190 = vrot.slane %v2176, %v2189
      %v2191 = vcombine.high %v2183, %v2183
      %2192 = vrot.lane.b32.xlu0 %v2183, 91
      %v2193 = vpop.permute.xlu0 %2192
      %2194 = vrot.lane.b32.xlu0 %v2191, 91
      %v2195 = vpop.permute.xlu0 %2194
      %2196 = vrot.lane.b32.xlu0 %v2190, 91
      %v2197 = vpop.permute.xlu0 %2196
      %v2198 = vsel %vm2073, %v2193, %v2195
      %v2199 = vsel %vm2073, %v2195, %v2197
      %v2201 = vsel %vm348, %v2173, 0
      %v2204 = vsel %vm352, %v2198, 0
      %v2207 = vsel %vm352, %v2199, 0
      %v2210 = vsel %vm352, %v2197, 0
      %2212 = vmatprep.subr.bf16.mxu0 %v2207
      %2213 = vmatpush1.bf16.msra.mxu0 %v2204
      %2214 = vmatprep.subr.bf16.mxu0 0
      %2215 = vmatpush1.bf16.msra.mxu0 0
      %2216 = vmatprep.subr.bf16.mxu0 0
      %2217 = vmatpush1.bf16.msra.mxu0 0
      %2218 = vmatprep.subr.bf16.mxu0 0
      %2219 = vmatpush1.bf16.msra.mxu0 0
      %2220 = vmatprep.subr.bf16.mxu0 0
      %2221 = vmatpush1.bf16.msra.mxu0 0
      %2222 = vmatprep.subr.bf16.mxu0 0
      %2223 = vmatpush1.bf16.msra.mxu0 0
      %2224 = vmatprep.subr.bf16.mxu0 0
      %2225 = vmatpush1.bf16.msra.mxu0 0
      %2226 = vmatprep.subr.bf16.mxu0 0
      %2227 = vmatpush1.bf16.msra.mxu0 0
      %2228 = vmatprep.subr.bf16.mxu0 0
      %2229 = vmatpush1.bf16.msra.mxu0 0
      %2230 = vmatprep.subr.bf16.mxu0 0
      %2231 = vmatpush1.bf16.msra.mxu0 0
      %2232 = vmatprep.subr.bf16.mxu0 0
      %2233 = vmatpush1.bf16.msra.mxu0 0
      %2234 = vmatprep.subr.bf16.mxu0 0
      %2235 = vmatpush1.bf16.msra.mxu0 0
      %2236 = vmatprep.subr.bf16.mxu0 0
      %2237 = vmatpush1.bf16.msra.mxu0 0
      %2238 = vmatprep.subr.bf16.mxu0 0
      %2239 = vmatpush1.bf16.msra.mxu0 0
      %2240 = vmatprep.subr.bf16.mxu0 0
      %2241 = vmatpush1.bf16.msra.mxu0 0
      %2242 = vmatprep.subr.bf16.mxu0 0
      %2243 = vmatpush1.bf16.msra.mxu0 0
      %2244 = vmatprep.mubr.bf16.mxu0 0
      %2245 = vmatmul.mubr.bf16.gmra.mrb[0].mxu0 %v2201
      %v2246 = vpop.f32.mrb[0].mxu0
      %v2247 = vadd.f32 0.0, %v2246
      %v2248 = vpop.f32.mrb[0].mxu0
      %v2249 = vadd.f32 0.0, %v2248
      %v2250 = vpop.f32.mrb[0].mxu0
      %v2251 = vpop.f32.mrb[0].mxu0
      %2252 = vdwg.mxu0
      %2253 = vmatprep.subr.bf16.mxu0 0
      %2254 = vmatpush1.bf16.msra.mxu0 %v2210
      %2255 = vmatprep.subr.bf16.mxu0 0
      %2256 = vmatpush1.bf16.msra.mxu0 0
      %2257 = vmatprep.subr.bf16.mxu0 0
      %2258 = vmatpush1.bf16.msra.mxu0 0
      %2259 = vmatprep.subr.bf16.mxu0 0
      %2260 = vmatpush1.bf16.msra.mxu0 0
      %2261 = vmatprep.subr.bf16.mxu0 0
      %2262 = vmatpush1.bf16.msra.mxu0 0
      %2263 = vmatprep.subr.bf16.mxu0 0
      %2264 = vmatpush1.bf16.msra.mxu0 0
      %2265 = vmatprep.subr.bf16.mxu0 0
      %2266 = vmatpush1.bf16.msra.mxu0 0
      %2267 = vmatprep.subr.bf16.mxu0 0
      %2268 = vmatpush1.bf16.msra.mxu0 0
      %2269 = vmatprep.subr.bf16.mxu0 0
      %2270 = vmatpush1.bf16.msra.mxu0 0
      %2271 = vmatprep.subr.bf16.mxu0 0
      %2272 = vmatpush1.bf16.msra.mxu0 0
      %2273 = vmatprep.subr.bf16.mxu0 0
      %2274 = vmatpush1.bf16.msra.mxu0 0
      %2275 = vmatprep.subr.bf16.mxu0 0
      %2276 = vmatpush1.bf16.msra.mxu0 0
      %2277 = vmatprep.subr.bf16.mxu0 0
      %2278 = vmatpush1.bf16.msra.mxu0 0
      %2279 = vmatprep.subr.bf16.mxu0 0
      %2280 = vmatpush1.bf16.msra.mxu0 0
      %2281 = vmatprep.subr.bf16.mxu0 0
      %2282 = vmatpush1.bf16.msra.mxu0 0
      %2283 = vmatprep.subr.bf16.mxu0 0
      %2284 = vmatpush1.bf16.msra.mxu0 0
      %2285 = vmatprep.mubr.bf16.mxu0 0
      %2286 = vmatmul.mubr.bf16.gmra.mrb[0].mxu0 %v2201
      %v2287 = vpop.f32.mrb[0].mxu0
      %v2288 = vadd.f32 0.0, %v2287
      %v2289 = vpop.f32.mrb[0].mxu0
      %v2290 = vpop.f32.mrb[0].mxu0
      %v2291 = vpop.f32.mrb[0].mxu0
      %2292 = vdwg.mxu0
      %v2293 = vadd.f32 %v2169, %v2247
      %v2294 = vadd.f32 %v2170, %v2249
      %v2295 = vadd.f32 %v2171, %v2288
      %s2296 = scalar_lea.vmem %s2, 16
      %v2297 = vld [vmem:[%s2296] sm:$0x3]
      %v2298 = vld [vmem:[%s315] sm:$0x3f]
      %v2300 = vcombine.high %v2298, %v2298
      %v2302 = vunpack.c.l.s4 1983009808
      %v2303 = vunpack.c.0.s8 %v2302
      %v2304 = vlaneseq
      %v2305 = vshrl.u32 %v2304, 7
      %v2306 = vsub.s32 %v2303, %v2305
      %v2307 = vrot.slane %v2298, %v2306
      %v2309 = vunpack.c.l.s4 1983009808
      %v2310 = vunpack.c.0.s8 %v2309
      %v2311 = vlaneseq
      %v2312 = vshrl.u32 %v2311, 7
      %v2313 = vsub.s32 %v2310, %v2312
      %v2314 = vrot.slane %v2300, %v2313
      %v2315 = vcombine.high %v2307, %v2307
      %2316 = vrot.lane.b32.xlu0 %v2307, 90
      %v2317 = vpop.permute.xlu0 %2316
      %2318 = vrot.lane.b32.xlu0 %v2315, 90
      %v2319 = vpop.permute.xlu0 %2318
      %2320 = vrot.lane.b32.xlu0 %v2314, 90
      %v2321 = vpop.permute.xlu0 %2320
      %vm2322 = vcmask 736256
      %v2323 = vsel %vm2322, %v2317, %v2319
      %v2324 = vsel %vm2322, %v2319, %v2321
      %v2326 = vsel %vm348, %v2297, 0
      %v2329 = vsel %vm352, %v2323, 0
      %v2332 = vsel %vm352, %v2324, 0
      %v2335 = vsel %vm352, %v2321, 0
      %2337 = vmatprep.subr.bf16.mxu0 %v2332
      %2338 = vmatpush1.bf16.msra.mxu0 %v2329
      %2339 = vmatprep.subr.bf16.mxu0 0
      %2340 = vmatpush1.bf16.msra.mxu0 0
      %2341 = vmatprep.subr.bf16.mxu0 0
      %2342 = vmatpush1.bf16.msra.mxu0 0
      %2343 = vmatprep.subr.bf16.mxu0 0
      %2344 = vmatpush1.bf16.msra.mxu0 0
      %2345 = vmatprep.subr.bf16.mxu0 0
      %2346 = vmatpush1.bf16.msra.mxu0 0
      %2347 = vmatprep.subr.bf16.mxu0 0
      %2348 = vmatpush1.bf16.msra.mxu0 0
      %2349 = vmatprep.subr.bf16.mxu0 0
      %2350 = vmatpush1.bf16.msra.mxu0 0
      %2351 = vmatprep.subr.bf16.mxu0 0
      %2352 = vmatpush1.bf16.msra.mxu0 0
      %2353 = vmatprep.subr.bf16.mxu0 0
      %2354 = vmatpush1.bf16.msra.mxu0 0
      %2355 = vmatprep.subr.bf16.mxu0 0
      %2356 = vmatpush1.bf16.msra.mxu0 0
      %2357 = vmatprep.subr.bf16.mxu0 0
      %2358 = vmatpush1.bf16.msra.mxu0 0
      %2359 = vmatprep.subr.bf16.mxu0 0
      %2360 = vmatpush1.bf16.msra.mxu0 0
      %2361 = vmatprep.subr.bf16.mxu0 0
      %2362 = vmatpush1.bf16.msra.mxu0 0
      %2363 = vmatprep.subr.bf16.mxu0 0
      %2364 = vmatpush1.bf16.msra.mxu0 0
      %2365 = vmatprep.subr.bf16.mxu0 0
      %2366 = vmatpush1.bf16.msra.mxu0 0
      %2367 = vmatprep.subr.bf16.mxu0 0
      %2368 = vmatpush1.bf16.msra.mxu0 0
      %2369 = vmatprep.mubr.bf16.mxu0 0
      %2370 = vmatmul.mubr.bf16.gmra.mrb[0].mxu0 %v2326
      %v2371 = vpop.f32.mrb[0].mxu0
      %v2372 = vadd.f32 0.0, %v2371
      %v2373 = vpop.f32.mrb[0].mxu0
      %v2374 = vadd.f32 0.0, %v2373
      %v2375 = vpop.f32.mrb[0].mxu0
      %v2376 = vpop.f32.mrb[0].mxu0
      %2377 = vdwg.mxu0
      %2378 = vmatprep.subr.bf16.mxu0 0
      %2379 = vmatpush1.bf16.msra.mxu0 %v2335
      %2380 = vmatprep.subr.bf16.mxu0 0
      %2381 = vmatpush1.bf16.msra.mxu0 0
      %2382 = vmatprep.subr.bf16.mxu0 0
      %2383 = vmatpush1.bf16.msra.mxu0 0
      %2384 = vmatprep.subr.bf16.mxu0 0
      %2385 = vmatpush1.bf16.msra.mxu0 0
      %2386 = vmatprep.subr.bf16.mxu0 0
      %2387 = vmatpush1.bf16.msra.mxu0 0
      %2388 = vmatprep.subr.bf16.mxu0 0
      %2389 = vmatpush1.bf16.msra.mxu0 0
      %2390 = vmatprep.subr.bf16.mxu0 0
      %2391 = vmatpush1.bf16.msra.mxu0 0
      %2392 = vmatprep.subr.bf16.mxu0 0
      %2393 = vmatpush1.bf16.msra.mxu0 0
      %2394 = vmatprep.subr.bf16.mxu0 0
      %2395 = vmatpush1.bf16.msra.mxu0 0
      %2396 = vmatprep.subr.bf16.mxu0 0
      %2397 = vmatpush1.bf16.msra.mxu0 0
      %2398 = vmatprep.subr.bf16.mxu0 0
      %2399 = vmatpush1.bf16.msra.mxu0 0
      %2400 = vmatprep.subr.bf16.mxu0 0
      %2401 = vmatpush1.bf16.msra.mxu0 0
      %2402 = vmatprep.subr.bf16.mxu0 0
      %2403 = vmatpush1.bf16.msra.mxu0 0
      %2404 = vmatprep.subr.bf16.mxu0 0
      %2405 = vmatpush1.bf16.msra.mxu0 0
      %2406 = vmatprep.subr.bf16.mxu0 0
      %2407 = vmatpush1.bf16.msra.mxu0 0
      %2408 = vmatprep.subr.bf16.mxu0 0
      %2409 = vmatpush1.bf16.msra.mxu0 0
      %2410 = vmatprep.mubr.bf16.mxu0 0
      %2411 = vmatmul.mubr.bf16.gmra.mrb[0].mxu0 %v2326
      %v2412 = vpop.f32.mrb[0].mxu0
      %v2413 = vadd.f32 0.0, %v2412
      %v2414 = vpop.f32.mrb[0].mxu0
      %v2415 = vpop.f32.mrb[0].mxu0
      %v2416 = vpop.f32.mrb[0].mxu0
      %2417 = vdwg.mxu0
      %v2418 = vadd.f32 %v2293, %v2372
      %v2419 = vadd.f32 %v2294, %v2374
      %v2420 = vadd.f32 %v2295, %v2413
      %s2421 = scalar_lea.vmem %s3, 16
      %v2422 = vld [vmem:[%s2421] sm:$0x3]
      %v2423 = vld [vmem:[%s320] sm:$0x3f]
      %v2425 = vcombine.high %v2423, %v2423
      %v2427 = vunpack.c.l.s4 1983009808
      %v2428 = vunpack.c.0.s8 %v2427
      %v2429 = vlaneseq
      %v2430 = vshrl.u32 %v2429, 7
      %v2431 = vsub.s32 %v2428, %v2430
      %v2432 = vrot.slane %v2423, %v2431
      %v2434 = vunpack.c.l.s4 1983009808
      %v2435 = vunpack.c.0.s8 %v2434
      %v2436 = vlaneseq
      %v2437 = vshrl.u32 %v2436, 7
      %v2438 = vsub.s32 %v2435, %v2437
      %v2439 = vrot.slane %v2425, %v2438
      %v2440 = vcombine.high %v2432, %v2432
      %2441 = vrot.lane.b32.xlu0 %v2432, 90
      %v2442 = vpop.permute.xlu0 %2441
      %2443 = vrot.lane.b32.xlu0 %v2440, 90
      %v2444 = vpop.permute.xlu0 %2443
      %2445 = vrot.lane.b32.xlu0 %v2439, 90
      %v2446 = vpop.permute.xlu0 %2445
      %v2447 = vsel %vm2322, %v2442, %v2444
      %v2448 = vsel %vm2322, %v2444, %v2446
      %v2450 = vsel %vm348, %v2422, 0
      %v2453 = vsel %vm352, %v2447, 0
      %v2456 = vsel %vm352, %v2448, 0
      %v2459 = vsel %vm352, %v2446, 0
      %2461 = vmatprep.subr.bf16.mxu0 %v2456
      %2462 = vmatpush1.bf16.msra.mxu0 %v2453
      %2463 = vmatprep.subr.bf16.mxu0 0
      %2464 = vmatpush1.bf16.msra.mxu0 0
      %2465 = vmatprep.subr.bf16.mxu0 0
      %2466 = vmatpush1.bf16.msra.mxu0 0
      %2467 = vmatprep.subr.bf16.mxu0 0
      %2468 = vmatpush1.bf16.msra.mxu0 0
      %2469 = vmatprep.subr.bf16.mxu0 0
      %2470 = vmatpush1.bf16.msra.mxu0 0
      %2471 = vmatprep.subr.bf16.mxu0 0
      %2472 = vmatpush1.bf16.msra.mxu0 0
      %2473 = vmatprep.subr.bf16.mxu0 0
      %2474 = vmatpush1.bf16.msra.mxu0 0
      %2475 = vmatprep.subr.bf16.mxu0 0
      %2476 = vmatpush1.bf16.msra.mxu0 0
      %2477 = vmatprep.subr.bf16.mxu0 0
      %2478 = vmatpush1.bf16.msra.mxu0 0
      %2479 = vmatprep.subr.bf16.mxu0 0
      %2480 = vmatpush1.bf16.msra.mxu0 0
      %2481 = vmatprep.subr.bf16.mxu0 0
      %2482 = vmatpush1.bf16.msra.mxu0 0
      %2483 = vmatprep.subr.bf16.mxu0 0
      %2484 = vmatpush1.bf16.msra.mxu0 0
      %2485 = vmatprep.subr.bf16.mxu0 0
      %2486 = vmatpush1.bf16.msra.mxu0 0
      %2487 = vmatprep.subr.bf16.mxu0 0
      %2488 = vmatpush1.bf16.msra.mxu0 0
      %2489 = vmatprep.subr.bf16.mxu0 0
      %2490 = vmatpush1.bf16.msra.mxu0 0
      %2491 = vmatprep.subr.bf16.mxu0 0
      %2492 = vmatpush1.bf16.msra.mxu0 0
      %2493 = vmatprep.mubr.bf16.mxu0 0
      %2494 = vmatmul.mubr.bf16.gmra.mrb[0].mxu0 %v2450
      %v2495 = vpop.f32.mrb[0].mxu0
      %v2496 = vadd.f32 0.0, %v2495
      %v2497 = vpop.f32.mrb[0].mxu0
      %v2498 = vadd.f32 0.0, %v2497
      %v2499 = vpop.f32.mrb[0].mxu0
      %v2500 = vpop.f32.mrb[0].mxu0
      %2501 = vdwg.mxu0
      %2502 = vmatprep.subr.bf16.mxu0 0
      %2503 = vmatpush1.bf16.msra.mxu0 %v2459
      %2504 = vmatprep.subr.bf16.mxu0 0
      %2505 = vmatpush1.bf16.msra.mxu0 0
      %2506 = vmatprep.subr.bf16.mxu0 0
      %2507 = vmatpush1.bf16.msra.mxu0 0
      %2508 = vmatprep.subr.bf16.mxu0 0
      %2509 = vmatpush1.bf16.msra.mxu0 0
      %2510 = vmatprep.subr.bf16.mxu0 0
      %2511 = vmatpush1.bf16.msra.mxu0 0
      %2512 = vmatprep.subr.bf16.mxu0 0
      %2513 = vmatpush1.bf16.msra.mxu0 0
      %2514 = vmatprep.subr.bf16.mxu0 0
      %2515 = vmatpush1.bf16.msra.mxu0 0
      %2516 = vmatprep.subr.bf16.mxu0 0
      %2517 = vmatpush1.bf16.msra.mxu0 0
      %2518 = vmatprep.subr.bf16.mxu0 0
      %2519 = vmatpush1.bf16.msra.mxu0 0
      %2520 = vmatprep.subr.bf16.mxu0 0
      %2521 = vmatpush1.bf16.msra.mxu0 0
      %2522 = vmatprep.subr.bf16.mxu0 0
      %2523 = vmatpush1.bf16.msra.mxu0 0
      %2524 = vmatprep.subr.bf16.mxu0 0
      %2525 = vmatpush1.bf16.msra.mxu0 0
      %2526 = vmatprep.subr.bf16.mxu0 0
      %2527 = vmatpush1.bf16.msra.mxu0 0
      %2528 = vmatprep.subr.bf16.mxu0 0
      %2529 = vmatpush1.bf16.msra.mxu0 0
      %2530 = vmatprep.subr.bf16.mxu0 0
      %2531 = vmatpush1.bf16.msra.mxu0 0
      %2532 = vmatprep.subr.bf16.mxu0 0
      %2533 = vmatpush1.bf16.msra.mxu0 0
      %2534 = vmatprep.mubr.bf16.mxu0 0
      %2535 = vmatmul.mubr.bf16.gmra.mrb[0].mxu0 %v2450
      %v2536 = vpop.f32.mrb[0].mxu0
      %v2537 = vadd.f32 0.0, %v2536
      %v2538 = vpop.f32.mrb[0].mxu0
      %v2539 = vpop.f32.mrb[0].mxu0
      %v2540 = vpop.f32.mrb[0].mxu0
      %2541 = vdwg.mxu0
      %v2542 = vadd.f32 %v2418, %v2496
      %v2543 = vadd.f32 %v2419, %v2498
      %v2544 = vadd.f32 %v2420, %v2537
      %v2545 = vld [vmem:[%s4] sm:$0xf]
      %2547 = vset.pattern.permute.xlu0 0
      %2548 = vperm.xlu0 %2547, %v2545
      %v2549 = vpop.permute.xlu0 %2548
      %v2551 = vadd.f32 %v2542, %v2549
      %v2552 = vadd.f32 %v2543, %v2549
      %v2553 = vadd.f32 %v2544, %v2549
      %v2554 = vmax.f32 %v2551, 0.0
      %v2555 = vmax.f32 %v2552, 0.0
      %v2556 = vmax.f32 %v2553, 0.0
      %v2557 = vld [vmem:[%s7] sm:$0x7]
      %v2559 = vlaneseq
      %v2560 = vshrl.u32 %v2559, 7
      %v2561 = vsub.s32 0, %v2560
      %v2562 = vrot.slane %v2557, %v2561
      %v2563 = vlaneseq
      %v2564 = vshrl.u32 %v2563, 7
      %v2565 = vsub.s32 1, %v2564
      %v2566 = vrot.slane %v2557, %v2565
      %v2567 = vlaneseq
      %v2568 = vshrl.u32 %v2567, 7
      %v2569 = vsub.s32 2, %v2568
      %v2570 = vrot.slane %v2557, %v2569
      %v2574 = vmul.f32 %v2554, %v2562
      %v2575 = vmul.f32 %v2555, %v2566
      %v2576 = vmul.f32 %v2556, %v2570
      %vm2577 = vcmask 1043458
      %vm2578 = vmor %vm2577, %vm352
      %vm2579 = vcmask 865284
      %vm2580 = vmor %vm2579, %vm2578
      %2581 = vst.msk [vmem:[#allocation2] sm:$0x3f] %vm2580, 0
      %v2582 = vpack.c.bf16 %v2574, %v2574
      %v2583 = vpack.c.bf16 %v2575, %v2575
      %v2584 = vpack.c.bf16 %v2576, %v2576
      %v2588 = vcombine.low %v2582, %v2583
      %v2590 = vunpack.c.l.s4 1983009808
      %v2591 = vunpack.c.0.s8 %v2590
      %v2592 = vlaneseq
      %v2593 = vshrl.u32 %v2592, 7
      %v2594 = vsub.s32 %v2591, %v2593
      %v2595 = vrot.slane %v2588, %v2594
      %v2597 = vunpack.c.l.s4 1983009808
      %v2598 = vunpack.c.0.s8 %v2597
      %v2599 = vlaneseq
      %v2600 = vshrl.u32 %v2599, 7
      %v2601 = vsub.s32 %v2598, %v2600
      %v2602 = vrot.slane %v2584, %v2601
      %v2603 = vcombine.low %v2595, %v2602
      %2604 = vrot.lane.b32.xlu0 %v2603, 19
      %v2605 = vpop.permute.xlu0 %2604
      %v2606 = vrot.slane %v2605, 6
      %vm2607 = vcmask 154624
      %v2608 = vsel %vm2607, %v2606, %v2605
      %vm2610 = vcmask 1041560
      %vm2611 = vmor %vm2577, %vm2610
      %vm2612 = vcmask 709636
      %vm2613 = vmor %vm2612, %vm2611
      %2614 = vst.msk [vmem:[#allocation2] sm:$0x3f] %vm2613, %v2608
      %v2615 = vld [vmem:[%s5] sm:$0x3]
      %v2616 = vld [vmem:[#allocation2] sm:$0x3f]
      %s2617 = scalar_lea.vmem %s5, 2
      %v2618 = vld [vmem:[%s2617] sm:$0x3]
      %v2620 = vcombine.high %v2616, %v2616
      %v2622 = vunpack.c.l.s4 1983009808
      %v2623 = vunpack.c.0.s8 %v2622
      %v2624 = vlaneseq
      %v2625 = vshrl.u32 %v2624, 7
      %v2626 = vsub.s32 %v2623, %v2625
      %v2627 = vrot.slane %v2616, %v2626
      %v2629 = vunpack.c.l.s4 1983009808
      %v2630 = vunpack.c.0.s8 %v2629
      %v2631 = vlaneseq
      %v2632 = vshrl.u32 %v2631, 7
      %v2633 = vsub.s32 %v2630, %v2632
      %v2634 = vrot.slane %v2620, %v2633
      %v2635 = vcombine.high %v2627, %v2627
      %2636 = vrot.lane.b32.xlu0 %v2627, 127
      %v2637 = vpop.permute.xlu0 %2636
      %2638 = vrot.lane.b32.xlu0 %v2635, 127
      %v2639 = vpop.permute.xlu0 %2638
      %2640 = vrot.lane.b32.xlu0 %v2634, 127
      %v2641 = vpop.permute.xlu0 %2640
      %v2642 = vsel %vm579, %v2637, %v2639
      %v2643 = vsel %vm579, %v2639, %v2641
      %v2645 = vsel %vm348, %v2618, 0
      %v2648 = vsel %vm352, %v2642, 0
      %v2651 = vsel %vm352, %v2643, 0
      %v2654 = vsel %vm352, %v2641, 0
      %2656 = vmatprep.subr.bf16.mxu0 %v2651
      %2657 = vmatpush1.bf16.msra.mxu0 %v2648
      %2658 = vmatprep.subr.bf16.mxu0 0
      %2659 = vmatpush1.bf16.msra.mxu0 0
      %2660 = vmatprep.subr.bf16.mxu0 0
      %2661 = vmatpush1.bf16.msra.mxu0 0
      %2662 = vmatprep.subr.bf16.mxu0 0
      %2663 = vmatpush1.bf16.msra.mxu0 0
      %2664 = vmatprep.subr.bf16.mxu0 0
      %2665 = vmatpush1.bf16.msra.mxu0 0
      %2666 = vmatprep.subr.bf16.mxu0 0
      %2667 = vmatpush1.bf16.msra.mxu0 0
      %2668 = vmatprep.subr.bf16.mxu0 0
      %2669 = vmatpush1.bf16.msra.mxu0 0
      %2670 = vmatprep.subr.bf16.mxu0 0
      %2671 = vmatpush1.bf16.msra.mxu0 0
      %2672 = vmatprep.subr.bf16.mxu0 0
      %2673 = vmatpush1.bf16.msra.mxu0 0
      %2674 = vmatprep.subr.bf16.mxu0 0
      %2675 = vmatpush1.bf16.msra.mxu0 0
      %2676 = vmatprep.subr.bf16.mxu0 0
      %2677 = vmatpush1.bf16.msra.mxu0 0
      %2678 = vmatprep.subr.bf16.mxu0 0
      %2679 = vmatpush1.bf16.msra.mxu0 0
      %2680 = vmatprep.subr.bf16.mxu0 0
      %2681 = vmatpush1.bf16.msra.mxu0 0
      %2682 = vmatprep.subr.bf16.mxu0 0
      %2683 = vmatpush1.bf16.msra.mxu0 0
      %2684 = vmatprep.subr.bf16.mxu0 0
      %2685 = vmatpush1.bf16.msra.mxu0 0
      %2686 = vmatprep.subr.bf16.mxu0 0
      %2687 = vmatpush1.bf16.msra.mxu0 0
      %2688 = vmatprep.mubr.bf16.mxu0 0
      %2689 = vmatmul.mubr.bf16.gmra.mrb[0].mxu0 %v2645
      %v2690 = vpop.f32.mrb[0].mxu0
      %v2691 = vadd.f32 0.0, %v2690
      %v2692 = vpop.f32.mrb[0].mxu0
      %v2693 = vadd.f32 0.0, %v2692
      %v2694 = vpop.f32.mrb[0].mxu0
      %v2695 = vpop.f32.mrb[0].mxu0
      %2696 = vdwg.mxu0
      %2697 = vmatprep.subr.bf16.mxu0 0
      %2698 = vmatpush1.bf16.msra.mxu0 %v2654
      %2699 = vmatprep.subr.bf16.mxu0 0
      %2700 = vmatpush1.bf16.msra.mxu0 0
      %2701 = vmatprep.subr.bf16.mxu0 0
      %2702 = vmatpush1.bf16.msra.mxu0 0
      %2703 = vmatprep.subr.bf16.mxu0 0
      %2704 = vmatpush1.bf16.msra.mxu0 0
      %2705 = vmatprep.subr.bf16.mxu0 0
      %2706 = vmatpush1.bf16.msra.mxu0 0
      %2707 = vmatprep.subr.bf16.mxu0 0
      %2708 = vmatpush1.bf16.msra.mxu0 0
      %2709 = vmatprep.subr.bf16.mxu0 0
      %2710 = vmatpush1.bf16.msra.mxu0 0
      %2711 = vmatprep.subr.bf16.mxu0 0
      %2712 = vmatpush1.bf16.msra.mxu0 0
      %2713 = vmatprep.subr.bf16.mxu0 0
      %2714 = vmatpush1.bf16.msra.mxu0 0
      %2715 = vmatprep.subr.bf16.mxu0 0
      %2716 = vmatpush1.bf16.msra.mxu0 0
      %2717 = vmatprep.subr.bf16.mxu0 0
      %2718 = vmatpush1.bf16.msra.mxu0 0
      %2719 = vmatprep.subr.bf16.mxu0 0
      %2720 = vmatpush1.bf16.msra.mxu0 0
      %2721 = vmatprep.subr.bf16.mxu0 0
      %2722 = vmatpush1.bf16.msra.mxu0 0
      %2723 = vmatprep.subr.bf16.mxu0 0
      %2724 = vmatpush1.bf16.msra.mxu0 0
      %2725 = vmatprep.subr.bf16.mxu0 0
      %2726 = vmatpush1.bf16.msra.mxu0 0
      %2727 = vmatprep.subr.bf16.mxu0 0
      %2728 = vmatpush1.bf16.msra.mxu0 0
      %2729 = vmatprep.mubr.bf16.mxu0 0
      %2730 = vmatmul.mubr.bf16.gmra.mrb[0].mxu0 %v2645
      %v2731 = vpop.f32.mrb[0].mxu0
      %v2732 = vadd.f32 0.0, %v2731
      %v2733 = vpop.f32.mrb[0].mxu0
      %v2734 = vpop.f32.mrb[0].mxu0
      %v2735 = vpop.f32.mrb[0].mxu0
      %2736 = vdwg.mxu0
      %v2738 = vsel %vm348, %v2615, 0
      %v2741 = vsel %vm352, %v2627, 0
      %v2744 = vsel %vm352, %v2635, 0
      %v2747 = vsel %vm352, %v2634, 0
      %2749 = vmatprep.subr.bf16.mxu0 %v2744
      %2750 = vmatpush1.bf16.msra.mxu0 %v2741
      %2751 = vmatprep.subr.bf16.mxu0 0
      %2752 = vmatpush1.bf16.msra.mxu0 0
      %2753 = vmatprep.subr.bf16.mxu0 0
      %2754 = vmatpush1.bf16.msra.mxu0 0
      %2755 = vmatprep.subr.bf16.mxu0 0
      %2756 = vmatpush1.bf16.msra.mxu0 0
      %2757 = vmatprep.subr.bf16.mxu0 0
      %2758 = vmatpush1.bf16.msra.mxu0 0
      %2759 = vmatprep.subr.bf16.mxu0 0
      %2760 = vmatpush1.bf16.msra.mxu0 0
      %2761 = vmatprep.subr.bf16.mxu0 0
      %2762 = vmatpush1.bf16.msra.mxu0 0
      %2763 = vmatprep.subr.bf16.mxu0 0
      %2764 = vmatpush1.bf16.msra.mxu0 0
      %2765 = vmatprep.subr.bf16.mxu0 0
      %2766 = vmatpush1.bf16.msra.mxu0 0
      %2767 = vmatprep.subr.bf16.mxu0 0
      %2768 = vmatpush1.bf16.msra.mxu0 0
      %2769 = vmatprep.subr.bf16.mxu0 0
      %2770 = vmatpush1.bf16.msra.mxu0 0
      %2771 = vmatprep.subr.bf16.mxu0 0
      %2772 = vmatpush1.bf16.msra.mxu0 0
      %2773 = vmatprep.subr.bf16.mxu0 0
      %2774 = vmatpush1.bf16.msra.mxu0 0
      %2775 = vmatprep.subr.bf16.mxu0 0
      %2776 = vmatpush1.bf16.msra.mxu0 0
      %2777 = vmatprep.subr.bf16.mxu0 0
      %2778 = vmatpush1.bf16.msra.mxu0 0
      %2779 = vmatprep.subr.bf16.mxu0 0
      %2780 = vmatpush1.bf16.msra.mxu0 0
      %2781 = vmatprep.mubr.bf16.mxu0 0
      %2782 = vmatmul.mubr.bf16.gmra.mrb[0].mxu0 %v2738
      %v2783 = vpop.f32.mrb[0].mxu0
      %v2784 = vadd.f32 %v2691, %v2783
      %v2785 = vpop.f32.mrb[0].mxu0
      %v2786 = vadd.f32 %v2693, %v2785
      %v2787 = vpop.f32.mrb[0].mxu0
      %v2788 = vpop.f32.mrb[0].mxu0
      %2789 = vdwg.mxu0
      %2790 = vmatprep.subr.bf16.mxu0 0
      %2791 = vmatpush1.bf16.msra.mxu0 %v2747
      %2792 = vmatprep.subr.bf16.mxu0 0
      %2793 = vmatpush1.bf16.msra.mxu0 0
      %2794 = vmatprep.subr.bf16.mxu0 0
      %2795 = vmatpush1.bf16.msra.mxu0 0
      %2796 = vmatprep.subr.bf16.mxu0 0
      %2797 = vmatpush1.bf16.msra.mxu0 0
      %2798 = vmatprep.subr.bf16.mxu0 0
      %2799 = vmatpush1.bf16.msra.mxu0 0
      %2800 = vmatprep.subr.bf16.mxu0 0
      %2801 = vmatpush1.bf16.msra.mxu0 0
      %2802 = vmatprep.subr.bf16.mxu0 0
      %2803 = vmatpush1.bf16.msra.mxu0 0
      %2804 = vmatprep.subr.bf16.mxu0 0
      %2805 = vmatpush1.bf16.msra.mxu0 0
      %2806 = vmatprep.subr.bf16.mxu0 0
      %2807 = vmatpush1.bf16.msra.mxu0 0
      %2808 = vmatprep.subr.bf16.mxu0 0
      %2809 = vmatpush1.bf16.msra.mxu0 0
      %2810 = vmatprep.subr.bf16.mxu0 0
      %2811 = vmatpush1.bf16.msra.mxu0 0
      %2812 = vmatprep.subr.bf16.mxu0 0
      %2813 = vmatpush1.bf16.msra.mxu0 0
      %2814 = vmatprep.subr.bf16.mxu0 0
      %2815 = vmatpush1.bf16.msra.mxu0 0
      %2816 = vmatprep.subr.bf16.mxu0 0
      %2817 = vmatpush1.bf16.msra.mxu0 0
      %2818 = vmatprep.subr.bf16.mxu0 0
      %2819 = vmatpush1.bf16.msra.mxu0 0
      %2820 = vmatprep.subr.bf16.mxu0 0
      %2821 = vmatpush1.bf16.msra.mxu0 0
      %2822 = vmatprep.mubr.bf16.mxu0 0
      %2823 = vmatmul.mubr.bf16.gmra.mrb[0].mxu0 %v2738
      %v2824 = vpop.f32.mrb[0].mxu0
      %v2825 = vadd.f32 %v2732, %v2824
      %v2826 = vpop.f32.mrb[0].mxu0
      %v2827 = vpop.f32.mrb[0].mxu0
      %v2828 = vpop.f32.mrb[0].mxu0
      %2829 = vdwg.mxu0
      %s2830 = scalar_lea.vmem %s5, 4
      %v2831 = vld [vmem:[%s2830] sm:$0x3]
      %v2832 = vld [vmem:[#allocation2] sm:$0x3f]
      %v2834 = vcombine.high %v2832, %v2832
      %v2836 = vunpack.c.l.s4 1983009808
      %v2837 = vunpack.c.0.s8 %v2836
      %v2838 = vlaneseq
      %v2839 = vshrl.u32 %v2838, 7
      %v2840 = vsub.s32 %v2837, %v2839
      %v2841 = vrot.slane %v2832, %v2840
      %v2843 = vunpack.c.l.s4 1983009808
      %v2844 = vunpack.c.0.s8 %v2843
      %v2845 = vlaneseq
      %v2846 = vshrl.u32 %v2845, 7
      %v2847 = vsub.s32 %v2844, %v2846
      %v2848 = vrot.slane %v2834, %v2847
      %v2849 = vcombine.high %v2841, %v2841
      %2850 = vrot.lane.b32.xlu0 %v2841, 126
      %v2851 = vpop.permute.xlu0 %2850
      %2852 = vrot.lane.b32.xlu0 %v2849, 126
      %v2853 = vpop.permute.xlu0 %2852
      %2854 = vrot.lane.b32.xlu0 %v2848, 126
      %v2855 = vpop.permute.xlu0 %2854
      %v2856 = vsel %vm828, %v2851, %v2853
      %v2857 = vsel %vm828, %v2853, %v2855
      %v2859 = vsel %vm348, %v2831, 0
      %v2862 = vsel %vm352, %v2856, 0
      %v2865 = vsel %vm352, %v2857, 0
      %v2868 = vsel %vm352, %v2855, 0
      %2870 = vmatprep.subr.bf16.mxu0 %v2865
      %2871 = vmatpush1.bf16.msra.mxu0 %v2862
      %2872 = vmatprep.subr.bf16.mxu0 0
      %2873 = vmatpush1.bf16.msra.mxu0 0
      %2874 = vmatprep.subr.bf16.mxu0 0
      %2875 = vmatpush1.bf16.msra.mxu0 0
      %2876 = vmatprep.subr.bf16.mxu0 0
      %2877 = vmatpush1.bf16.msra.mxu0 0
      %2878 = vmatprep.subr.bf16.mxu0 0
      %2879 = vmatpush1.bf16.msra.mxu0 0
      %2880 = vmatprep.subr.bf16.mxu0 0
      %2881 = vmatpush1.bf16.msra.mxu0 0
      %2882 = vmatprep.subr.bf16.mxu0 0
      %2883 = vmatpush1.bf16.msra.mxu0 0
      %2884 = vmatprep.subr.bf16.mxu0 0
      %2885 = vmatpush1.bf16.msra.mxu0 0
      %2886 = vmatprep.subr.bf16.mxu0 0
      %2887 = vmatpush1.bf16.msra.mxu0 0
      %2888 = vmatprep.subr.bf16.mxu0 0
      %2889 = vmatpush1.bf16.msra.mxu0 0
      %2890 = vmatprep.subr.bf16.mxu0 0
      %2891 = vmatpush1.bf16.msra.mxu0 0
      %2892 = vmatprep.subr.bf16.mxu0 0
      %2893 = vmatpush1.bf16.msra.mxu0 0
      %2894 = vmatprep.subr.bf16.mxu0 0
      %2895 = vmatpush1.bf16.msra.mxu0 0
      %2896 = vmatprep.subr.bf16.mxu0 0
      %2897 = vmatpush1.bf16.msra.mxu0 0
      %2898 = vmatprep.subr.bf16.mxu0 0
      %2899 = vmatpush1.bf16.msra.mxu0 0
      %2900 = vmatprep.subr.bf16.mxu0 0
      %2901 = vmatpush1.bf16.msra.mxu0 0
      %2902 = vmatprep.mubr.bf16.mxu0 0
      %2903 = vmatmul.mubr.bf16.gmra.mrb[0].mxu0 %v2859
      %v2904 = vpop.f32.mrb[0].mxu0
      %v2905 = vadd.f32 0.0, %v2904
      %v2906 = vpop.f32.mrb[0].mxu0
      %v2907 = vadd.f32 0.0, %v2906
      %v2908 = vpop.f32.mrb[0].mxu0
      %v2909 = vpop.f32.mrb[0].mxu0
      %2910 = vdwg.mxu0
      %2911 = vmatprep.subr.bf16.mxu0 0
      %2912 = vmatpush1.bf16.msra.mxu0 %v2868
      %2913 = vmatprep.subr.bf16.mxu0 0
      %2914 = vmatpush1.bf16.msra.mxu0 0
      %2915 = vmatprep.subr.bf16.mxu0 0
      %2916 = vmatpush1.bf16.msra.mxu0 0
      %2917 = vmatprep.subr.bf16.mxu0 0
      %2918 = vmatpush1.bf16.msra.mxu0 0
      %2919 = vmatprep.subr.bf16.mxu0 0
      %2920 = vmatpush1.bf16.msra.mxu0 0
      %2921 = vmatprep.subr.bf16.mxu0 0
      %2922 = vmatpush1.bf16.msra.mxu0 0
      %2923 = vmatprep.subr.bf16.mxu0 0
      %2924 = vmatpush1.bf16.msra.mxu0 0
      %2925 = vmatprep.subr.bf16.mxu0 0
      %2926 = vmatpush1.bf16.msra.mxu0 0
      %2927 = vmatprep.subr.bf16.mxu0 0
      %2928 = vmatpush1.bf16.msra.mxu0 0
      %2929 = vmatprep.subr.bf16.mxu0 0
      %2930 = vmatpush1.bf16.msra.mxu0 0
      %2931 = vmatprep.subr.bf16.mxu0 0
      %2932 = vmatpush1.bf16.msra.mxu0 0
      %2933 = vmatprep.subr.bf16.mxu0 0
      %2934 = vmatpush1.bf16.msra.mxu0 0
      %2935 = vmatprep.subr.bf16.mxu0 0
      %2936 = vmatpush1.bf16.msra.mxu0 0
      %2937 = vmatprep.subr.bf16.mxu0 0
      %2938 = vmatpush1.bf16.msra.mxu0 0
      %2939 = vmatprep.subr.bf16.mxu0 0
      %2940 = vmatpush1.bf16.msra.mxu0 0
      %2941 = vmatprep.subr.bf16.mxu0 0
      %2942 = vmatpush1.bf16.msra.mxu0 0
      %2943 = vmatprep.mubr.bf16.mxu0 0
      %2944 = vmatmul.mubr.bf16.gmra.mrb[0].mxu0 %v2859
      %v2945 = vpop.f32.mrb[0].mxu0
      %v2946 = vadd.f32 0.0, %v2945
      %v2947 = vpop.f32.mrb[0].mxu0
      %v2948 = vpop.f32.mrb[0].mxu0
      %v2949 = vpop.f32.mrb[0].mxu0
      %2950 = vdwg.mxu0
      %v2951 = vadd.f32 %v2784, %v2905
      %v2952 = vadd.f32 %v2786, %v2907
      %v2953 = vadd.f32 %v2825, %v2946
      %s2954 = scalar_lea.vmem %s5, 6
      %v2955 = vld [vmem:[%s2954] sm:$0x3]
      %v2956 = vld [vmem:[#allocation2] sm:$0x3f]
      %v2958 = vcombine.high %v2956, %v2956
      %v2960 = vunpack.c.l.s4 1983009808
      %v2961 = vunpack.c.0.s8 %v2960
      %v2962 = vlaneseq
      %v2963 = vshrl.u32 %v2962, 7
      %v2964 = vsub.s32 %v2961, %v2963
      %v2965 = vrot.slane %v2956, %v2964
      %v2967 = vunpack.c.l.s4 1983009808
      %v2968 = vunpack.c.0.s8 %v2967
      %v2969 = vlaneseq
      %v2970 = vshrl.u32 %v2969, 7
      %v2971 = vsub.s32 %v2968, %v2970
      %v2972 = vrot.slane %v2958, %v2971
      %v2973 = vcombine.high %v2965, %v2965
      %2974 = vrot.lane.b32.xlu0 %v2965, 110
      %v2975 = vpop.permute.xlu0 %2974
      %2976 = vrot.lane.b32.xlu0 %v2973, 110
      %v2977 = vpop.permute.xlu0 %2976
      %2978 = vrot.lane.b32.xlu0 %v2972, 110
      %v2979 = vpop.permute.xlu0 %2978
      %v2980 = vsel %vm1077, %v2975, %v2977
      %v2981 = vsel %vm1077, %v2977, %v2979
      %v2983 = vsel %vm348, %v2955, 0
      %v2986 = vsel %vm352, %v2980, 0
      %v2989 = vsel %vm352, %v2981, 0
      %v2992 = vsel %vm352, %v2979, 0
      %2994 = vmatprep.subr.bf16.mxu0 %v2989
      %2995 = vmatpush1.bf16.msra.mxu0 %v2986
      %2996 = vmatprep.subr.bf16.mxu0 0
      %2997 = vmatpush1.bf16.msra.mxu0 0
      %2998 = vmatprep.subr.bf16.mxu0 0
      %2999 = vmatpush1.bf16.msra.mxu0 0
      %3000 = vmatprep.subr.bf16.mxu0 0
      %3001 = vmatpush1.bf16.msra.mxu0 0
      %3002 = vmatprep.subr.bf16.mxu0 0
      %3003 = vmatpush1.bf16.msra.mxu0 0
      %3004 = vmatprep.subr.bf16.mxu0 0
      %3005 = vmatpush1.bf16.msra.mxu0 0
      %3006 = vmatprep.subr.bf16.mxu0 0
      %3007 = vmatpush1.bf16.msra.mxu0 0
      %3008 = vmatprep.subr.bf16.mxu0 0
      %3009 = vmatpush1.bf16.msra.mxu0 0
      %3010 = vmatprep.subr.bf16.mxu0 0
      %3011 = vmatpush1.bf16.msra.mxu0 0
      %3012 = vmatprep.subr.bf16.mxu0 0
      %3013 = vmatpush1.bf16.msra.mxu0 0
      %3014 = vmatprep.subr.bf16.mxu0 0
      %3015 = vmatpush1.bf16.msra.mxu0 0
      %3016 = vmatprep.subr.bf16.mxu0 0
      %3017 = vmatpush1.bf16.msra.mxu0 0
      %3018 = vmatprep.subr.bf16.mxu0 0
      %3019 = vmatpush1.bf16.msra.mxu0 0
      %3020 = vmatprep.subr.bf16.mxu0 0
      %3021 = vmatpush1.bf16.msra.mxu0 0
      %3022 = vmatprep.subr.bf16.mxu0 0
      %3023 = vmatpush1.bf16.msra.mxu0 0
      %3024 = vmatprep.subr.bf16.mxu0 0
      %3025 = vmatpush1.bf16.msra.mxu0 0
      %3026 = vmatprep.mubr.bf16.mxu0 0
      %3027 = vmatmul.mubr.bf16.gmra.mrb[0].mxu0 %v2983
      %v3028 = vpop.f32.mrb[0].mxu0
      %v3029 = vadd.f32 0.0, %v3028
      %v3030 = vpop.f32.mrb[0].mxu0
      %v3031 = vadd.f32 0.0, %v3030
      %v3032 = vpop.f32.mrb[0].mxu0
      %v3033 = vpop.f32.mrb[0].mxu0
      %3034 = vdwg.mxu0
      %3035 = vmatprep.subr.bf16.mxu0 0
      %3036 = vmatpush1.bf16.msra.mxu0 %v2992
      %3037 = vmatprep.subr.bf16.mxu0 0
      %3038 = vmatpush1.bf16.msra.mxu0 0
      %3039 = vmatprep.subr.bf16.mxu0 0
      %3040 = vmatpush1.bf16.msra.mxu0 0
      %3041 = vmatprep.subr.bf16.mxu0 0
      %3042 = vmatpush1.bf16.msra.mxu0 0
      %3043 = vmatprep.subr.bf16.mxu0 0
      %3044 = vmatpush1.bf16.msra.mxu0 0
      %3045 = vmatprep.subr.bf16.mxu0 0
      %3046 = vmatpush1.bf16.msra.mxu0 0
      %3047 = vmatprep.subr.bf16.mxu0 0
      %3048 = vmatpush1.bf16.msra.mxu0 0
      %3049 = vmatprep.subr.bf16.mxu0 0
      %3050 = vmatpush1.bf16.msra.mxu0 0
      %3051 = vmatprep.subr.bf16.mxu0 0
      %3052 = vmatpush1.bf16.msra.mxu0 0
      %3053 = vmatprep.subr.bf16.mxu0 0
      %3054 = vmatpush1.bf16.msra.mxu0 0
      %3055 = vmatprep.subr.bf16.mxu0 0
      %3056 = vmatpush1.bf16.msra.mxu0 0
      %3057 = vmatprep.subr.bf16.mxu0 0
      %3058 = vmatpush1.bf16.msra.mxu0 0
      %3059 = vmatprep.subr.bf16.mxu0 0
      %3060 = vmatpush1.bf16.msra.mxu0 0
      %3061 = vmatprep.subr.bf16.mxu0 0
      %3062 = vmatpush1.bf16.msra.mxu0 0
      %3063 = vmatprep.subr.bf16.mxu0 0
      %3064 = vmatpush1.bf16.msra.mxu0 0
      %3065 = vmatprep.subr.bf16.mxu0 0
      %3066 = vmatpush1.bf16.msra.mxu0 0
      %3067 = vmatprep.mubr.bf16.mxu0 0
      %3068 = vmatmul.mubr.bf16.gmra.mrb[0].mxu0 %v2983
      %v3069 = vpop.f32.mrb[0].mxu0
      %v3070 = vadd.f32 0.0, %v3069
      %v3071 = vpop.f32.mrb[0].mxu0
      %v3072 = vpop.f32.mrb[0].mxu0
      %v3073 = vpop.f32.mrb[0].mxu0
      %3074 = vdwg.mxu0
      %v3075 = vadd.f32 %v2951, %v3029
      %v3076 = vadd.f32 %v2952, %v3031
      %v3077 = vadd.f32 %v2953, %v3070
      %s3078 = scalar_lea.vmem %s5, 8
      %v3079 = vld [vmem:[%s3078] sm:$0x3]
      %v3080 = vld [vmem:[#allocation2] sm:$0x3f]
      %v3082 = vcombine.high %v3080, %v3080
      %v3084 = vunpack.c.l.s4 1983009808
      %v3085 = vunpack.c.0.s8 %v3084
      %v3086 = vlaneseq
      %v3087 = vshrl.u32 %v3086, 7
      %v3088 = vsub.s32 %v3085, %v3087
      %v3089 = vrot.slane %v3080, %v3088
      %v3091 = vunpack.c.l.s4 1983009808
      %v3092 = vunpack.c.0.s8 %v3091
      %v3093 = vlaneseq
      %v3094 = vshrl.u32 %v3093, 7
      %v3095 = vsub.s32 %v3092, %v3094
      %v3096 = vrot.slane %v3082, %v3095
      %v3097 = vcombine.high %v3089, %v3089
      %3098 = vrot.lane.b32.xlu0 %v3089, 109
      %v3099 = vpop.permute.xlu0 %3098
      %3100 = vrot.lane.b32.xlu0 %v3097, 109
      %v3101 = vpop.permute.xlu0 %3100
      %3102 = vrot.lane.b32.xlu0 %v3096, 109
      %v3103 = vpop.permute.xlu0 %3102
      %v3104 = vsel %vm1326, %v3099, %v3101
      %v3105 = vsel %vm1326, %v3101, %v3103
      %v3107 = vsel %vm348, %v3079, 0
      %v3110 = vsel %vm352, %v3104, 0
      %v3113 = vsel %vm352, %v3105, 0
      %v3116 = vsel %vm352, %v3103, 0
      %3118 = vmatprep.subr.bf16.mxu0 %v3113
      %3119 = vmatpush1.bf16.msra.mxu0 %v3110
      %3120 = vmatprep.subr.bf16.mxu0 0
      %3121 = vmatpush1.bf16.msra.mxu0 0
      %3122 = vmatprep.subr.bf16.mxu0 0
      %3123 = vmatpush1.bf16.msra.mxu0 0
      %3124 = vmatprep.subr.bf16.mxu0 0
      %3125 = vmatpush1.bf16.msra.mxu0 0
      %3126 = vmatprep.subr.bf16.mxu0 0
      %3127 = vmatpush1.bf16.msra.mxu0 0
      %3128 = vmatprep.subr.bf16.mxu0 0
      %3129 = vmatpush1.bf16.msra.mxu0 0
      %3130 = vmatprep.subr.bf16.mxu0 0
      %3131 = vmatpush1.bf16.msra.mxu0 0
      %3132 = vmatprep.subr.bf16.mxu0 0
      %3133 = vmatpush1.bf16.msra.mxu0 0
      %3134 = vmatprep.subr.bf16.mxu0 0
      %3135 = vmatpush1.bf16.msra.mxu0 0
      %3136 = vmatprep.subr.bf16.mxu0 0
      %3137 = vmatpush1.bf16.msra.mxu0 0
      %3138 = vmatprep.subr.bf16.mxu0 0
      %3139 = vmatpush1.bf16.msra.mxu0 0
      %3140 = vmatprep.subr.bf16.mxu0 0
      %3141 = vmatpush1.bf16.msra.mxu0 0
      %3142 = vmatprep.subr.bf16.mxu0 0
      %3143 = vmatpush1.bf16.msra.mxu0 0
      %3144 = vmatprep.subr.bf16.mxu0 0
      %3145 = vmatpush1.bf16.msra.mxu0 0
      %3146 = vmatprep.subr.bf16.mxu0 0
      %3147 = vmatpush1.bf16.msra.mxu0 0
      %3148 = vmatprep.subr.bf16.mxu0 0
      %3149 = vmatpush1.bf16.msra.mxu0 0
      %3150 = vmatprep.mubr.bf16.mxu0 0
      %3151 = vmatmul.mubr.bf16.gmra.mrb[0].mxu0 %v3107
      %v3152 = vpop.f32.mrb[0].mxu0
      %v3153 = vadd.f32 0.0, %v3152
      %v3154 = vpop.f32.mrb[0].mxu0
      %v3155 = vadd.f32 0.0, %v3154
      %v3156 = vpop.f32.mrb[0].mxu0
      %v3157 = vpop.f32.mrb[0].mxu0
      %3158 = vdwg.mxu0
      %3159 = vmatprep.subr.bf16.mxu0 0
      %3160 = vmatpush1.bf16.msra.mxu0 %v3116
      %3161 = vmatprep.subr.bf16.mxu0 0
      %3162 = vmatpush1.bf16.msra.mxu0 0
      %3163 = vmatprep.subr.bf16.mxu0 0
      %3164 = vmatpush1.bf16.msra.mxu0 0
      %3165 = vmatprep.subr.bf16.mxu0 0
      %3166 = vmatpush1.bf16.msra.mxu0 0
      %3167 = vmatprep.subr.bf16.mxu0 0
      %3168 = vmatpush1.bf16.msra.mxu0 0
      %3169 = vmatprep.subr.bf16.mxu0 0
      %3170 = vmatpush1.bf16.msra.mxu0 0
      %3171 = vmatprep.subr.bf16.mxu0 0
      %3172 = vmatpush1.bf16.msra.mxu0 0
      %3173 = vmatprep.subr.bf16.mxu0 0
      %3174 = vmatpush1.bf16.msra.mxu0 0
      %3175 = vmatprep.subr.bf16.mxu0 0
      %3176 = vmatpush1.bf16.msra.mxu0 0
      %3177 = vmatprep.subr.bf16.mxu0 0
      %3178 = vmatpush1.bf16.msra.mxu0 0
      %3179 = vmatprep.subr.bf16.mxu0 0
      %3180 = vmatpush1.bf16.msra.mxu0 0
      %3181 = vmatprep.subr.bf16.mxu0 0
      %3182 = vmatpush1.bf16.msra.mxu0 0
      %3183 = vmatprep.subr.bf16.mxu0 0
      %3184 = vmatpush1.bf16.msra.mxu0 0
      %3185 = vmatprep.subr.bf16.mxu0 0
      %3186 = vmatpush1.bf16.msra.mxu0 0
      %3187 = vmatprep.subr.bf16.mxu0 0
      %3188 = vmatpush1.bf16.msra.mxu0 0
      %3189 = vmatprep.subr.bf16.mxu0 0
      %3190 = vmatpush1.bf16.msra.mxu0 0
      %3191 = vmatprep.mubr.bf16.mxu0 0
      %3192 = vmatmul.mubr.bf16.gmra.mrb[0].mxu0 %v3107
      %v3193 = vpop.f32.mrb[0].mxu0
      %v3194 = vadd.f32 0.0, %v3193
      %v3195 = vpop.f32.mrb[0].mxu0
      %v3196 = vpop.f32.mrb[0].mxu0
      %v3197 = vpop.f32.mrb[0].mxu0
      %3198 = vdwg.mxu0
      %v3199 = vadd.f32 %v3075, %v3153
      %v3200 = vadd.f32 %v3076, %v3155
      %v3201 = vadd.f32 %v3077, %v3194
      %s3202 = scalar_lea.vmem %s5, 10
      %v3203 = vld [vmem:[%s3202] sm:$0x3]
      %v3204 = vld [vmem:[#allocation2] sm:$0x3f]
      %v3206 = vcombine.high %v3204, %v3204
      %v3208 = vunpack.c.l.s4 1983009808
      %v3209 = vunpack.c.0.s8 %v3208
      %v3210 = vlaneseq
      %v3211 = vshrl.u32 %v3210, 7
      %v3212 = vsub.s32 %v3209, %v3211
      %v3213 = vrot.slane %v3204, %v3212
      %v3215 = vunpack.c.l.s4 1983009808
      %v3216 = vunpack.c.0.s8 %v3215
      %v3217 = vlaneseq
      %v3218 = vshrl.u32 %v3217, 7
      %v3219 = vsub.s32 %v3216, %v3218
      %v3220 = vrot.slane %v3206, %v3219
      %v3221 = vcombine.high %v3213, %v3213
      %3222 = vrot.lane.b32.xlu0 %v3213, 108
      %v3223 = vpop.permute.xlu0 %3222
      %3224 = vrot.lane.b32.xlu0 %v3221, 108
      %v3225 = vpop.permute.xlu0 %3224
      %3226 = vrot.lane.b32.xlu0 %v3220, 108
      %v3227 = vpop.permute.xlu0 %3226
      %v3228 = vsel %vm1575, %v3223, %v3225
      %v3229 = vsel %vm1575, %v3225, %v3227
      %v3231 = vsel %vm348, %v3203, 0
      %v3234 = vsel %vm352, %v3228, 0
      %v3237 = vsel %vm352, %v3229, 0
      %v3240 = vsel %vm352, %v3227, 0
      %3242 = vmatprep.subr.bf16.mxu0 %v3237
      %3243 = vmatpush1.bf16.msra.mxu0 %v3234
      %3244 = vmatprep.subr.bf16.mxu0 0
      %3245 = vmatpush1.bf16.msra.mxu0 0
      %3246 = vmatprep.subr.bf16.mxu0 0
      %3247 = vmatpush1.bf16.msra.mxu0 0
      %3248 = vmatprep.subr.bf16.mxu0 0
      %3249 = vmatpush1.bf16.msra.mxu0 0
      %3250 = vmatprep.subr.bf16.mxu0 0
      %3251 = vmatpush1.bf16.msra.mxu0 0
      %3252 = vmatprep.subr.bf16.mxu0 0
      %3253 = vmatpush1.bf16.msra.mxu0 0
      %3254 = vmatprep.subr.bf16.mxu0 0
      %3255 = vmatpush1.bf16.msra.mxu0 0
      %3256 = vmatprep.subr.bf16.mxu0 0
      %3257 = vmatpush1.bf16.msra.mxu0 0
      %3258 = vmatprep.subr.bf16.mxu0 0
      %3259 = vmatpush1.bf16.msra.mxu0 0
      %3260 = vmatprep.subr.bf16.mxu0 0
      %3261 = vmatpush1.bf16.msra.mxu0 0
      %3262 = vmatprep.subr.bf16.mxu0 0
      %3263 = vmatpush1.bf16.msra.mxu0 0
      %3264 = vmatprep.subr.bf16.mxu0 0
      %3265 = vmatpush1.bf16.msra.mxu0 0
      %3266 = vmatprep.subr.bf16.mxu0 0
      %3267 = vmatpush1.bf16.msra.mxu0 0
      %3268 = vmatprep.subr.bf16.mxu0 0
      %3269 = vmatpush1.bf16.msra.mxu0 0
      %3270 = vmatprep.subr.bf16.mxu0 0
      %3271 = vmatpush1.bf16.msra.mxu0 0
      %3272 = vmatprep.subr.bf16.mxu0 0
      %3273 = vmatpush1.bf16.msra.mxu0 0
      %3274 = vmatprep.mubr.bf16.mxu0 0
      %3275 = vmatmul.mubr.bf16.gmra.mrb[0].mxu0 %v3231
      %v3276 = vpop.f32.mrb[0].mxu0
      %v3277 = vadd.f32 0.0, %v3276
      %v3278 = vpop.f32.mrb[0].mxu0
      %v3279 = vadd.f32 0.0, %v3278
      %v3280 = vpop.f32.mrb[0].mxu0
      %v3281 = vpop.f32.mrb[0].mxu0
      %3282 = vdwg.mxu0
      %3283 = vmatprep.subr.bf16.mxu0 0
      %3284 = vmatpush1.bf16.msra.mxu0 %v3240
      %3285 = vmatprep.subr.bf16.mxu0 0
      %3286 = vmatpush1.bf16.msra.mxu0 0
      %3287 = vmatprep.subr.bf16.mxu0 0
      %3288 = vmatpush1.bf16.msra.mxu0 0
      %3289 = vmatprep.subr.bf16.mxu0 0
      %3290 = vmatpush1.bf16.msra.mxu0 0
      %3291 = vmatprep.subr.bf16.mxu0 0
      %3292 = vmatpush1.bf16.msra.mxu0 0
      %3293 = vmatprep.subr.bf16.mxu0 0
      %3294 = vmatpush1.bf16.msra.mxu0 0
      %3295 = vmatprep.subr.bf16.mxu0 0
      %3296 = vmatpush1.bf16.msra.mxu0 0
      %3297 = vmatprep.subr.bf16.mxu0 0
      %3298 = vmatpush1.bf16.msra.mxu0 0
      %3299 = vmatprep.subr.bf16.mxu0 0
      %3300 = vmatpush1.bf16.msra.mxu0 0
      %3301 = vmatprep.subr.bf16.mxu0 0
      %3302 = vmatpush1.bf16.msra.mxu0 0
      %3303 = vmatprep.subr.bf16.mxu0 0
      %3304 = vmatpush1.bf16.msra.mxu0 0
      %3305 = vmatprep.subr.bf16.mxu0 0
      %3306 = vmatpush1.bf16.msra.mxu0 0
      %3307 = vmatprep.subr.bf16.mxu0 0
      %3308 = vmatpush1.bf16.msra.mxu0 0
      %3309 = vmatprep.subr.bf16.mxu0 0
      %3310 = vmatpush1.bf16.msra.mxu0 0
      %3311 = vmatprep.subr.bf16.mxu0 0
      %3312 = vmatpush1.bf16.msra.mxu0 0
      %3313 = vmatprep.subr.bf16.mxu0 0
      %3314 = vmatpush1.bf16.msra.mxu0 0
      %3315 = vmatprep.mubr.bf16.mxu0 0
      %3316 = vmatmul.mubr.bf16.gmra.mrb[0].mxu0 %v3231
      %v3317 = vpop.f32.mrb[0].mxu0
      %v3318 = vadd.f32 0.0, %v3317
      %v3319 = vpop.f32.mrb[0].mxu0
      %v3320 = vpop.f32.mrb[0].mxu0
      %v3321 = vpop.f32.mrb[0].mxu0
      %3322 = vdwg.mxu0
      %v3323 = vadd.f32 %v3199, %v3277
      %v3324 = vadd.f32 %v3200, %v3279
      %v3325 = vadd.f32 %v3201, %v3318
      %s3326 = scalar_lea.vmem %s5, 12
      %v3327 = vld [vmem:[%s3326] sm:$0x3]
      %v3328 = vld [vmem:[#allocation2] sm:$0x3f]
      %v3330 = vcombine.high %v3328, %v3328
      %v3332 = vunpack.c.l.s4 1983009808
      %v3333 = vunpack.c.0.s8 %v3332
      %v3334 = vlaneseq
      %v3335 = vshrl.u32 %v3334, 7
      %v3336 = vsub.s32 %v3333, %v3335
      %v3337 = vrot.slane %v3328, %v3336
      %v3339 = vunpack.c.l.s4 1983009808
      %v3340 = vunpack.c.0.s8 %v3339
      %v3341 = vlaneseq
      %v3342 = vshrl.u32 %v3341, 7
      %v3343 = vsub.s32 %v3340, %v3342
      %v3344 = vrot.slane %v3330, %v3343
      %v3345 = vcombine.high %v3337, %v3337
      %3346 = vrot.lane.b32.xlu0 %v3337, 92
      %v3347 = vpop.permute.xlu0 %3346
      %3348 = vrot.lane.b32.xlu0 %v3345, 92
      %v3349 = vpop.permute.xlu0 %3348
      %3350 = vrot.lane.b32.xlu0 %v3344, 92
      %v3351 = vpop.permute.xlu0 %3350
      %v3352 = vsel %vm1824, %v3347, %v3349
      %v3353 = vsel %vm1824, %v3349, %v3351
      %v3355 = vsel %vm348, %v3327, 0
      %v3358 = vsel %vm352, %v3352, 0
      %v3361 = vsel %vm352, %v3353, 0
      %v3364 = vsel %vm352, %v3351, 0
      %3366 = vmatprep.subr.bf16.mxu0 %v3361
      %3367 = vmatpush1.bf16.msra.mxu0 %v3358
      %3368 = vmatprep.subr.bf16.mxu0 0
      %3369 = vmatpush1.bf16.msra.mxu0 0
      %3370 = vmatprep.subr.bf16.mxu0 0
      %3371 = vmatpush1.bf16.msra.mxu0 0
      %3372 = vmatprep.subr.bf16.mxu0 0
      %3373 = vmatpush1.bf16.msra.mxu0 0
      %3374 = vmatprep.subr.bf16.mxu0 0
      %3375 = vmatpush1.bf16.msra.mxu0 0
      %3376 = vmatprep.subr.bf16.mxu0 0
      %3377 = vmatpush1.bf16.msra.mxu0 0
      %3378 = vmatprep.subr.bf16.mxu0 0
      %3379 = vmatpush1.bf16.msra.mxu0 0
      %3380 = vmatprep.subr.bf16.mxu0 0
      %3381 = vmatpush1.bf16.msra.mxu0 0
      %3382 = vmatprep.subr.bf16.mxu0 0
      %3383 = vmatpush1.bf16.msra.mxu0 0
      %3384 = vmatprep.subr.bf16.mxu0 0
      %3385 = vmatpush1.bf16.msra.mxu0 0
      %3386 = vmatprep.subr.bf16.mxu0 0
      %3387 = vmatpush1.bf16.msra.mxu0 0
      %3388 = vmatprep.subr.bf16.mxu0 0
      %3389 = vmatpush1.bf16.msra.mxu0 0
      %3390 = vmatprep.subr.bf16.mxu0 0
      %3391 = vmatpush1.bf16.msra.mxu0 0
      %3392 = vmatprep.subr.bf16.mxu0 0
      %3393 = vmatpush1.bf16.msra.mxu0 0
      %3394 = vmatprep.subr.bf16.mxu0 0
      %3395 = vmatpush1.bf16.msra.mxu0 0
      %3396 = vmatprep.subr.bf16.mxu0 0
      %3397 = vmatpush1.bf16.msra.mxu0 0
      %3398 = vmatprep.mubr.bf16.mxu0 0
      %3399 = vmatmul.mubr.bf16.gmra.mrb[0].mxu0 %v3355
      %v3400 = vpop.f32.mrb[0].mxu0
      %v3401 = vadd.f32 0.0, %v3400
      %v3402 = vpop.f32.mrb[0].mxu0
      %v3403 = vadd.f32 0.0, %v3402
      %v3404 = vpop.f32.mrb[0].mxu0
      %v3405 = vpop.f32.mrb[0].mxu0
      %3406 = vdwg.mxu0
      %3407 = vmatprep.subr.bf16.mxu0 0
      %3408 = vmatpush1.bf16.msra.mxu0 %v3364
      %3409 = vmatprep.subr.bf16.mxu0 0
      %3410 = vmatpush1.bf16.msra.mxu0 0
      %3411 = vmatprep.subr.bf16.mxu0 0
      %3412 = vmatpush1.bf16.msra.mxu0 0
      %3413 = vmatprep.subr.bf16.mxu0 0
      %3414 = vmatpush1.bf16.msra.mxu0 0
      %3415 = vmatprep.subr.bf16.mxu0 0
      %3416 = vmatpush1.bf16.msra.mxu0 0
      %3417 = vmatprep.subr.bf16.mxu0 0
      %3418 = vmatpush1.bf16.msra.mxu0 0
      %3419 = vmatprep.subr.bf16.mxu0 0
      %3420 = vmatpush1.bf16.msra.mxu0 0
      %3421 = vmatprep.subr.bf16.mxu0 0
      %3422 = vmatpush1.bf16.msra.mxu0 0
      %3423 = vmatprep.subr.bf16.mxu0 0
      %3424 = vmatpush1.bf16.msra.mxu0 0
      %3425 = vmatprep.subr.bf16.mxu0 0
      %3426 = vmatpush1.bf16.msra.mxu0 0
      %3427 = vmatprep.subr.bf16.mxu0 0
      %3428 = vmatpush1.bf16.msra.mxu0 0
      %3429 = vmatprep.subr.bf16.mxu0 0
      %3430 = vmatpush1.bf16.msra.mxu0 0
      %3431 = vmatprep.subr.bf16.mxu0 0
      %3432 = vmatpush1.bf16.msra.mxu0 0
      %3433 = vmatprep.subr.bf16.mxu0 0
      %3434 = vmatpush1.bf16.msra.mxu0 0
      %3435 = vmatprep.subr.bf16.mxu0 0
      %3436 = vmatpush1.bf16.msra.mxu0 0
      %3437 = vmatprep.subr.bf16.mxu0 0
      %3438 = vmatpush1.bf16.msra.mxu0 0
      %3439 = vmatprep.mubr.bf16.mxu0 0
      %3440 = vmatmul.mubr.bf16.gmra.mrb[0].mxu0 %v3355
      %v3441 = vpop.f32.mrb[0].mxu0
      %v3442 = vadd.f32 0.0, %v3441
      %v3443 = vpop.f32.mrb[0].mxu0
      %v3444 = vpop.f32.mrb[0].mxu0
      %v3445 = vpop.f32.mrb[0].mxu0
      %3446 = vdwg.mxu0
      %v3447 = vadd.f32 %v3323, %v3401
      %v3448 = vadd.f32 %v3324, %v3403
      %v3449 = vadd.f32 %v3325, %v3442
      %s3450 = scalar_lea.vmem %s5, 14
      %v3451 = vld [vmem:[%s3450] sm:$0x3]
      %v3452 = vld [vmem:[#allocation2] sm:$0x3f]
      %v3454 = vcombine.high %v3452, %v3452
      %v3456 = vunpack.c.l.s4 1983009808
      %v3457 = vunpack.c.0.s8 %v3456
      %v3458 = vlaneseq
      %v3459 = vshrl.u32 %v3458, 7
      %v3460 = vsub.s32 %v3457, %v3459
      %v3461 = vrot.slane %v3452, %v3460
      %v3463 = vunpack.c.l.s4 1983009808
      %v3464 = vunpack.c.0.s8 %v3463
      %v3465 = vlaneseq
      %v3466 = vshrl.u32 %v3465, 7
      %v3467 = vsub.s32 %v3464, %v3466
      %v3468 = vrot.slane %v3454, %v3467
      %v3469 = vcombine.high %v3461, %v3461
      %3470 = vrot.lane.b32.xlu0 %v3461, 91
      %v3471 = vpop.permute.xlu0 %3470
      %3472 = vrot.lane.b32.xlu0 %v3469, 91
      %v3473 = vpop.permute.xlu0 %3472
      %3474 = vrot.lane.b32.xlu0 %v3468, 91
      %v3475 = vpop.permute.xlu0 %3474
      %v3476 = vsel %vm2073, %v3471, %v3473
      %v3477 = vsel %vm2073, %v3473, %v3475
      %v3479 = vsel %vm348, %v3451, 0
      %v3482 = vsel %vm352, %v3476, 0
      %v3485 = vsel %vm352, %v3477, 0
      %v3488 = vsel %vm352, %v3475, 0
      %3490 = vmatprep.subr.bf16.mxu0 %v3485
      %3491 = vmatpush1.bf16.msra.mxu0 %v3482
      %3492 = vmatprep.subr.bf16.mxu0 0
      %3493 = vmatpush1.bf16.msra.mxu0 0
      %3494 = vmatprep.subr.bf16.mxu0 0
      %3495 = vmatpush1.bf16.msra.mxu0 0
      %3496 = vmatprep.subr.bf16.mxu0 0
      %3497 = vmatpush1.bf16.msra.mxu0 0
      %3498 = vmatprep.subr.bf16.mxu0 0
      %3499 = vmatpush1.bf16.msra.mxu0 0
      %3500 = vmatprep.subr.bf16.mxu0 0
      %3501 = vmatpush1.bf16.msra.mxu0 0
      %3502 = vmatprep.subr.bf16.mxu0 0
      %3503 = vmatpush1.bf16.msra.mxu0 0
      %3504 = vmatprep.subr.bf16.mxu0 0
      %3505 = vmatpush1.bf16.msra.mxu0 0
      %3506 = vmatprep.subr.bf16.mxu0 0
      %3507 = vmatpush1.bf16.msra.mxu0 0
      %3508 = vmatprep.subr.bf16.mxu0 0
      %3509 = vmatpush1.bf16.msra.mxu0 0
      %3510 = vmatprep.subr.bf16.mxu0 0
      %3511 = vmatpush1.bf16.msra.mxu0 0
      %3512 = vmatprep.subr.bf16.mxu0 0
      %3513 = vmatpush1.bf16.msra.mxu0 0
      %3514 = vmatprep.subr.bf16.mxu0 0
      %3515 = vmatpush1.bf16.msra.mxu0 0
      %3516 = vmatprep.subr.bf16.mxu0 0
      %3517 = vmatpush1.bf16.msra.mxu0 0
      %3518 = vmatprep.subr.bf16.mxu0 0
      %3519 = vmatpush1.bf16.msra.mxu0 0
      %3520 = vmatprep.subr.bf16.mxu0 0
      %3521 = vmatpush1.bf16.msra.mxu0 0
      %3522 = vmatprep.mubr.bf16.mxu0 0
      %3523 = vmatmul.mubr.bf16.gmra.mrb[0].mxu0 %v3479
      %v3524 = vpop.f32.mrb[0].mxu0
      %v3525 = vadd.f32 0.0, %v3524
      %v3526 = vpop.f32.mrb[0].mxu0
      %v3527 = vadd.f32 0.0, %v3526
      %v3528 = vpop.f32.mrb[0].mxu0
      %v3529 = vpop.f32.mrb[0].mxu0
      %3530 = vdwg.mxu0
      %3531 = vmatprep.subr.bf16.mxu0 0
      %3532 = vmatpush1.bf16.msra.mxu0 %v3488
      %3533 = vmatprep.subr.bf16.mxu0 0
      %3534 = vmatpush1.bf16.msra.mxu0 0
      %3535 = vmatprep.subr.bf16.mxu0 0
      %3536 = vmatpush1.bf16.msra.mxu0 0
      %3537 = vmatprep.subr.bf16.mxu0 0
      %3538 = vmatpush1.bf16.msra.mxu0 0
      %3539 = vmatprep.subr.bf16.mxu0 0
      %3540 = vmatpush1.bf16.msra.mxu0 0
      %3541 = vmatprep.subr.bf16.mxu0 0
      %3542 = vmatpush1.bf16.msra.mxu0 0
      %3543 = vmatprep.subr.bf16.mxu0 0
      %3544 = vmatpush1.bf16.msra.mxu0 0
      %3545 = vmatprep.subr.bf16.mxu0 0
      %3546 = vmatpush1.bf16.msra.mxu0 0
      %3547 = vmatprep.subr.bf16.mxu0 0
      %3548 = vmatpush1.bf16.msra.mxu0 0
      %3549 = vmatprep.subr.bf16.mxu0 0
      %3550 = vmatpush1.bf16.msra.mxu0 0
      %3551 = vmatprep.subr.bf16.mxu0 0
      %3552 = vmatpush1.bf16.msra.mxu0 0
      %3553 = vmatprep.subr.bf16.mxu0 0
      %3554 = vmatpush1.bf16.msra.mxu0 0
      %3555 = vmatprep.subr.bf16.mxu0 0
      %3556 = vmatpush1.bf16.msra.mxu0 0
      %3557 = vmatprep.subr.bf16.mxu0 0
      %3558 = vmatpush1.bf16.msra.mxu0 0
      %3559 = vmatprep.subr.bf16.mxu0 0
      %3560 = vmatpush1.bf16.msra.mxu0 0
      %3561 = vmatprep.subr.bf16.mxu0 0
      %3562 = vmatpush1.bf16.msra.mxu0 0
      %3563 = vmatprep.mubr.bf16.mxu0 0
      %3564 = vmatmul.mubr.bf16.gmra.mrb[0].mxu0 %v3479
      %v3565 = vpop.f32.mrb[0].mxu0
      %v3566 = vadd.f32 0.0, %v3565
      %v3567 = vpop.f32.mrb[0].mxu0
      %v3568 = vpop.f32.mrb[0].mxu0
      %v3569 = vpop.f32.mrb[0].mxu0
      %3570 = vdwg.mxu0
      %v3571 = vadd.f32 %v3447, %v3525
      %v3572 = vadd.f32 %v3448, %v3527
      %v3573 = vadd.f32 %v3449, %v3566
      %s3574 = scalar_lea.vmem %s5, 16
      %v3575 = vld [vmem:[%s3574] sm:$0x3]
      %v3576 = vld [vmem:[#allocation2] sm:$0x3f]
      %v3578 = vcombine.high %v3576, %v3576
      %v3580 = vunpack.c.l.s4 1983009808
      %v3581 = vunpack.c.0.s8 %v3580
      %v3582 = vlaneseq
      %v3583 = vshrl.u32 %v3582, 7
      %v3584 = vsub.s32 %v3581, %v3583
      %v3585 = vrot.slane %v3576, %v3584
      %v3587 = vunpack.c.l.s4 1983009808
      %v3588 = vunpack.c.0.s8 %v3587
      %v3589 = vlaneseq
      %v3590 = vshrl.u32 %v3589, 7
      %v3591 = vsub.s32 %v3588, %v3590
      %v3592 = vrot.slane %v3578, %v3591
      %v3593 = vcombine.high %v3585, %v3585
      %3594 = vrot.lane.b32.xlu0 %v3585, 90
      %v3595 = vpop.permute.xlu0 %3594
      %3596 = vrot.lane.b32.xlu0 %v3593, 90
      %v3597 = vpop.permute.xlu0 %3596
      %3598 = vrot.lane.b32.xlu0 %v3592, 90
      %v3599 = vpop.permute.xlu0 %3598
      %v3600 = vsel %vm2322, %v3595, %v3597
      %v3601 = vsel %vm2322, %v3597, %v3599
      %v3603 = vsel %vm348, %v3575, 0
      %v3606 = vsel %vm352, %v3600, 0
      %v3609 = vsel %vm352, %v3601, 0
      %v3612 = vsel %vm352, %v3599, 0
      %3614 = vmatprep.subr.bf16.mxu0 %v3609
      %3615 = vmatpush1.bf16.msra.mxu0 %v3606
      %3616 = vmatprep.subr.bf16.mxu0 0
      %3617 = vmatpush1.bf16.msra.mxu0 0
      %3618 = vmatprep.subr.bf16.mxu0 0
      %3619 = vmatpush1.bf16.msra.mxu0 0
      %3620 = vmatprep.subr.bf16.mxu0 0
      %3621 = vmatpush1.bf16.msra.mxu0 0
      %3622 = vmatprep.subr.bf16.mxu0 0
      %3623 = vmatpush1.bf16.msra.mxu0 0
      %3624 = vmatprep.subr.bf16.mxu0 0
      %3625 = vmatpush1.bf16.msra.mxu0 0
      %3626 = vmatprep.subr.bf16.mxu0 0
      %3627 = vmatpush1.bf16.msra.mxu0 0
      %3628 = vmatprep.subr.bf16.mxu0 0
      %3629 = vmatpush1.bf16.msra.mxu0 0
      %3630 = vmatprep.subr.bf16.mxu0 0
      %3631 = vmatpush1.bf16.msra.mxu0 0
      %3632 = vmatprep.subr.bf16.mxu0 0
      %3633 = vmatpush1.bf16.msra.mxu0 0
      %3634 = vmatprep.subr.bf16.mxu0 0
      %3635 = vmatpush1.bf16.msra.mxu0 0
      %3636 = vmatprep.subr.bf16.mxu0 0
      %3637 = vmatpush1.bf16.msra.mxu0 0
      %3638 = vmatprep.subr.bf16.mxu0 0
      %3639 = vmatpush1.bf16.msra.mxu0 0
      %3640 = vmatprep.subr.bf16.mxu0 0
      %3641 = vmatpush1.bf16.msra.mxu0 0
      %3642 = vmatprep.subr.bf16.mxu0 0
      %3643 = vmatpush1.bf16.msra.mxu0 0
      %3644 = vmatprep.subr.bf16.mxu0 0
      %3645 = vmatpush1.bf16.msra.mxu0 0
      %3646 = vmatprep.mubr.bf16.mxu0 0
      %3647 = vmatmul.mubr.bf16.gmra.mrb[0].mxu0 %v3603
      %v3648 = vpop.f32.mrb[0].mxu0
      %v3649 = vadd.f32 0.0, %v3648
      %v3650 = vpop.f32.mrb[0].mxu0
      %v3651 = vadd.f32 0.0, %v3650
      %v3652 = vpop.f32.mrb[0].mxu0
      %v3653 = vpop.f32.mrb[0].mxu0
      %3654 = vdwg.mxu0
      %3655 = vmatprep.subr.bf16.mxu0 0
      %3656 = vmatpush1.bf16.msra.mxu0 %v3612
      %3657 = vmatprep.subr.bf16.mxu0 0
      %3658 = vmatpush1.bf16.msra.mxu0 0
      %3659 = vmatprep.subr.bf16.mxu0 0
      %3660 = vmatpush1.bf16.msra.mxu0 0
      %3661 = vmatprep.subr.bf16.mxu0 0
      %3662 = vmatpush1.bf16.msra.mxu0 0
      %3663 = vmatprep.subr.bf16.mxu0 0
      %3664 = vmatpush1.bf16.msra.mxu0 0
      %3665 = vmatprep.subr.bf16.mxu0 0
      %3666 = vmatpush1.bf16.msra.mxu0 0
      %3667 = vmatprep.subr.bf16.mxu0 0
      %3668 = vmatpush1.bf16.msra.mxu0 0
      %3669 = vmatprep.subr.bf16.mxu0 0
      %3670 = vmatpush1.bf16.msra.mxu0 0
      %3671 = vmatprep.subr.bf16.mxu0 0
      %3672 = vmatpush1.bf16.msra.mxu0 0
      %3673 = vmatprep.subr.bf16.mxu0 0
      %3674 = vmatpush1.bf16.msra.mxu0 0
      %3675 = vmatprep.subr.bf16.mxu0 0
      %3676 = vmatpush1.bf16.msra.mxu0 0
      %3677 = vmatprep.subr.bf16.mxu0 0
      %3678 = vmatpush1.bf16.msra.mxu0 0
      %3679 = vmatprep.subr.bf16.mxu0 0
      %3680 = vmatpush1.bf16.msra.mxu0 0
      %3681 = vmatprep.subr.bf16.mxu0 0
      %3682 = vmatpush1.bf16.msra.mxu0 0
      %3683 = vmatprep.subr.bf16.mxu0 0
      %3684 = vmatpush1.bf16.msra.mxu0 0
      %3685 = vmatprep.subr.bf16.mxu0 0
      %3686 = vmatpush1.bf16.msra.mxu0 0
      %3687 = vmatprep.mubr.bf16.mxu0 0
      %3688 = vmatmul.mubr.bf16.gmra.mrb[0].mxu0 %v3603
      %v3689 = vpop.f32.mrb[0].mxu0
      %v3690 = vadd.f32 0.0, %v3689
      %v3691 = vpop.f32.mrb[0].mxu0
      %v3692 = vpop.f32.mrb[0].mxu0
      %v3693 = vpop.f32.mrb[0].mxu0
      %3694 = vdwg.mxu0
      %v3695 = vadd.f32 %v3571, %v3649
      %v3696 = vadd.f32 %v3572, %v3651
      %v3697 = vadd.f32 %v3573, %v3690
      %v3698 = vld [vmem:[%s6] sm:$0xf]
      %3700 = vset.pattern.permute.xlu0 0
      %3701 = vperm.xlu0 %3700, %v3698
      %v3702 = vpop.permute.xlu0 %3701
      %v3704 = vadd.f32 %v3695, %v3702
      %v3705 = vadd.f32 %v3696, %v3702
      %v3706 = vadd.f32 %v3697, %v3702
      %v3707 = vmax.f32 %v3704, 0.0
      %v3708 = vmax.f32 %v3705, 0.0
      %v3709 = vmax.f32 %v3706, 0.0
      %v3712 = vcombine.low %v3707, %v3708
      %3714 = vst [vmem:[%s325] sm:$0xff] %v3712
      %vm3715 = vcmask 551936
      %3716 = vst.msk [vmem:[%s325 + $0x8] sm:$0xf] %vm3715, %v3709
      %p3717 = scmp.lt.s32.totalorder %s19, 1
      %s3718 = scalar_select %p3717, %s19, 1
      %s3719 = smul.addr %s3718, 3
      %s3720 = smul.addr %s3719, 4
      %s3721 = scalar_lea.vmem %s8, %s3720
      // Predicated region
      $region53: #{up_forward.3} parent=51 // pred_check
        %p3722 = pneg %p215
      $region54: #{up_forward.3} parent=51 // pred_check_branch
        %3724 = sbr.rel (%p3722) target = $region56
      $region55: #{up_forward.3} parent=51 // pred_region
        _
      $region56: #{up_forward.3} parent=51 // pred_fallthru
        _
    $region52: #{up_forward.3} parent=5 // pred_fallthru
      _
    %p3725 = scmp.le.s32.totalorder 2, %s14
    // Predicated region
    $region57: #{up_forward.3} parent=5 // pred_check
      %p3726 = pneg %p3725
    $region58: #{up_forward.3} parent=5 // pred_check_branch
      %3728 = sbr.rel (%p3726) target = $region60
    $region59: #{up_forward.3} parent=5 // pred_region
      %s3729 = ssub.s32 %s14, 2
      // Predicated region
      $region61: #{up_forward.3} parent=59 // pred_check
        %p3730 = pneg %p221
      $region62: #{up_forward.3} parent=59 // pred_check_branch
        %3732 = sbr.rel (%p3730) target = $region64
      $region63: #{up_forward.3} parent=59 // pred_region
        %p3733 = scmp.lt.s32.totalorder %s20, 1
        %s3734 = scalar_select %p3733, %s20, 1
        %s3735 = smul.addr %s3734, 3
        %s3736 = smul.addr %s3735, 4
        %s3737 = scalar_lea.vmem %s8, %s3736
      $region64: #{up_forward.3} parent=59 // pred_fallthru
        _
    $region60: #{up_forward.3} parent=5 // pred_fallthru
      _
  $region6: #{up_forward.3} parent=0 // loop_footer
    %s18 = sadd.s32 1, %s14
  $region7: #{up_forward.3} parent=0 // loop_footer_branch
    %13 = sbr.rel target = $region3
  $region8: #{up_forward.3} parent=0 // loop_exit
    _

</llo_original>
